<compile_context>
chip_gen: v7x
topology: tpu7x:2x2x1
jax: 0.10.0
libtpu: 0.0.40
codegen_flags: <defaults>
</compile_context>

<pallas_src>
import functools

import numpy as np

import jax
import jax.numpy as jnp
from jax import lax
from jax.experimental import pallas as pl
from jax.experimental.pallas import tpu as pltpu

LANE = 128
GN_EPS = 1e-5


def _round_up(x, m):
    return (x + m - 1) // m * m


def _pick_tile(batch):
    """Samples per grid step: keep >=2 grid steps (v7x 2 TCs), cap at 8."""
    if batch <= 1:
        return 1
    return max(1, min(8, batch // 2))


# --------------------------------------------------------------------------- #
# Fused kernel: conv1+GN1+ReLU+pool -> conv2+GN2+ReLU+pool -> fc1/fc2/fc3      #
# --------------------------------------------------------------------------- #

def _lenet_kernel(x_ref, c1w_ref, c1aux_ref, c1a_ref,
                  c2w_ref, c2aux_ref, c2a_ref,
                  f1w_ref, f2w_ref, f3w_ref, fcaux_ref,
                  o_ref, fc_scr, *, tb):
    """Per-tile fused forward.

    x_ref   : (tb, 4, 8, 128) bf16  image rows split by residue mod 4,
                                    lane = w*3 + c (96 real lanes).
    c1w_ref : (5, 128, 256) bf16    conv1 tap-ki weight slabs; out lane layout
                                    is [even-w half | odd-w half] for pooling.
    c1aux_ref: (8, 256) f32         rows 0/1/2 = bias / gamma / beta (lane layout).
    c1a_ref : (256, 256) f32        GroupNorm group-membership matrix.
    c2*_ref : same for conv2 (input lane = w1*6 + c, 84 real lanes).
    f1w_ref : (5, 128, 128) bf16    fc1 weight per pooled-h row (flatten folded in).
    f2w/f3w : (128, 128) bf16       fc2 / fc3 weights (zero padded).
    fcaux   : (8, 128) f32          rows 0/1/2 = fc1/fc2/fc3 bias.
    o_ref   : (1, tb, 128) f32      logits (first 10 lanes real).
    fc_scr  : (5, tb, 128) bf16     pooled conv2 activations per pooled-h row.
    """
    f32 = jnp.float32
    bf16 = jnp.bfloat16

    b1 = c1aux_ref[0:1, :]
    g1 = c1aux_ref[1:2, :]
    be1 = c1aux_ref[2:3, :]
    b2 = c2aux_ref[0:1, :]
    g2 = c2aux_ref[1:2, :]
    be2 = c2aux_ref[2:3, :]
    inv1 = 1.0 / (28.0 * 28.0 * 2.0)      # GN1: per-group element count
    inv2 = 1.0 / (10.0 * 10.0 * 4.0)      # GN2

    for s in range(tb):
        xres = [x_ref[s, r] for r in range(4)]          # 4 x (8,128) bf16

        # ---- conv1: output rows h = 4*i + r (4 residue classes, 7 rows) ----
        acc1 = [None] * 4
        for ki in range(5):
            w_tap = c1w_ref[ki]                         # (128,256) bf16
            for r in range(4):
                t = r + ki                              # image row = 4*i + t
                xs = xres[t % 4][t // 4: t // 4 + 7, :]
                d = jnp.dot(xs, w_tap, preferred_element_type=f32)
                acc1[r] = d if acc1[r] is None else acc1[r] + d
        acc1 = [a + b1 for a in acc1]                   # (7,256) f32 each

        # GroupNorm1: merged sum / sum-of-squares stat matmul (padded lanes
        # are exactly zero, so no masking is needed).
        ch_sum = sum(jnp.sum(a, axis=0, keepdims=True) for a in acc1)
        ch_sq = sum(jnp.sum(a * a, axis=0, keepdims=True) for a in acc1)
        grp = jnp.dot(jnp.concatenate([ch_sum, ch_sq], axis=0),
                      c1a_ref[...], preferred_element_type=f32)
        mean = grp[0:1, :] * inv1
        var = jnp.maximum(grp[1:2, :] * inv1 - mean * mean, 0.0)
        scale = g1 * lax.rsqrt(var + GN_EPS)
        shift = be1 - mean * scale

        # normalize + ReLU, then 2x2 max-pool: h-pool = max over residue
        # pairs, w-pool = max over the two 128-lane halves.
        y = [jnp.maximum(a * scale + shift, 0.0) for a in acc1]
        he = jnp.maximum(y[0], y[1])                    # pooled rows 0,2,..,12
        ho = jnp.maximum(y[2], y[3])                    # pooled rows 1,3,..,13
        y1e = jnp.maximum(he[:, :LANE], he[:, LANE:])   # (7,128) lane = w1*6+c
        y1o = jnp.maximum(ho[:, :LANE], ho[:, LANE:])

        # ---- conv2: output rows h2 = 2*q + p (2 parity classes, 5 rows) ----
        acc2 = [None, None]
        for ki in range(5):
            w_tap = c2w_ref[ki]
            for p in range(2):
                u = p + ki                              # y1 row = 2*q + u
                src = y1e if u % 2 == 0 else y1o
                xs = src[u // 2: u // 2 + 5, :].astype(bf16)
                d = jnp.dot(xs, w_tap, preferred_element_type=f32)
                acc2[p] = d if acc2[p] is None else acc2[p] + d
        acc2 = [a + b2 for a in acc2]                   # (5,256) f32 each

        ch_sum = sum(jnp.sum(a, axis=0, keepdims=True) for a in acc2)
        ch_sq = sum(jnp.sum(a * a, axis=0, keepdims=True) for a in acc2)
        grp = jnp.dot(jnp.concatenate([ch_sum, ch_sq], axis=0),
                      c2a_ref[...], preferred_element_type=f32)
        mean = grp[0:1, :] * inv2
        var = jnp.maximum(grp[1:2, :] * inv2 - mean * mean, 0.0)
        scale = g2 * lax.rsqrt(var + GN_EPS)
        shift = be2 - mean * scale

        z0 = jnp.maximum(acc2[0] * scale + shift, 0.0)
        z1 = jnp.maximum(acc2[1] * scale + shift, 0.0)
        hm = jnp.maximum(z0, z1)                        # (5,256) h-pooled
        y2 = jnp.maximum(hm[:, :LANE], hm[:, LANE:])    # (5,128) lane = w*16+c

        for q in range(5):                              # collect for FC head
            fc_scr[q, s:s + 1, :] = y2[q:q + 1, :].astype(bf16)

    # ---- FC head over the whole batch tile (M = tb) ----
    acc = None
    for q in range(5):                                  # K = 5 * 128 (400 real)
        d = jnp.dot(fc_scr[q], f1w_ref[q], preferred_element_type=f32)
        acc = d if acc is None else acc + d
    h1 = jnp.maximum(acc + fcaux_ref[0:1, :], 0.0)
    h2 = jnp.dot(h1.astype(bf16), f2w_ref[...], preferred_element_type=f32)
    h2 = jnp.maximum(h2 + fcaux_ref[1:2, :], 0.0)
    out = jnp.dot(h2.astype(bf16), f3w_ref[...], preferred_element_type=f32)
    o_ref[0] = out + fcaux_ref[2:3, :]


# --------------------------------------------------------------------------- #
# One-time parameter packing (layout folding + zero padding)                   #
# --------------------------------------------------------------------------- #

def init_params(key, num_classes=10):
    """Synthetic parameters with LeNet5_MOD_LIGHT_GN's exact shapes."""
    assert num_classes == 10
    ks = jax.random.split(key, 14)

    def u(k, shape, fan_in):
        b = 1.0 / np.sqrt(float(fan_in))
        return jax.random.uniform(k, shape, jnp.float32, -b, b)

    return {
        "conv1_w": u(ks[0], (6, 3, 5, 5), 3 * 25),
        "conv1_b": u(ks[1], (6,), 3 * 25),
        "gn1_w": 1.0 + 0.1 * jax.random.normal(ks[2], (6,), jnp.float32),
        "gn1_b": 0.1 * jax.random.normal(ks[3], (6,), jnp.float32),
        "conv2_w": u(ks[4], (16, 6, 5, 5), 6 * 25),
        "conv2_b": u(ks[5], (16,), 6 * 25),
        "gn2_w": 1.0 + 0.1 * jax.random.normal(ks[6], (16,), jnp.float32),
        "gn2_b": 0.1 * jax.random.normal(ks[7], (16,), jnp.float32),
        "fc1_w": u(ks[8], (120, 400), 400),
        "fc1_b": u(ks[9], (120,), 400),
        "fc2_w": u(ks[10], (84, 120), 120),
        "fc2_b": u(ks[11], (84,), 120),
        "fc3_w": u(ks[12], (10, 84), 84),
        "fc3_b": u(ks[13], (10,), 84),
    }


def _pack_conv(w_oihw, b, gamma, beta, n_w_out, groups):
    """Pack a conv layer as 5 per-ki weight slabs + GN aux rows + membership.

    Input lane layout : w_in * Cin + c.
    Output lane layout: (w_out % 2) * 128 + (w_out // 2) * Cout + co, i.e. the
    even-w / odd-w halves live in separate 128-lane blocks so the 2x2 pool's
    width reduction is a max over aligned lane halves.
    """
    w = np.asarray(w_oihw, np.float32)
    co_n, ci_n, kh, kw = w.shape
    cpg = co_n // groups
    wmat = np.zeros((kh, 128, 256), np.float32)
    aux = np.zeros((8, 256), np.float32)
    grp = np.full((256,), -1, np.int64)
    b = np.asarray(b, np.float32)
    gamma = np.asarray(gamma, np.float32)
    beta = np.asarray(beta, np.float32)
    for wo in range(n_w_out):
        lo = (wo % 2) * 128 + (wo // 2) * co_n
        aux[0, lo:lo + co_n] = b
        aux[1, lo:lo + co_n] = gamma
        aux[2, lo:lo + co_n] = beta
        grp[lo:lo + co_n] = np.arange(co_n) // cpg
        for ki in range(kh):
            for kj in range(kw):
                li = (wo + kj) * ci_n
                wmat[ki, li:li + ci_n, lo:lo + co_n] = w[:, :, ki, kj].T
    memb = ((grp[:, None] == grp[None, :]) & (grp[:, None] >= 0))
    return {
        "w": jnp.asarray(wmat, jnp.bfloat16),
        "aux": jnp.asarray(aux, jnp.float32),
        "A": jnp.asarray(memb.astype(np.float32)),
    }


def _pack_fc(params):
    """Fold torch.flatten's (C,H,W) ordering into fc1; pad widths to 128."""
    w1 = np.asarray(params["fc1_w"], np.float32).reshape(120, 16, 5, 5)
    w1 = np.transpose(w1, (2, 3, 1, 0)).reshape(5, 80, 120)  # [h][w*16+c][out]
    f1 = np.zeros((5, 128, 128), np.float32)
    f1[:, :80, :120] = w1
    f2 = np.zeros((128, 128), np.float32)
    f2[:120, :84] = np.asarray(params["fc2_w"], np.float32).T
    f3 = np.zeros((128, 128), np.float32)
    f3[:84, :10] = np.asarray(params["fc3_w"], np.float32).T
    aux = np.zeros((8, 128), np.float32)
    aux[0, :120] = np.asarray(params["fc1_b"], np.float32)
    aux[1, :84] = np.asarray(params["fc2_b"], np.float32)
    aux[2, :10] = np.asarray(params["fc3_b"], np.float32)
    return {
        "w1": jnp.asarray(f1, jnp.bfloat16),
        "w2": jnp.asarray(f2, jnp.bfloat16),
        "w3": jnp.asarray(f3, jnp.bfloat16),
        "aux": jnp.asarray(aux, jnp.float32),
    }


def pack_params(params):
    conv1 = _pack_conv(params["conv1_w"], params["conv1_b"],
                       params["gn1_w"], params["gn1_b"], n_w_out=28, groups=3)
    conv2 = _pack_conv(params["conv2_w"], params["conv2_b"],
                       params["gn2_w"], params["gn2_b"], n_w_out=10, groups=4)
    return {"conv1": conv1, "conv2": conv2, "head": _pack_fc(params)}


# --------------------------------------------------------------------------- #
# Forward pass                                                                 #
# --------------------------------------------------------------------------- #

@jax.jit
def lenet5_forward(packed, x_nchw):
    B = x_nchw.shape[0]
    tb = _pick_tile(B)
    bpad = _round_up(B, tb)
    ntiles = bpad // tb

    # Pack the image: NHWC, lane = w*3+c (96 lanes), rows split by residue
    # mod 4 so every conv1 tap slice in-kernel is contiguous.  bf16 halves the
    # (already tiny) HBM read per sample.
    x = jnp.transpose(x_nchw, (0, 2, 3, 1)).reshape(B, 32, 96)
    x = x.reshape(B, 8, 4, 96).transpose(0, 2, 1, 3)            # (B,4,8,96)
    x = jnp.pad(x, ((0, bpad - B), (0, 0), (0, 0), (0, LANE - 96)))
    x = x.astype(jnp.bfloat16)

    c1, c2, hd = packed["conv1"], packed["conv2"], packed["head"]
    kernel = functools.partial(_lenet_kernel, tb=tb)
    out = pl.pallas_call(
        kernel,
        out_shape=jax.ShapeDtypeStruct((ntiles, tb, LANE), jnp.float32),
        grid=(ntiles,),
        in_specs=[
            pl.BlockSpec((tb, 4, 8, LANE), lambda i: (i, 0, 0, 0)),  # image
            pl.BlockSpec((5, 128, 256), lambda i: (0, 0, 0)),        # conv1 w
            pl.BlockSpec((8, 256), lambda i: (0, 0)),                # conv1 aux
            pl.BlockSpec((256, 256), lambda i: (0, 0)),              # gn1 memb
            pl.BlockSpec((5, 128, 256), lambda i: (0, 0, 0)),        # conv2 w
            pl.BlockSpec((8, 256), lambda i: (0, 0)),                # conv2 aux
            pl.BlockSpec((256, 256), lambda i: (0, 0)),              # gn2 memb
            pl.BlockSpec((5, 128, 128), lambda i: (0, 0, 0)),        # fc1 w
            pl.BlockSpec((128, 128), lambda i: (0, 0)),              # fc2 w
            pl.BlockSpec((128, 128), lambda i: (0, 0)),              # fc3 w
            pl.BlockSpec((8, 128), lambda i: (0, 0)),                # fc bias
        ],
        out_specs=pl.BlockSpec((1, tb, LANE), lambda i: (i, 0, 0)),
        scratch_shapes=[pltpu.VMEM((5, tb, LANE), jnp.bfloat16)],
        compiler_params=pltpu.CompilerParams(
            dimension_semantics=("parallel",),
            vmem_limit_bytes=32 * 1024 * 1024),
    )(x, c1["w"], c1["aux"], c1["A"],
      c2["w"], c2["aux"], c2["A"],
      hd["w1"], hd["w2"], hd["w3"], hd["aux"])
    return out.reshape(bpad, LANE)[:B, :10]


# --------------------------------------------------------------------------- #
# Pure-JAX reference (for correctness check)                                   #
# --------------------------------------------------------------------------- #

def reference_forward(params, x_nchw):
    def group_norm(x, gamma, beta, groups):
        B, C, H, W = x.shape
        xg = x.reshape(B, groups, -1)
        mean = jnp.mean(xg, axis=2, keepdims=True)
        var = jnp.var(xg, axis=2, keepdims=True)
        xn = ((xg - mean) * lax.rsqrt(var + GN_EPS)).reshape(B, C, H, W)
        return xn * gamma[None, :, None, None] + beta[None, :, None, None]

    def conv(x, w, b):
        y = lax.conv_general_dilated(
            x, w, (1, 1), "VALID",
            dimension_numbers=("NCHW", "OIHW", "NCHW"),
            precision=lax.Precision.HIGHEST)
        return y + b[None, :, None, None]

    def pool(x):
        B, C, H, W = x.shape
        return x.reshape(B, C, H // 2, 2, W // 2, 2).max(axis=(3, 5))

    x = pool(jax.nn.relu(group_norm(
        conv(x_nchw, params["conv1_w"], params["conv1_b"]),
        params["gn1_w"], params["gn1_b"], 3)))
    x = pool(jax.nn.relu(group_norm(
        conv(x, params["conv2_w"], params["conv2_b"]),
        params["gn2_w"], params["gn2_b"], 4)))
    x = x.reshape(x.shape[0], -1)
    hi = lax.Precision.HIGHEST
    x = jax.nn.relu(jnp.dot(x, params["fc1_w"].T, precision=hi)
                    + params["fc1_b"])
    x = jax.nn.relu(jnp.dot(x, params["fc2_w"].T, precision=hi)
                    + params["fc2_b"])
    return jnp.dot(x, params["fc3_w"].T, precision=hi) + params["fc3_b"]


if __name__ == "__main__":
    key = jax.random.PRNGKey(0)
    pkey, xkey = jax.random.split(key)
    params = init_params(pkey, num_classes=10)
    packed = pack_params(params)
    # 32x32 spatial is fixed by the architecture (fc1 expects 16*5*5).
    x = jax.random.normal(xkey, (2, 3, 32, 32), jnp.float32)

    out = jax.block_until_ready(lenet5_forward(packed, x))
    assert out.shape == (2, 10) and out.dtype == jnp.float32

    ref = jax.block_until_ready(jax.jit(reference_forward)(params, x))
    err = jnp.max(jnp.abs(out - ref))
    assert jnp.allclose(out, ref, rtol=2e-2, atol=2e-2), f"max abs err {err:.3e}"

    print("KERNEL_OK")
</pallas_src>

<mosaic_0001>
module attributes {stable_mosaic.version = 11 : i64} {
  func.func @_lenet_kernel(%arg0: i32, %arg1: memref<1x4x8x128xbf16, #tpu.memory_space<vmem>>, %arg2: memref<5x128x256xbf16, #tpu.memory_space<vmem>>, %arg3: memref<8x256xf32, #tpu.memory_space<vmem>>, %arg4: memref<256x256xf32, #tpu.memory_space<vmem>>, %arg5: memref<5x128x256xbf16, #tpu.memory_space<vmem>>, %arg6: memref<8x256xf32, #tpu.memory_space<vmem>>, %arg7: memref<256x256xf32, #tpu.memory_space<vmem>>, %arg8: memref<5x128x128xbf16, #tpu.memory_space<vmem>>, %arg9: memref<128x128xbf16, #tpu.memory_space<vmem>>, %arg10: memref<128x128xbf16, #tpu.memory_space<vmem>>, %arg11: memref<8x128xf32, #tpu.memory_space<vmem>>, %arg12: memref<1x1x128xf32, #tpu.memory_space<vmem>>, %arg13: memref<5x1x128xbf16, #tpu.memory_space<vmem>>) attributes {dimension_semantics = [#tpu.dimension_semantics<parallel>], iteration_bounds = array<i64: 2>, scalar_prefetch = 0 : i64, scratch_operands = 1 : i64, tpu.core_type = #tpu.core_type<tc>, window_params = [{transform_indices = @transform_0, window_bounds = array<i64: 1, 4, 8, 128>}, {pipeline_mode = #tpu.pipeline_mode<synchronous>, transform_indices = @transform_1, window_bounds = array<i64: 5, 128, 256>}, {pipeline_mode = #tpu.pipeline_mode<synchronous>, transform_indices = @transform_2, window_bounds = array<i64: 8, 256>}, {pipeline_mode = #tpu.pipeline_mode<synchronous>, transform_indices = @transform_3, window_bounds = array<i64: 256, 256>}, {pipeline_mode = #tpu.pipeline_mode<synchronous>, transform_indices = @transform_4, window_bounds = array<i64: 5, 128, 256>}, {pipeline_mode = #tpu.pipeline_mode<synchronous>, transform_indices = @transform_5, window_bounds = array<i64: 8, 256>}, {pipeline_mode = #tpu.pipeline_mode<synchronous>, transform_indices = @transform_6, window_bounds = array<i64: 256, 256>}, {pipeline_mode = #tpu.pipeline_mode<synchronous>, transform_indices = @transform_7, window_bounds = array<i64: 5, 128, 128>}, {pipeline_mode = #tpu.pipeline_mode<synchronous>, transform_indices = @transform_8, window_bounds = array<i64: 128, 128>}, {pipeline_mode = #tpu.pipeline_mode<synchronous>, transform_indices = @transform_9, window_bounds = array<i64: 128, 128>}, {pipeline_mode = #tpu.pipeline_mode<synchronous>, transform_indices = @transform_10, window_bounds = array<i64: 8, 128>}, {transform_indices = @transform_11, window_bounds = array<i64: 1, 1, 128>}]} {
    %c0 = arith.constant 0 : index
    %c0_0 = arith.constant 0 : index
    %0 = vector.load %arg3[%c0, %c0_0] : memref<8x256xf32, #tpu.memory_space<vmem>>, vector<1x256xf32>
    %c1 = arith.constant 1 : index
    %c0_1 = arith.constant 0 : index
    %1 = vector.load %arg3[%c1, %c0_1] : memref<8x256xf32, #tpu.memory_space<vmem>>, vector<1x256xf32>
    %c2 = arith.constant 2 : index
    %c0_2 = arith.constant 0 : index
    %2 = vector.load %arg3[%c2, %c0_2] : memref<8x256xf32, #tpu.memory_space<vmem>>, vector<1x256xf32>
    %c0_3 = arith.constant 0 : index
    %c0_4 = arith.constant 0 : index
    %3 = vector.load %arg6[%c0_3, %c0_4] : memref<8x256xf32, #tpu.memory_space<vmem>>, vector<1x256xf32>
    %c1_5 = arith.constant 1 : index
    %c0_6 = arith.constant 0 : index
    %4 = vector.load %arg6[%c1_5, %c0_6] : memref<8x256xf32, #tpu.memory_space<vmem>>, vector<1x256xf32>
    %c2_7 = arith.constant 2 : index
    %c0_8 = arith.constant 0 : index
    %5 = vector.load %arg6[%c2_7, %c0_8] : memref<8x256xf32, #tpu.memory_space<vmem>>, vector<1x256xf32>
    %c0_9 = arith.constant 0 : index
    %c0_10 = arith.constant 0 : index
    %c0_11 = arith.constant 0 : index
    %c0_12 = arith.constant 0 : index
    %6 = vector.load %arg1[%c0_9, %c0_10, %c0_11, %c0_12] : memref<1x4x8x128xbf16, #tpu.memory_space<vmem>>, vector<1x1x8x128xbf16>
    %7 = vector.shape_cast %6 : vector<1x1x8x128xbf16> to vector<8x128xbf16>
    %c0_13 = arith.constant 0 : index
    %c1_14 = arith.constant 1 : index
    %c0_15 = arith.constant 0 : index
    %c0_16 = arith.constant 0 : index
    %8 = vector.load %arg1[%c0_13, %c1_14, %c0_15, %c0_16] : memref<1x4x8x128xbf16, #tpu.memory_space<vmem>>, vector<1x1x8x128xbf16>
    %9 = vector.shape_cast %8 : vector<1x1x8x128xbf16> to vector<8x128xbf16>
    %c0_17 = arith.constant 0 : index
    %c2_18 = arith.constant 2 : index
    %c0_19 = arith.constant 0 : index
    %c0_20 = arith.constant 0 : index
    %10 = vector.load %arg1[%c0_17, %c2_18, %c0_19, %c0_20] : memref<1x4x8x128xbf16, #tpu.memory_space<vmem>>, vector<1x1x8x128xbf16>
    %11 = vector.shape_cast %10 : vector<1x1x8x128xbf16> to vector<8x128xbf16>
    %c0_21 = arith.constant 0 : index
    %c3 = arith.constant 3 : index
    %c0_22 = arith.constant 0 : index
    %c0_23 = arith.constant 0 : index
    %12 = vector.load %arg1[%c0_21, %c3, %c0_22, %c0_23] : memref<1x4x8x128xbf16, #tpu.memory_space<vmem>>, vector<1x1x8x128xbf16>
    %13 = vector.shape_cast %12 : vector<1x1x8x128xbf16> to vector<8x128xbf16>
    %c0_24 = arith.constant 0 : index
    %c0_25 = arith.constant 0 : index
    %c0_26 = arith.constant 0 : index
    %14 = vector.load %arg2[%c0_24, %c0_25, %c0_26] : memref<5x128x256xbf16, #tpu.memory_space<vmem>>, vector<1x128x256xbf16>
    %15 = vector.shape_cast %14 : vector<1x128x256xbf16> to vector<128x256xbf16>
    %16 = vector.extract_strided_slice %7 {offsets = [0, 0], sizes = [7, 128], strides = [1, 1]} : vector<8x128xbf16> to vector<7x128xbf16>
    %cst = arith.constant dense<0.000000e+00> : vector<7x256xf32>
    %17 = tpu.matmul %16, %15, %cst {dimension_numbers = #tpu.dot_dimension_numbers<[1], [0], [0], [1], [0, 0, 1, 1], [], []>} : vector<7x128xbf16>, vector<128x256xbf16>, vector<7x256xf32> -> vector<7x256xf32>
    %18 = vector.extract_strided_slice %9 {offsets = [0, 0], sizes = [7, 128], strides = [1, 1]} : vector<8x128xbf16> to vector<7x128xbf16>
    %cst_27 = arith.constant dense<0.000000e+00> : vector<7x256xf32>
    %19 = tpu.matmul %18, %15, %cst_27 {dimension_numbers = #tpu.dot_dimension_numbers<[1], [0], [0], [1], [0, 0, 1, 1], [], []>} : vector<7x128xbf16>, vector<128x256xbf16>, vector<7x256xf32> -> vector<7x256xf32>
    %20 = vector.extract_strided_slice %11 {offsets = [0, 0], sizes = [7, 128], strides = [1, 1]} : vector<8x128xbf16> to vector<7x128xbf16>
    %cst_28 = arith.constant dense<0.000000e+00> : vector<7x256xf32>
    %21 = tpu.matmul %20, %15, %cst_28 {dimension_numbers = #tpu.dot_dimension_numbers<[1], [0], [0], [1], [0, 0, 1, 1], [], []>} : vector<7x128xbf16>, vector<128x256xbf16>, vector<7x256xf32> -> vector<7x256xf32>
    %22 = vector.extract_strided_slice %13 {offsets = [0, 0], sizes = [7, 128], strides = [1, 1]} : vector<8x128xbf16> to vector<7x128xbf16>
    %cst_29 = arith.constant dense<0.000000e+00> : vector<7x256xf32>
    %23 = tpu.matmul %22, %15, %cst_29 {dimension_numbers = #tpu.dot_dimension_numbers<[1], [0], [0], [1], [0, 0, 1, 1], [], []>} : vector<7x128xbf16>, vector<128x256xbf16>, vector<7x256xf32> -> vector<7x256xf32>
    %c1_30 = arith.constant 1 : index
    %c0_31 = arith.constant 0 : index
    %c0_32 = arith.constant 0 : index
    %24 = vector.load %arg2[%c1_30, %c0_31, %c0_32] : memref<5x128x256xbf16, #tpu.memory_space<vmem>>, vector<1x128x256xbf16>
    %25 = vector.shape_cast %24 : vector<1x128x256xbf16> to vector<128x256xbf16>
    %26 = vector.extract_strided_slice %9 {offsets = [0, 0], sizes = [7, 128], strides = [1, 1]} : vector<8x128xbf16> to vector<7x128xbf16>
    %cst_33 = arith.constant dense<0.000000e+00> : vector<7x256xf32>
    %27 = tpu.matmul %26, %25, %cst_33 {dimension_numbers = #tpu.dot_dimension_numbers<[1], [0], [0], [1], [0, 0, 1, 1], [], []>} : vector<7x128xbf16>, vector<128x256xbf16>, vector<7x256xf32> -> vector<7x256xf32>
    %28 = arith.addf %17, %27 : vector<7x256xf32>
    %29 = vector.extract_strided_slice %11 {offsets = [0, 0], sizes = [7, 128], strides = [1, 1]} : vector<8x128xbf16> to vector<7x128xbf16>
    %cst_34 = arith.constant dense<0.000000e+00> : vector<7x256xf32>
    %30 = tpu.matmul %29, %25, %cst_34 {dimension_numbers = #tpu.dot_dimension_numbers<[1], [0], [0], [1], [0, 0, 1, 1], [], []>} : vector<7x128xbf16>, vector<128x256xbf16>, vector<7x256xf32> -> vector<7x256xf32>
    %31 = arith.addf %19, %30 : vector<7x256xf32>
    %32 = vector.extract_strided_slice %13 {offsets = [0, 0], sizes = [7, 128], strides = [1, 1]} : vector<8x128xbf16> to vector<7x128xbf16>
    %cst_35 = arith.constant dense<0.000000e+00> : vector<7x256xf32>
    %33 = tpu.matmul %32, %25, %cst_35 {dimension_numbers = #tpu.dot_dimension_numbers<[1], [0], [0], [1], [0, 0, 1, 1], [], []>} : vector<7x128xbf16>, vector<128x256xbf16>, vector<7x256xf32> -> vector<7x256xf32>
    %34 = arith.addf %21, %33 : vector<7x256xf32>
    %35 = vector.extract_strided_slice %7 {offsets = [1, 0], sizes = [7, 128], strides = [1, 1]} : vector<8x128xbf16> to vector<7x128xbf16>
    %cst_36 = arith.constant dense<0.000000e+00> : vector<7x256xf32>
    %36 = tpu.matmul %35, %25, %cst_36 {dimension_numbers = #tpu.dot_dimension_numbers<[1], [0], [0], [1], [0, 0, 1, 1], [], []>} : vector<7x128xbf16>, vector<128x256xbf16>, vector<7x256xf32> -> vector<7x256xf32>
    %37 = arith.addf %23, %36 : vector<7x256xf32>
    %c2_37 = arith.constant 2 : index
    %c0_38 = arith.constant 0 : index
    %c0_39 = arith.constant 0 : index
    %38 = vector.load %arg2[%c2_37, %c0_38, %c0_39] : memref<5x128x256xbf16, #tpu.memory_space<vmem>>, vector<1x128x256xbf16>
    %39 = vector.shape_cast %38 : vector<1x128x256xbf16> to vector<128x256xbf16>
    %40 = vector.extract_strided_slice %11 {offsets = [0, 0], sizes = [7, 128], strides = [1, 1]} : vector<8x128xbf16> to vector<7x128xbf16>
    %cst_40 = arith.constant dense<0.000000e+00> : vector<7x256xf32>
    %41 = tpu.matmul %40, %39, %cst_40 {dimension_numbers = #tpu.dot_dimension_numbers<[1], [0], [0], [1], [0, 0, 1, 1], [], []>} : vector<7x128xbf16>, vector<128x256xbf16>, vector<7x256xf32> -> vector<7x256xf32>
    %42 = arith.addf %28, %41 : vector<7x256xf32>
    %43 = vector.extract_strided_slice %13 {offsets = [0, 0], sizes = [7, 128], strides = [1, 1]} : vector<8x128xbf16> to vector<7x128xbf16>
    %cst_41 = arith.constant dense<0.000000e+00> : vector<7x256xf32>
    %44 = tpu.matmul %43, %39, %cst_41 {dimension_numbers = #tpu.dot_dimension_numbers<[1], [0], [0], [1], [0, 0, 1, 1], [], []>} : vector<7x128xbf16>, vector<128x256xbf16>, vector<7x256xf32> -> vector<7x256xf32>
    %45 = arith.addf %31, %44 : vector<7x256xf32>
    %46 = vector.extract_strided_slice %7 {offsets = [1, 0], sizes = [7, 128], strides = [1, 1]} : vector<8x128xbf16> to vector<7x128xbf16>
    %cst_42 = arith.constant dense<0.000000e+00> : vector<7x256xf32>
    %47 = tpu.matmul %46, %39, %cst_42 {dimension_numbers = #tpu.dot_dimension_numbers<[1], [0], [0], [1], [0, 0, 1, 1], [], []>} : vector<7x128xbf16>, vector<128x256xbf16>, vector<7x256xf32> -> vector<7x256xf32>
    %48 = arith.addf %34, %47 : vector<7x256xf32>
    %49 = vector.extract_strided_slice %9 {offsets = [1, 0], sizes = [7, 128], strides = [1, 1]} : vector<8x128xbf16> to vector<7x128xbf16>
    %cst_43 = arith.constant dense<0.000000e+00> : vector<7x256xf32>
    %50 = tpu.matmul %49, %39, %cst_43 {dimension_numbers = #tpu.dot_dimension_numbers<[1], [0], [0], [1], [0, 0, 1, 1], [], []>} : vector<7x128xbf16>, vector<128x256xbf16>, vector<7x256xf32> -> vector<7x256xf32>
    %51 = arith.addf %37, %50 : vector<7x256xf32>
    %c3_44 = arith.constant 3 : index
    %c0_45 = arith.constant 0 : index
    %c0_46 = arith.constant 0 : index
    %52 = vector.load %arg2[%c3_44, %c0_45, %c0_46] : memref<5x128x256xbf16, #tpu.memory_space<vmem>>, vector<1x128x256xbf16>
    %53 = vector.shape_cast %52 : vector<1x128x256xbf16> to vector<128x256xbf16>
    %54 = vector.extract_strided_slice %13 {offsets = [0, 0], sizes = [7, 128], strides = [1, 1]} : vector<8x128xbf16> to vector<7x128xbf16>
    %cst_47 = arith.constant dense<0.000000e+00> : vector<7x256xf32>
    %55 = tpu.matmul %54, %53, %cst_47 {dimension_numbers = #tpu.dot_dimension_numbers<[1], [0], [0], [1], [0, 0, 1, 1], [], []>} : vector<7x128xbf16>, vector<128x256xbf16>, vector<7x256xf32> -> vector<7x256xf32>
    %56 = arith.addf %42, %55 : vector<7x256xf32>
    %57 = vector.extract_strided_slice %7 {offsets = [1, 0], sizes = [7, 128], strides = [1, 1]} : vector<8x128xbf16> to vector<7x128xbf16>
    %cst_48 = arith.constant dense<0.000000e+00> : vector<7x256xf32>
    %58 = tpu.matmul %57, %53, %cst_48 {dimension_numbers = #tpu.dot_dimension_numbers<[1], [0], [0], [1], [0, 0, 1, 1], [], []>} : vector<7x128xbf16>, vector<128x256xbf16>, vector<7x256xf32> -> vector<7x256xf32>
    %59 = arith.addf %45, %58 : vector<7x256xf32>
    %60 = vector.extract_strided_slice %9 {offsets = [1, 0], sizes = [7, 128], strides = [1, 1]} : vector<8x128xbf16> to vector<7x128xbf16>
    %cst_49 = arith.constant dense<0.000000e+00> : vector<7x256xf32>
    %61 = tpu.matmul %60, %53, %cst_49 {dimension_numbers = #tpu.dot_dimension_numbers<[1], [0], [0], [1], [0, 0, 1, 1], [], []>} : vector<7x128xbf16>, vector<128x256xbf16>, vector<7x256xf32> -> vector<7x256xf32>
    %62 = arith.addf %48, %61 : vector<7x256xf32>
    %63 = vector.extract_strided_slice %11 {offsets = [1, 0], sizes = [7, 128], strides = [1, 1]} : vector<8x128xbf16> to vector<7x128xbf16>
    %cst_50 = arith.constant dense<0.000000e+00> : vector<7x256xf32>
    %64 = tpu.matmul %63, %53, %cst_50 {dimension_numbers = #tpu.dot_dimension_numbers<[1], [0], [0], [1], [0, 0, 1, 1], [], []>} : vector<7x128xbf16>, vector<128x256xbf16>, vector<7x256xf32> -> vector<7x256xf32>
    %65 = arith.addf %51, %64 : vector<7x256xf32>
    %c4 = arith.constant 4 : index
    %c0_51 = arith.constant 0 : index
    %c0_52 = arith.constant 0 : index
    %66 = vector.load %arg2[%c4, %c0_51, %c0_52] : memref<5x128x256xbf16, #tpu.memory_space<vmem>>, vector<1x128x256xbf16>
    %67 = vector.shape_cast %66 : vector<1x128x256xbf16> to vector<128x256xbf16>
    %68 = vector.extract_strided_slice %7 {offsets = [1, 0], sizes = [7, 128], strides = [1, 1]} : vector<8x128xbf16> to vector<7x128xbf16>
    %cst_53 = arith.constant dense<0.000000e+00> : vector<7x256xf32>
    %69 = tpu.matmul %68, %67, %cst_53 {dimension_numbers = #tpu.dot_dimension_numbers<[1], [0], [0], [1], [0, 0, 1, 1], [], []>} : vector<7x128xbf16>, vector<128x256xbf16>, vector<7x256xf32> -> vector<7x256xf32>
    %70 = arith.addf %56, %69 : vector<7x256xf32>
    %71 = vector.extract_strided_slice %9 {offsets = [1, 0], sizes = [7, 128], strides = [1, 1]} : vector<8x128xbf16> to vector<7x128xbf16>
    %cst_54 = arith.constant dense<0.000000e+00> : vector<7x256xf32>
    %72 = tpu.matmul %71, %67, %cst_54 {dimension_numbers = #tpu.dot_dimension_numbers<[1], [0], [0], [1], [0, 0, 1, 1], [], []>} : vector<7x128xbf16>, vector<128x256xbf16>, vector<7x256xf32> -> vector<7x256xf32>
    %73 = arith.addf %59, %72 : vector<7x256xf32>
    %74 = vector.extract_strided_slice %11 {offsets = [1, 0], sizes = [7, 128], strides = [1, 1]} : vector<8x128xbf16> to vector<7x128xbf16>
    %cst_55 = arith.constant dense<0.000000e+00> : vector<7x256xf32>
    %75 = tpu.matmul %74, %67, %cst_55 {dimension_numbers = #tpu.dot_dimension_numbers<[1], [0], [0], [1], [0, 0, 1, 1], [], []>} : vector<7x128xbf16>, vector<128x256xbf16>, vector<7x256xf32> -> vector<7x256xf32>
    %76 = arith.addf %62, %75 : vector<7x256xf32>
    %77 = vector.extract_strided_slice %13 {offsets = [1, 0], sizes = [7, 128], strides = [1, 1]} : vector<8x128xbf16> to vector<7x128xbf16>
    %cst_56 = arith.constant dense<0.000000e+00> : vector<7x256xf32>
    %78 = tpu.matmul %77, %67, %cst_56 {dimension_numbers = #tpu.dot_dimension_numbers<[1], [0], [0], [1], [0, 0, 1, 1], [], []>} : vector<7x128xbf16>, vector<128x256xbf16>, vector<7x256xf32> -> vector<7x256xf32>
    %79 = arith.addf %65, %78 : vector<7x256xf32>
    %80 = vector.broadcast %0 : vector<1x256xf32> to vector<7x256xf32>
    %81 = arith.addf %70, %80 : vector<7x256xf32>
    %82 = vector.broadcast %0 : vector<1x256xf32> to vector<7x256xf32>
    %83 = arith.addf %73, %82 : vector<7x256xf32>
    %84 = vector.broadcast %0 : vector<1x256xf32> to vector<7x256xf32>
    %85 = arith.addf %76, %84 : vector<7x256xf32>
    %86 = vector.broadcast %0 : vector<1x256xf32> to vector<7x256xf32>
    %87 = arith.addf %79, %86 : vector<7x256xf32>
    %cst_57 = arith.constant dense<0.000000e+00> : vector<256xf32>
    %88 = vector.multi_reduction <add>, %81, %cst_57 [0] : vector<7x256xf32> to vector<256xf32>
    %89 = vector.shape_cast %88 : vector<256xf32> to vector<1x256xf32>
    %cst_58 = arith.constant 0.000000e+00 : f32
    %90 = vector.broadcast %cst_58 : f32 to vector<1x256xf32>
    %91 = arith.addf %90, %89 : vector<1x256xf32>
    %cst_59 = arith.constant dense<0.000000e+00> : vector<256xf32>
    %92 = vector.multi_reduction <add>, %83, %cst_59 [0] : vector<7x256xf32> to vector<256xf32>
    %93 = vector.shape_cast %92 : vector<256xf32> to vector<1x256xf32>
    %94 = arith.addf %91, %93 : vector<1x256xf32>
    %cst_60 = arith.constant dense<0.000000e+00> : vector<256xf32>
    %95 = vector.multi_reduction <add>, %85, %cst_60 [0] : vector<7x256xf32> to vector<256xf32>
    %96 = vector.shape_cast %95 : vector<256xf32> to vector<1x256xf32>
    %97 = arith.addf %94, %96 : vector<1x256xf32>
    %cst_61 = arith.constant dense<0.000000e+00> : vector<256xf32>
    %98 = vector.multi_reduction <add>, %87, %cst_61 [0] : vector<7x256xf32> to vector<256xf32>
    %99 = vector.shape_cast %98 : vector<256xf32> to vector<1x256xf32>
    %100 = arith.addf %97, %99 : vector<1x256xf32>
    %101 = arith.mulf %81, %81 : vector<7x256xf32>
    %cst_62 = arith.constant dense<0.000000e+00> : vector<256xf32>
    %102 = vector.multi_reduction <add>, %101, %cst_62 [0] : vector<7x256xf32> to vector<256xf32>
    %103 = vector.shape_cast %102 : vector<256xf32> to vector<1x256xf32>
    %cst_63 = arith.constant 0.000000e+00 : f32
    %104 = vector.broadcast %cst_63 : f32 to vector<1x256xf32>
    %105 = arith.addf %104, %103 : vector<1x256xf32>
    %106 = arith.mulf %83, %83 : vector<7x256xf32>
    %cst_64 = arith.constant dense<0.000000e+00> : vector<256xf32>
    %107 = vector.multi_reduction <add>, %106, %cst_64 [0] : vector<7x256xf32> to vector<256xf32>
    %108 = vector.shape_cast %107 : vector<256xf32> to vector<1x256xf32>
    %109 = arith.addf %105, %108 : vector<1x256xf32>
    %110 = arith.mulf %85, %85 : vector<7x256xf32>
    %cst_65 = arith.constant dense<0.000000e+00> : vector<256xf32>
    %111 = vector.multi_reduction <add>, %110, %cst_65 [0] : vector<7x256xf32> to vector<256xf32>
    %112 = vector.shape_cast %111 : vector<256xf32> to vector<1x256xf32>
    %113 = arith.addf %109, %112 : vector<1x256xf32>
    %114 = arith.mulf %87, %87 : vector<7x256xf32>
    %cst_66 = arith.constant dense<0.000000e+00> : vector<256xf32>
    %115 = vector.multi_reduction <add>, %114, %cst_66 [0] : vector<7x256xf32> to vector<256xf32>
    %116 = vector.shape_cast %115 : vector<256xf32> to vector<1x256xf32>
    %117 = arith.addf %113, %116 : vector<1x256xf32>
    %118 = tpu.concatenate %100, %117 in 0 : vector<1x256xf32>, vector<1x256xf32> -> vector<2x256xf32>
    %c0_67 = arith.constant 0 : index
    %c0_68 = arith.constant 0 : index
    %119 = vector.load %arg4[%c0_67, %c0_68] : memref<256x256xf32, #tpu.memory_space<vmem>>, vector<256x256xf32>
    %cst_69 = arith.constant dense<0.000000e+00> : vector<2x256xf32>
    %120 = tpu.matmul %118, %119, %cst_69 {dimension_numbers = #tpu.dot_dimension_numbers<[1], [0], [0], [1], [0, 0, 1, 1], [], []>} : vector<2x256xf32>, vector<256x256xf32>, vector<2x256xf32> -> vector<2x256xf32>
    %121 = vector.extract_strided_slice %120 {offsets = [0, 0], sizes = [1, 256], strides = [1, 1]} : vector<2x256xf32> to vector<1x256xf32>
    %cst_70 = arith.constant 6.37755089E-4 : f32
    %122 = vector.broadcast %cst_70 : f32 to vector<1x256xf32>
    %123 = arith.mulf %121, %122 : vector<1x256xf32>
    %124 = vector.extract_strided_slice %120 {offsets = [1, 0], sizes = [1, 256], strides = [1, 1]} : vector<2x256xf32> to vector<1x256xf32>
    %cst_71 = arith.constant 6.37755089E-4 : f32
    %125 = vector.broadcast %cst_71 : f32 to vector<1x256xf32>
    %126 = arith.mulf %124, %125 : vector<1x256xf32>
    %127 = arith.mulf %123, %123 : vector<1x256xf32>
    %128 = arith.subf %126, %127 : vector<1x256xf32>
    %cst_72 = arith.constant 0.000000e+00 : f32
    %129 = vector.broadcast %cst_72 : f32 to vector<1x256xf32>
    %130 = arith.maximumf %128, %129 : vector<1x256xf32>
    %cst_73 = arith.constant 9.99999974E-6 : f32
    %131 = vector.broadcast %cst_73 : f32 to vector<1x256xf32>
    %132 = arith.addf %130, %131 : vector<1x256xf32>
    %133 = math.rsqrt %132 : vector<1x256xf32>
    %134 = arith.mulf %1, %133 : vector<1x256xf32>
    %135 = arith.mulf %123, %134 : vector<1x256xf32>
    %136 = arith.subf %2, %135 : vector<1x256xf32>
    %137 = vector.broadcast %134 : vector<1x256xf32> to vector<7x256xf32>
    %138 = arith.mulf %81, %137 : vector<7x256xf32>
    %139 = vector.broadcast %136 : vector<1x256xf32> to vector<7x256xf32>
    %140 = arith.addf %138, %139 : vector<7x256xf32>
    %cst_74 = arith.constant 0.000000e+00 : f32
    %141 = vector.broadcast %cst_74 : f32 to vector<7x256xf32>
    %142 = arith.maximumf %140, %141 : vector<7x256xf32>
    %143 = vector.broadcast %134 : vector<1x256xf32> to vector<7x256xf32>
    %144 = arith.mulf %83, %143 : vector<7x256xf32>
    %145 = vector.broadcast %136 : vector<1x256xf32> to vector<7x256xf32>
    %146 = arith.addf %144, %145 : vector<7x256xf32>
    %cst_75 = arith.constant 0.000000e+00 : f32
    %147 = vector.broadcast %cst_75 : f32 to vector<7x256xf32>
    %148 = arith.maximumf %146, %147 : vector<7x256xf32>
    %149 = vector.broadcast %134 : vector<1x256xf32> to vector<7x256xf32>
    %150 = arith.mulf %85, %149 : vector<7x256xf32>
    %151 = vector.broadcast %136 : vector<1x256xf32> to vector<7x256xf32>
    %152 = arith.addf %150, %151 : vector<7x256xf32>
    %cst_76 = arith.constant 0.000000e+00 : f32
    %153 = vector.broadcast %cst_76 : f32 to vector<7x256xf32>
    %154 = arith.maximumf %152, %153 : vector<7x256xf32>
    %155 = vector.broadcast %134 : vector<1x256xf32> to vector<7x256xf32>
    %156 = arith.mulf %87, %155 : vector<7x256xf32>
    %157 = vector.broadcast %136 : vector<1x256xf32> to vector<7x256xf32>
    %158 = arith.addf %156, %157 : vector<7x256xf32>
    %cst_77 = arith.constant 0.000000e+00 : f32
    %159 = vector.broadcast %cst_77 : f32 to vector<7x256xf32>
    %160 = arith.maximumf %158, %159 : vector<7x256xf32>
    %161 = arith.maximumf %142, %148 : vector<7x256xf32>
    %162 = arith.maximumf %154, %160 : vector<7x256xf32>
    %163 = vector.extract_strided_slice %161 {offsets = [0, 0], sizes = [7, 128], strides = [1, 1]} : vector<7x256xf32> to vector<7x128xf32>
    %164 = vector.extract_strided_slice %161 {offsets = [0, 128], sizes = [7, 128], strides = [1, 1]} : vector<7x256xf32> to vector<7x128xf32>
    %165 = arith.maximumf %163, %164 : vector<7x128xf32>
    %166 = vector.extract_strided_slice %162 {offsets = [0, 0], sizes = [7, 128], strides = [1, 1]} : vector<7x256xf32> to vector<7x128xf32>
    %167 = vector.extract_strided_slice %162 {offsets = [0, 128], sizes = [7, 128], strides = [1, 1]} : vector<7x256xf32> to vector<7x128xf32>
    %168 = arith.maximumf %166, %167 : vector<7x128xf32>
    %c0_78 = arith.constant 0 : index
    %c0_79 = arith.constant 0 : index
    %c0_80 = arith.constant 0 : index
    %169 = vector.load %arg5[%c0_78, %c0_79, %c0_80] : memref<5x128x256xbf16, #tpu.memory_space<vmem>>, vector<1x128x256xbf16>
    %170 = vector.shape_cast %169 : vector<1x128x256xbf16> to vector<128x256xbf16>
    %171 = vector.extract_strided_slice %165 {offsets = [0, 0], sizes = [5, 128], strides = [1, 1]} : vector<7x128xf32> to vector<5x128xf32>
    %172 = arith.truncf %171 : vector<5x128xf32> to vector<5x128xbf16>
    %cst_81 = arith.constant dense<0.000000e+00> : vector<5x256xf32>
    %173 = tpu.matmul %172, %170, %cst_81 {dimension_numbers = #tpu.dot_dimension_numbers<[1], [0], [0], [1], [0, 0, 1, 1], [], []>} : vector<5x128xbf16>, vector<128x256xbf16>, vector<5x256xf32> -> vector<5x256xf32>
    %174 = vector.extract_strided_slice %168 {offsets = [0, 0], sizes = [5, 128], strides = [1, 1]} : vector<7x128xf32> to vector<5x128xf32>
    %175 = arith.truncf %174 : vector<5x128xf32> to vector<5x128xbf16>
    %cst_82 = arith.constant dense<0.000000e+00> : vector<5x256xf32>
    %176 = tpu.matmul %175, %170, %cst_82 {dimension_numbers = #tpu.dot_dimension_numbers<[1], [0], [0], [1], [0, 0, 1, 1], [], []>} : vector<5x128xbf16>, vector<128x256xbf16>, vector<5x256xf32> -> vector<5x256xf32>
    %c1_83 = arith.constant 1 : index
    %c0_84 = arith.constant 0 : index
    %c0_85 = arith.constant 0 : index
    %177 = vector.load %arg5[%c1_83, %c0_84, %c0_85] : memref<5x128x256xbf16, #tpu.memory_space<vmem>>, vector<1x128x256xbf16>
    %178 = vector.shape_cast %177 : vector<1x128x256xbf16> to vector<128x256xbf16>
    %179 = vector.extract_strided_slice %168 {offsets = [0, 0], sizes = [5, 128], strides = [1, 1]} : vector<7x128xf32> to vector<5x128xf32>
    %180 = arith.truncf %179 : vector<5x128xf32> to vector<5x128xbf16>
    %cst_86 = arith.constant dense<0.000000e+00> : vector<5x256xf32>
    %181 = tpu.matmul %180, %178, %cst_86 {dimension_numbers = #tpu.dot_dimension_numbers<[1], [0], [0], [1], [0, 0, 1, 1], [], []>} : vector<5x128xbf16>, vector<128x256xbf16>, vector<5x256xf32> -> vector<5x256xf32>
    %182 = arith.addf %173, %181 : vector<5x256xf32>
    %183 = vector.extract_strided_slice %165 {offsets = [1, 0], sizes = [5, 128], strides = [1, 1]} : vector<7x128xf32> to vector<5x128xf32>
    %184 = arith.truncf %183 : vector<5x128xf32> to vector<5x128xbf16>
    %cst_87 = arith.constant dense<0.000000e+00> : vector<5x256xf32>
    %185 = tpu.matmul %184, %178, %cst_87 {dimension_numbers = #tpu.dot_dimension_numbers<[1], [0], [0], [1], [0, 0, 1, 1], [], []>} : vector<5x128xbf16>, vector<128x256xbf16>, vector<5x256xf32> -> vector<5x256xf32>
    %186 = arith.addf %176, %185 : vector<5x256xf32>
    %c2_88 = arith.constant 2 : index
    %c0_89 = arith.constant 0 : index
    %c0_90 = arith.constant 0 : index
    %187 = vector.load %arg5[%c2_88, %c0_89, %c0_90] : memref<5x128x256xbf16, #tpu.memory_space<vmem>>, vector<1x128x256xbf16>
    %188 = vector.shape_cast %187 : vector<1x128x256xbf16> to vector<128x256xbf16>
    %189 = vector.extract_strided_slice %165 {offsets = [1, 0], sizes = [5, 128], strides = [1, 1]} : vector<7x128xf32> to vector<5x128xf32>
    %190 = arith.truncf %189 : vector<5x128xf32> to vector<5x128xbf16>
    %cst_91 = arith.constant dense<0.000000e+00> : vector<5x256xf32>
    %191 = tpu.matmul %190, %188, %cst_91 {dimension_numbers = #tpu.dot_dimension_numbers<[1], [0], [0], [1], [0, 0, 1, 1], [], []>} : vector<5x128xbf16>, vector<128x256xbf16>, vector<5x256xf32> -> vector<5x256xf32>
    %192 = arith.addf %182, %191 : vector<5x256xf32>
    %193 = vector.extract_strided_slice %168 {offsets = [1, 0], sizes = [5, 128], strides = [1, 1]} : vector<7x128xf32> to vector<5x128xf32>
    %194 = arith.truncf %193 : vector<5x128xf32> to vector<5x128xbf16>
    %cst_92 = arith.constant dense<0.000000e+00> : vector<5x256xf32>
    %195 = tpu.matmul %194, %188, %cst_92 {dimension_numbers = #tpu.dot_dimension_numbers<[1], [0], [0], [1], [0, 0, 1, 1], [], []>} : vector<5x128xbf16>, vector<128x256xbf16>, vector<5x256xf32> -> vector<5x256xf32>
    %196 = arith.addf %186, %195 : vector<5x256xf32>
    %c3_93 = arith.constant 3 : index
    %c0_94 = arith.constant 0 : index
    %c0_95 = arith.constant 0 : index
    %197 = vector.load %arg5[%c3_93, %c0_94, %c0_95] : memref<5x128x256xbf16, #tpu.memory_space<vmem>>, vector<1x128x256xbf16>
    %198 = vector.shape_cast %197 : vector<1x128x256xbf16> to vector<128x256xbf16>
    %199 = vector.extract_strided_slice %168 {offsets = [1, 0], sizes = [5, 128], strides = [1, 1]} : vector<7x128xf32> to vector<5x128xf32>
    %200 = arith.truncf %199 : vector<5x128xf32> to vector<5x128xbf16>
    %cst_96 = arith.constant dense<0.000000e+00> : vector<5x256xf32>
    %201 = tpu.matmul %200, %198, %cst_96 {dimension_numbers = #tpu.dot_dimension_numbers<[1], [0], [0], [1], [0, 0, 1, 1], [], []>} : vector<5x128xbf16>, vector<128x256xbf16>, vector<5x256xf32> -> vector<5x256xf32>
    %202 = arith.addf %192, %201 : vector<5x256xf32>
    %203 = vector.extract_strided_slice %165 {offsets = [2, 0], sizes = [5, 128], strides = [1, 1]} : vector<7x128xf32> to vector<5x128xf32>
    %204 = arith.truncf %203 : vector<5x128xf32> to vector<5x128xbf16>
    %cst_97 = arith.constant dense<0.000000e+00> : vector<5x256xf32>
    %205 = tpu.matmul %204, %198, %cst_97 {dimension_numbers = #tpu.dot_dimension_numbers<[1], [0], [0], [1], [0, 0, 1, 1], [], []>} : vector<5x128xbf16>, vector<128x256xbf16>, vector<5x256xf32> -> vector<5x256xf32>
    %206 = arith.addf %196, %205 : vector<5x256xf32>
    %c4_98 = arith.constant 4 : index
    %c0_99 = arith.constant 0 : index
    %c0_100 = arith.constant 0 : index
    %207 = vector.load %arg5[%c4_98, %c0_99, %c0_100] : memref<5x128x256xbf16, #tpu.memory_space<vmem>>, vector<1x128x256xbf16>
    %208 = vector.shape_cast %207 : vector<1x128x256xbf16> to vector<128x256xbf16>
    %209 = vector.extract_strided_slice %165 {offsets = [2, 0], sizes = [5, 128], strides = [1, 1]} : vector<7x128xf32> to vector<5x128xf32>
    %210 = arith.truncf %209 : vector<5x128xf32> to vector<5x128xbf16>
    %cst_101 = arith.constant dense<0.000000e+00> : vector<5x256xf32>
    %211 = tpu.matmul %210, %208, %cst_101 {dimension_numbers = #tpu.dot_dimension_numbers<[1], [0], [0], [1], [0, 0, 1, 1], [], []>} : vector<5x128xbf16>, vector<128x256xbf16>, vector<5x256xf32> -> vector<5x256xf32>
    %212 = arith.addf %202, %211 : vector<5x256xf32>
    %213 = vector.extract_strided_slice %168 {offsets = [2, 0], sizes = [5, 128], strides = [1, 1]} : vector<7x128xf32> to vector<5x128xf32>
    %214 = arith.truncf %213 : vector<5x128xf32> to vector<5x128xbf16>
    %cst_102 = arith.constant dense<0.000000e+00> : vector<5x256xf32>
    %215 = tpu.matmul %214, %208, %cst_102 {dimension_numbers = #tpu.dot_dimension_numbers<[1], [0], [0], [1], [0, 0, 1, 1], [], []>} : vector<5x128xbf16>, vector<128x256xbf16>, vector<5x256xf32> -> vector<5x256xf32>
    %216 = arith.addf %206, %215 : vector<5x256xf32>
    %217 = vector.broadcast %3 : vector<1x256xf32> to vector<5x256xf32>
    %218 = arith.addf %212, %217 : vector<5x256xf32>
    %219 = vector.broadcast %3 : vector<1x256xf32> to vector<5x256xf32>
    %220 = arith.addf %216, %219 : vector<5x256xf32>
    %cst_103 = arith.constant dense<0.000000e+00> : vector<256xf32>
    %221 = vector.multi_reduction <add>, %218, %cst_103 [0] : vector<5x256xf32> to vector<256xf32>
    %222 = vector.shape_cast %221 : vector<256xf32> to vector<1x256xf32>
    %cst_104 = arith.constant 0.000000e+00 : f32
    %223 = vector.broadcast %cst_104 : f32 to vector<1x256xf32>
    %224 = arith.addf %223, %222 : vector<1x256xf32>
    %cst_105 = arith.constant dense<0.000000e+00> : vector<256xf32>
    %225 = vector.multi_reduction <add>, %220, %cst_105 [0] : vector<5x256xf32> to vector<256xf32>
    %226 = vector.shape_cast %225 : vector<256xf32> to vector<1x256xf32>
    %227 = arith.addf %224, %226 : vector<1x256xf32>
    %228 = arith.mulf %218, %218 : vector<5x256xf32>
    %cst_106 = arith.constant dense<0.000000e+00> : vector<256xf32>
    %229 = vector.multi_reduction <add>, %228, %cst_106 [0] : vector<5x256xf32> to vector<256xf32>
    %230 = vector.shape_cast %229 : vector<256xf32> to vector<1x256xf32>
    %cst_107 = arith.constant 0.000000e+00 : f32
    %231 = vector.broadcast %cst_107 : f32 to vector<1x256xf32>
    %232 = arith.addf %231, %230 : vector<1x256xf32>
    %233 = arith.mulf %220, %220 : vector<5x256xf32>
    %cst_108 = arith.constant dense<0.000000e+00> : vector<256xf32>
    %234 = vector.multi_reduction <add>, %233, %cst_108 [0] : vector<5x256xf32> to vector<256xf32>
    %235 = vector.shape_cast %234 : vector<256xf32> to vector<1x256xf32>
    %236 = arith.addf %232, %235 : vector<1x256xf32>
    %237 = tpu.concatenate %227, %236 in 0 : vector<1x256xf32>, vector<1x256xf32> -> vector<2x256xf32>
    %c0_109 = arith.constant 0 : index
    %c0_110 = arith.constant 0 : index
    %238 = vector.load %arg7[%c0_109, %c0_110] : memref<256x256xf32, #tpu.memory_space<vmem>>, vector<256x256xf32>
    %cst_111 = arith.constant dense<0.000000e+00> : vector<2x256xf32>
    %239 = tpu.matmul %237, %238, %cst_111 {dimension_numbers = #tpu.dot_dimension_numbers<[1], [0], [0], [1], [0, 0, 1, 1], [], []>} : vector<2x256xf32>, vector<256x256xf32>, vector<2x256xf32> -> vector<2x256xf32>
    %240 = vector.extract_strided_slice %239 {offsets = [0, 0], sizes = [1, 256], strides = [1, 1]} : vector<2x256xf32> to vector<1x256xf32>
    %cst_112 = arith.constant 2.500000e-03 : f32
    %241 = vector.broadcast %cst_112 : f32 to vector<1x256xf32>
    %242 = arith.mulf %240, %241 : vector<1x256xf32>
    %243 = vector.extract_strided_slice %239 {offsets = [1, 0], sizes = [1, 256], strides = [1, 1]} : vector<2x256xf32> to vector<1x256xf32>
    %cst_113 = arith.constant 2.500000e-03 : f32
    %244 = vector.broadcast %cst_113 : f32 to vector<1x256xf32>
    %245 = arith.mulf %243, %244 : vector<1x256xf32>
    %246 = arith.mulf %242, %242 : vector<1x256xf32>
    %247 = arith.subf %245, %246 : vector<1x256xf32>
    %cst_114 = arith.constant 0.000000e+00 : f32
    %248 = vector.broadcast %cst_114 : f32 to vector<1x256xf32>
    %249 = arith.maximumf %247, %248 : vector<1x256xf32>
    %cst_115 = arith.constant 9.99999974E-6 : f32
    %250 = vector.broadcast %cst_115 : f32 to vector<1x256xf32>
    %251 = arith.addf %249, %250 : vector<1x256xf32>
    %252 = math.rsqrt %251 : vector<1x256xf32>
    %253 = arith.mulf %4, %252 : vector<1x256xf32>
    %254 = arith.mulf %242, %253 : vector<1x256xf32>
    %255 = arith.subf %5, %254 : vector<1x256xf32>
    %256 = vector.broadcast %253 : vector<1x256xf32> to vector<5x256xf32>
    %257 = arith.mulf %218, %256 : vector<5x256xf32>
    %258 = vector.broadcast %255 : vector<1x256xf32> to vector<5x256xf32>
    %259 = arith.addf %257, %258 : vector<5x256xf32>
    %cst_116 = arith.constant 0.000000e+00 : f32
    %260 = vector.broadcast %cst_116 : f32 to vector<5x256xf32>
    %261 = arith.maximumf %259, %260 : vector<5x256xf32>
    %262 = vector.broadcast %253 : vector<1x256xf32> to vector<5x256xf32>
    %263 = arith.mulf %220, %262 : vector<5x256xf32>
    %264 = vector.broadcast %255 : vector<1x256xf32> to vector<5x256xf32>
    %265 = arith.addf %263, %264 : vector<5x256xf32>
    %cst_117 = arith.constant 0.000000e+00 : f32
    %266 = vector.broadcast %cst_117 : f32 to vector<5x256xf32>
    %267 = arith.maximumf %265, %266 : vector<5x256xf32>
    %268 = arith.maximumf %261, %267 : vector<5x256xf32>
    %269 = vector.extract_strided_slice %268 {offsets = [0, 0], sizes = [5, 128], strides = [1, 1]} : vector<5x256xf32> to vector<5x128xf32>
    %270 = vector.extract_strided_slice %268 {offsets = [0, 128], sizes = [5, 128], strides = [1, 1]} : vector<5x256xf32> to vector<5x128xf32>
    %271 = arith.maximumf %269, %270 : vector<5x128xf32>
    %272 = vector.extract_strided_slice %271 {offsets = [0, 0], sizes = [1, 128], strides = [1, 1]} : vector<5x128xf32> to vector<1x128xf32>
    %273 = arith.truncf %272 : vector<1x128xf32> to vector<1x128xbf16>
    %c0_118 = arith.constant 0 : index
    %c0_119 = arith.constant 0 : index
    %c0_120 = arith.constant 0 : index
    %274 = vector.load %arg13[%c0_118, %c0_119, %c0_120] : memref<5x1x128xbf16, #tpu.memory_space<vmem>>, vector<1x1x128xbf16>
    %275 = vector.shape_cast %274 : vector<1x1x128xbf16> to vector<1x128xbf16>
    %276 = vector.shape_cast %273 : vector<1x128xbf16> to vector<1x1x128xbf16>
    tpu.vector_store %arg13[%c0_118, %c0_119, %c0_120], %276 {strides = array<i32>} : memref<5x1x128xbf16, #tpu.memory_space<vmem>>, vector<1x1x128xbf16>,
    %277 = vector.extract_strided_slice %271 {offsets = [1, 0], sizes = [1, 128], strides = [1, 1]} : vector<5x128xf32> to vector<1x128xf32>
    %278 = arith.truncf %277 : vector<1x128xf32> to vector<1x128xbf16>
    %c1_121 = arith.constant 1 : index
    %c0_122 = arith.constant 0 : index
    %c0_123 = arith.constant 0 : index
    %279 = vector.load %arg13[%c1_121, %c0_122, %c0_123] : memref<5x1x128xbf16, #tpu.memory_space<vmem>>, vector<1x1x128xbf16>
    %280 = vector.shape_cast %279 : vector<1x1x128xbf16> to vector<1x128xbf16>
    %281 = vector.shape_cast %278 : vector<1x128xbf16> to vector<1x1x128xbf16>
    tpu.vector_store %arg13[%c1_121, %c0_122, %c0_123], %281 {strides = array<i32>} : memref<5x1x128xbf16, #tpu.memory_space<vmem>>, vector<1x1x128xbf16>,
    %282 = vector.extract_strided_slice %271 {offsets = [2, 0], sizes = [1, 128], strides = [1, 1]} : vector<5x128xf32> to vector<1x128xf32>
    %283 = arith.truncf %282 : vector<1x128xf32> to vector<1x128xbf16>
    %c2_124 = arith.constant 2 : index
    %c0_125 = arith.constant 0 : index
    %c0_126 = arith.constant 0 : index
    %284 = vector.load %arg13[%c2_124, %c0_125, %c0_126] : memref<5x1x128xbf16, #tpu.memory_space<vmem>>, vector<1x1x128xbf16>
    %285 = vector.shape_cast %284 : vector<1x1x128xbf16> to vector<1x128xbf16>
    %286 = vector.shape_cast %283 : vector<1x128xbf16> to vector<1x1x128xbf16>
    tpu.vector_store %arg13[%c2_124, %c0_125, %c0_126], %286 {strides = array<i32>} : memref<5x1x128xbf16, #tpu.memory_space<vmem>>, vector<1x1x128xbf16>,
    %287 = vector.extract_strided_slice %271 {offsets = [3, 0], sizes = [1, 128], strides = [1, 1]} : vector<5x128xf32> to vector<1x128xf32>
    %288 = arith.truncf %287 : vector<1x128xf32> to vector<1x128xbf16>
    %c3_127 = arith.constant 3 : index
    %c0_128 = arith.constant 0 : index
    %c0_129 = arith.constant 0 : index
    %289 = vector.load %arg13[%c3_127, %c0_128, %c0_129] : memref<5x1x128xbf16, #tpu.memory_space<vmem>>, vector<1x1x128xbf16>
    %290 = vector.shape_cast %289 : vector<1x1x128xbf16> to vector<1x128xbf16>
    %291 = vector.shape_cast %288 : vector<1x128xbf16> to vector<1x1x128xbf16>
    tpu.vector_store %arg13[%c3_127, %c0_128, %c0_129], %291 {strides = array<i32>} : memref<5x1x128xbf16, #tpu.memory_space<vmem>>, vector<1x1x128xbf16>,
    %292 = vector.extract_strided_slice %271 {offsets = [4, 0], sizes = [1, 128], strides = [1, 1]} : vector<5x128xf32> to vector<1x128xf32>
    %293 = arith.truncf %292 : vector<1x128xf32> to vector<1x128xbf16>
    %c4_130 = arith.constant 4 : index
    %c0_131 = arith.constant 0 : index
    %c0_132 = arith.constant 0 : index
    %294 = vector.load %arg13[%c4_130, %c0_131, %c0_132] : memref<5x1x128xbf16, #tpu.memory_space<vmem>>, vector<1x1x128xbf16>
    %295 = vector.shape_cast %294 : vector<1x1x128xbf16> to vector<1x128xbf16>
    %296 = vector.shape_cast %293 : vector<1x128xbf16> to vector<1x1x128xbf16>
    tpu.vector_store %arg13[%c4_130, %c0_131, %c0_132], %296 {strides = array<i32>} : memref<5x1x128xbf16, #tpu.memory_space<vmem>>, vector<1x1x128xbf16>,
    %c0_133 = arith.constant 0 : index
    %c0_134 = arith.constant 0 : index
    %c0_135 = arith.constant 0 : index
    %297 = vector.load %arg13[%c0_133, %c0_134, %c0_135] : memref<5x1x128xbf16, #tpu.memory_space<vmem>>, vector<1x1x128xbf16>
    %298 = vector.shape_cast %297 : vector<1x1x128xbf16> to vector<1x128xbf16>
    %c0_136 = arith.constant 0 : index
    %c0_137 = arith.constant 0 : index
    %c0_138 = arith.constant 0 : index
    %299 = vector.load %arg8[%c0_136, %c0_137, %c0_138] : memref<5x128x128xbf16, #tpu.memory_space<vmem>>, vector<1x128x128xbf16>
    %300 = vector.shape_cast %299 : vector<1x128x128xbf16> to vector<128x128xbf16>
    %cst_139 = arith.constant dense<0.000000e+00> : vector<1x128xf32>
    %301 = tpu.matmul %298, %300, %cst_139 {dimension_numbers = #tpu.dot_dimension_numbers<[1], [0], [0], [1], [0, 0, 1, 1], [], []>} : vector<1x128xbf16>, vector<128x128xbf16>, vector<1x128xf32> -> vector<1x128xf32>
    %c1_140 = arith.constant 1 : index
    %c0_141 = arith.constant 0 : index
    %c0_142 = arith.constant 0 : index
    %302 = vector.load %arg13[%c1_140, %c0_141, %c0_142] : memref<5x1x128xbf16, #tpu.memory_space<vmem>>, vector<1x1x128xbf16>
    %303 = vector.shape_cast %302 : vector<1x1x128xbf16> to vector<1x128xbf16>
    %c1_143 = arith.constant 1 : index
    %c0_144 = arith.constant 0 : index
    %c0_145 = arith.constant 0 : index
    %304 = vector.load %arg8[%c1_143, %c0_144, %c0_145] : memref<5x128x128xbf16, #tpu.memory_space<vmem>>, vector<1x128x128xbf16>
    %305 = vector.shape_cast %304 : vector<1x128x128xbf16> to vector<128x128xbf16>
    %cst_146 = arith.constant dense<0.000000e+00> : vector<1x128xf32>
    %306 = tpu.matmul %303, %305, %cst_146 {dimension_numbers = #tpu.dot_dimension_numbers<[1], [0], [0], [1], [0, 0, 1, 1], [], []>} : vector<1x128xbf16>, vector<128x128xbf16>, vector<1x128xf32> -> vector<1x128xf32>
    %307 = arith.addf %301, %306 : vector<1x128xf32>
    %c2_147 = arith.constant 2 : index
    %c0_148 = arith.constant 0 : index
    %c0_149 = arith.constant 0 : index
    %308 = vector.load %arg13[%c2_147, %c0_148, %c0_149] : memref<5x1x128xbf16, #tpu.memory_space<vmem>>, vector<1x1x128xbf16>
    %309 = vector.shape_cast %308 : vector<1x1x128xbf16> to vector<1x128xbf16>
    %c2_150 = arith.constant 2 : index
    %c0_151 = arith.constant 0 : index
    %c0_152 = arith.constant 0 : index
    %310 = vector.load %arg8[%c2_150, %c0_151, %c0_152] : memref<5x128x128xbf16, #tpu.memory_space<vmem>>, vector<1x128x128xbf16>
    %311 = vector.shape_cast %310 : vector<1x128x128xbf16> to vector<128x128xbf16>
    %cst_153 = arith.constant dense<0.000000e+00> : vector<1x128xf32>
    %312 = tpu.matmul %309, %311, %cst_153 {dimension_numbers = #tpu.dot_dimension_numbers<[1], [0], [0], [1], [0, 0, 1, 1], [], []>} : vector<1x128xbf16>, vector<128x128xbf16>, vector<1x128xf32> -> vector<1x128xf32>
    %313 = arith.addf %307, %312 : vector<1x128xf32>
    %c3_154 = arith.constant 3 : index
    %c0_155 = arith.constant 0 : index
    %c0_156 = arith.constant 0 : index
    %314 = vector.load %arg13[%c3_154, %c0_155, %c0_156] : memref<5x1x128xbf16, #tpu.memory_space<vmem>>, vector<1x1x128xbf16>
    %315 = vector.shape_cast %314 : vector<1x1x128xbf16> to vector<1x128xbf16>
    %c3_157 = arith.constant 3 : index
    %c0_158 = arith.constant 0 : index
    %c0_159 = arith.constant 0 : index
    %316 = vector.load %arg8[%c3_157, %c0_158, %c0_159] : memref<5x128x128xbf16, #tpu.memory_space<vmem>>, vector<1x128x128xbf16>
    %317 = vector.shape_cast %316 : vector<1x128x128xbf16> to vector<128x128xbf16>
    %cst_160 = arith.constant dense<0.000000e+00> : vector<1x128xf32>
    %318 = tpu.matmul %315, %317, %cst_160 {dimension_numbers = #tpu.dot_dimension_numbers<[1], [0], [0], [1], [0, 0, 1, 1], [], []>} : vector<1x128xbf16>, vector<128x128xbf16>, vector<1x128xf32> -> vector<1x128xf32>
    %319 = arith.addf %313, %318 : vector<1x128xf32>
    %c4_161 = arith.constant 4 : index
    %c0_162 = arith.constant 0 : index
    %c0_163 = arith.constant 0 : index
    %320 = vector.load %arg13[%c4_161, %c0_162, %c0_163] : memref<5x1x128xbf16, #tpu.memory_space<vmem>>, vector<1x1x128xbf16>
    %321 = vector.shape_cast %320 : vector<1x1x128xbf16> to vector<1x128xbf16>
    %c4_164 = arith.constant 4 : index
    %c0_165 = arith.constant 0 : index
    %c0_166 = arith.constant 0 : index
    %322 = vector.load %arg8[%c4_164, %c0_165, %c0_166] : memref<5x128x128xbf16, #tpu.memory_space<vmem>>, vector<1x128x128xbf16>
    %323 = vector.shape_cast %322 : vector<1x128x128xbf16> to vector<128x128xbf16>
    %cst_167 = arith.constant dense<0.000000e+00> : vector<1x128xf32>
    %324 = tpu.matmul %321, %323, %cst_167 {dimension_numbers = #tpu.dot_dimension_numbers<[1], [0], [0], [1], [0, 0, 1, 1], [], []>} : vector<1x128xbf16>, vector<128x128xbf16>, vector<1x128xf32> -> vector<1x128xf32>
    %325 = arith.addf %319, %324 : vector<1x128xf32>
    %c0_168 = arith.constant 0 : index
    %c0_169 = arith.constant 0 : index
    %326 = vector.load %arg11[%c0_168, %c0_169] : memref<8x128xf32, #tpu.memory_space<vmem>>, vector<1x128xf32>
    %327 = arith.addf %325, %326 : vector<1x128xf32>
    %cst_170 = arith.constant 0.000000e+00 : f32
    %328 = vector.broadcast %cst_170 : f32 to vector<1x128xf32>
    %329 = arith.maximumf %327, %328 : vector<1x128xf32>
    %330 = arith.truncf %329 : vector<1x128xf32> to vector<1x128xbf16>
    %c0_171 = arith.constant 0 : index
    %c0_172 = arith.constant 0 : index
    %331 = vector.load %arg9[%c0_171, %c0_172] : memref<128x128xbf16, #tpu.memory_space<vmem>>, vector<128x128xbf16>
    %cst_173 = arith.constant dense<0.000000e+00> : vector<1x128xf32>
    %332 = tpu.matmul %330, %331, %cst_173 {dimension_numbers = #tpu.dot_dimension_numbers<[1], [0], [0], [1], [0, 0, 1, 1], [], []>} : vector<1x128xbf16>, vector<128x128xbf16>, vector<1x128xf32> -> vector<1x128xf32>
    %c1_174 = arith.constant 1 : index
    %c0_175 = arith.constant 0 : index
    %333 = vector.load %arg11[%c1_174, %c0_175] : memref<8x128xf32, #tpu.memory_space<vmem>>, vector<1x128xf32>
    %334 = arith.addf %332, %333 : vector<1x128xf32>
    %cst_176 = arith.constant 0.000000e+00 : f32
    %335 = vector.broadcast %cst_176 : f32 to vector<1x128xf32>
    %336 = arith.maximumf %334, %335 : vector<1x128xf32>
    %337 = arith.truncf %336 : vector<1x128xf32> to vector<1x128xbf16>
    %c0_177 = arith.constant 0 : index
    %c0_178 = arith.constant 0 : index
    %338 = vector.load %arg10[%c0_177, %c0_178] : memref<128x128xbf16, #tpu.memory_space<vmem>>, vector<128x128xbf16>
    %cst_179 = arith.constant dense<0.000000e+00> : vector<1x128xf32>
    %339 = tpu.matmul %337, %338, %cst_179 {dimension_numbers = #tpu.dot_dimension_numbers<[1], [0], [0], [1], [0, 0, 1, 1], [], []>} : vector<1x128xbf16>, vector<128x128xbf16>, vector<1x128xf32> -> vector<1x128xf32>
    %c2_180 = arith.constant 2 : index
    %c0_181 = arith.constant 0 : index
    %340 = vector.load %arg11[%c2_180, %c0_181] : memref<8x128xf32, #tpu.memory_space<vmem>>, vector<1x128xf32>
    %341 = arith.addf %339, %340 : vector<1x128xf32>
    %c0_182 = arith.constant 0 : index
    %c0_183 = arith.constant 0 : index
    %c0_184 = arith.constant 0 : index
    %342 = vector.load %arg12[%c0_182, %c0_183, %c0_184] : memref<1x1x128xf32, #tpu.memory_space<vmem>>, vector<1x1x128xf32>
    %343 = vector.shape_cast %342 : vector<1x1x128xf32> to vector<1x128xf32>
    %344 = vector.shape_cast %341 : vector<1x128xf32> to vector<1x1x128xf32>
    tpu.vector_store %arg12[%c0_182, %c0_183, %c0_184], %344 {strides = array<i32>} : memref<1x1x128xf32, #tpu.memory_space<vmem>>, vector<1x1x128xf32>,
    return
  }
  func.func @transform_0(%arg0: i32) -> (i32, i32, i32, i32) {
    %c0_i32 = arith.constant 0 : i32
    %c0_i32_0 = arith.constant 0 : i32
    %c0_i32_1 = arith.constant 0 : i32
    %c0_i32_2 = arith.constant 0 : i32
    return %arg0, %c0_i32, %c0_i32_0, %c0_i32_1 : i32, i32, i32, i32
  }
  func.func @transform_1(%arg0: i32) -> (i32, i32, i32) {
    %c0_i32 = arith.constant 0 : i32
    %c0_i32_0 = arith.constant 0 : i32
    %c0_i32_1 = arith.constant 0 : i32
    %c0_i32_2 = arith.constant 0 : i32
    return %c0_i32, %c0_i32_0, %c0_i32_1 : i32, i32, i32
  }
  func.func @transform_2(%arg0: i32) -> (i32, i32) {
    %c0_i32 = arith.constant 0 : i32
    %c0_i32_0 = arith.constant 0 : i32
    %c0_i32_1 = arith.constant 0 : i32
    return %c0_i32, %c0_i32_0 : i32, i32
  }
  func.func @transform_3(%arg0: i32) -> (i32, i32) {
    %c0_i32 = arith.constant 0 : i32
    %c0_i32_0 = arith.constant 0 : i32
    %c0_i32_1 = arith.constant 0 : i32
    return %c0_i32, %c0_i32_0 : i32, i32
  }
  func.func @transform_4(%arg0: i32) -> (i32, i32, i32) {
    %c0_i32 = arith.constant 0 : i32
    %c0_i32_0 = arith.constant 0 : i32
    %c0_i32_1 = arith.constant 0 : i32
    %c0_i32_2 = arith.constant 0 : i32
    return %c0_i32, %c0_i32_0, %c0_i32_1 : i32, i32, i32
  }
  func.func @transform_5(%arg0: i32) -> (i32, i32) {
    %c0_i32 = arith.constant 0 : i32
    %c0_i32_0 = arith.constant 0 : i32
    %c0_i32_1 = arith.constant 0 : i32
    return %c0_i32, %c0_i32_0 : i32, i32
  }
  func.func @transform_6(%arg0: i32) -> (i32, i32) {
    %c0_i32 = arith.constant 0 : i32
    %c0_i32_0 = arith.constant 0 : i32
    %c0_i32_1 = arith.constant 0 : i32
    return %c0_i32, %c0_i32_0 : i32, i32
  }
  func.func @transform_7(%arg0: i32) -> (i32, i32, i32) {
    %c0_i32 = arith.constant 0 : i32
    %c0_i32_0 = arith.constant 0 : i32
    %c0_i32_1 = arith.constant 0 : i32
    %c0_i32_2 = arith.constant 0 : i32
    return %c0_i32, %c0_i32_0, %c0_i32_1 : i32, i32, i32
  }
  func.func @transform_8(%arg0: i32) -> (i32, i32) {
    %c0_i32 = arith.constant 0 : i32
    %c0_i32_0 = arith.constant 0 : i32
    %c0_i32_1 = arith.constant 0 : i32
    return %c0_i32, %c0_i32_0 : i32, i32
  }
  func.func @transform_9(%arg0: i32) -> (i32, i32) {
    %c0_i32 = arith.constant 0 : i32
    %c0_i32_0 = arith.constant 0 : i32
    %c0_i32_1 = arith.constant 0 : i32
    return %c0_i32, %c0_i32_0 : i32, i32
  }
  func.func @transform_10(%arg0: i32) -> (i32, i32) {
    %c0_i32 = arith.constant 0 : i32
    %c0_i32_0 = arith.constant 0 : i32
    %c0_i32_1 = arith.constant 0 : i32
    return %c0_i32, %c0_i32_0 : i32, i32
  }
  func.func @transform_11(%arg0: i32) -> (i32, i32, i32) {
    %c0_i32 = arith.constant 0 : i32
    %c0_i32_0 = arith.constant 0 : i32
    %c0_i32_1 = arith.constant 0 : i32
    return %arg0, %c0_i32, %c0_i32_0 : i32, i32, i32
  }
}

</mosaic_0001>

<llo_original>
// kernel: lenet5_forward.1
$region0: #{lenet5_forward.1}
  #allocation0 [shape = 'u32[]', space=smem, size = 0x4, offset = 0x4, fixed_abs, tag = 'smem constant byte address 0x4 - core index']
  #allocation1 [shape = 'u32[144,128]{1,0:T(1,128)}', space=vmem, size = 0x12000, scoped, tag = 'internal scratch']
  #allocation2 [shape = 'bf16[5,1,128]{2,1,0:T(2,128)(2,1)}', space=vmem, size = 0xa00, scoped, tag = 'scratch operand']
  %s0 = inlined_call_operand.vmem [shape: bf16[2,4,8,128], index: 0, kind: input, shape index: {}]
  %s1 = inlined_call_operand.vmem [shape: bf16[5,128,256], index: 1, kind: input, shape index: {}]
  %s2 = inlined_call_operand.vmem [shape: f32[8,256], index: 2, kind: input, shape index: {}]
  %s3 = inlined_call_operand.vmem [shape: f32[256,256], index: 3, kind: input, shape index: {}]
  %s4 = inlined_call_operand.vmem [shape: bf16[5,128,256], index: 4, kind: input, shape index: {}]
  %s5 = inlined_call_operand.vmem [shape: f32[8,256], index: 5, kind: input, shape index: {}]
  %s6 = inlined_call_operand.hbm [shape: f32[256,256], index: 6, kind: input, shape index: {}]
  %s7 = inlined_call_operand.vmem [shape: bf16[5,128,128], index: 7, kind: input, shape index: {}]
  %s8 = inlined_call_operand.vmem [shape: bf16[128,128], index: 8, kind: input, shape index: {}]
  %s9 = inlined_call_operand.hbm [shape: bf16[128,128], index: 9, kind: input, shape index: {}]
  %s10 = inlined_call_operand.vmem [shape: f32[8,128], index: 10, kind: input, shape index: {}]
  %s11 = inlined_call_operand.hbm [shape: f32[2,1,128], index: 11, kind: output, shape index: {}]
  %s12 = sld [smem:[#allocation0]]
  $region85: #{lenet5_forward.1} parent=0
    _
  %s14 = ssub.s32 1, %s12
  %s15 = scalar_select 0, %s14, %s12
  $region1: #{lenet5_forward.1} parent=0
    #allocation3 [shape = 'u8[262144]{0}', space=vmem, size = 0x40000, scoped, tag = 'input window, operand 6, single buffered']
    #allocation4 [shape = 's32[2]{0}', space=sflag, size = 0x8, scoped, tag = 'scoped memory for lenet5_forward.1']
    #allocation5 [shape = 's32[2]{0}', space=sflag, size = 0x8, scoped, tag = 'scoped memory for lenet5_forward.1']
    #allocation6 [shape = 'u8[32768]{0}', space=vmem, size = 0x8000, scoped, tag = 'input window, operand 9, single buffered']
    #allocation7 [shape = 's32[1]{0}', space=sflag, size = 0x4, scoped, tag = 'scoped memory for lenet5_forward.1']
    #allocation8 [shape = 'u8[1024]{0}', space=vmem, size = 0x400, scoped, tag = 'output window, operand 0']
    %16 = vsyncpa [#allocation4], 0
    %17 = vsyncpa [#allocation7], 0
    %18 = vsyncpa [#allocation5], 0
    %s19 = scalar_lea.sflag [#allocation5], 1
    %20 = vsyncpa %s19, 0
    loop: start=0, step=1, limit=4
    $region2: #{lenet5_forward.1} parent=1 // loop_pre_header
      _
    $region3: #{lenet5_forward.1} parent=1 // loop_header
      %s22 = sphi 0, %s26
      %p23 = scmp.ge.s32.totalorder %s22, 4
      %s32 = sphi 0, %s34
      %s35 = sphi 0, %s32
      %s36 = sphi 0, %s35
      %s52 = sphi 0, %s36
      %s56 = sphi 0, %s56
      %s58 = sphi 0, %s56
      %s59 = sphi 0, %s58
      %s73 = sphi 0, %s59
      %s77 = sphi 0, %s77
      %s79 = sphi 0, %s77
      %s80 = sphi 0, %s79
      %s94 = sphi 0, %s80
      %s98 = sphi 0, %s98
      %s100 = sphi 0, %s98
      %s101 = sphi 0, %s100
      %s115 = sphi 0, %s101
      %s119 = sphi 0, %s119
      %s121 = sphi 0, %s119
      %s122 = sphi 0, %s121
      %s136 = sphi 0, %s122
      %s140 = sphi 0, %s140
      %s142 = sphi 0, %s140
      %s143 = sphi 0, %s142
      %s157 = sphi 0, %s143
      %s161 = sphi 0, %s161
      %s163 = sphi 0, %s161
      %s164 = sphi 0, %s163
      %s178 = sphi 0, %s164
      %s182 = sphi 0, %s182
      %s184 = sphi 0, %s182
      %s185 = sphi 0, %s184
      %s199 = sphi 0, %s185
      %s203 = sphi 0, %s203
      %s205 = sphi 0, %s203
      %s206 = sphi 0, %s205
      %s220 = sphi 0, %s206
      %s224 = sphi 0, %s224
      %s226 = sphi 0, %s224
      %s227 = sphi 0, %s226
      %s241 = sphi 0, %s227
      %s245 = sphi 0, %s245
      %s247 = sphi 0, %s245
      %s248 = sphi 0, %s247
      %s262 = sphi 0, %s248
      %s268 = sphi 0, %s270
      %s271 = sphi 0, %s268
      %s272 = sphi 0, %s271
      %s288 = sphi 0, %s272
    $region4: #{lenet5_forward.1} parent=1 // loop_header_branch
      %25 = sbr.rel (%p23) target = $region8
    $region5: #{lenet5_forward.1} parent=1 // loop_body
      %s27 = ssub.s32 %s22, 1
      %s28 = ssub.s32 %s22, 2
      %s29 = sadd.s32 %s22, 1
      %s30 = ssub.s32 %s22, %s29
      %p31 = scmp.eq.s32.totalorder %s30, 0
      %s33 = sadd.s32 %s32, 1
      %s34 = scalar_select %p31, %s32, %s33
      %p37 = pneg %p31
      %p38 = scmp.eq.s32.totalorder %s22, 1
      %p39 = por %p37, %p38
      %p40 = scmp.ne.s32.totalorder %s32, %s35
      %p41 = scmp.eq.s32.totalorder %s22, 0
      %p42 = por %p40, %p41
      %p43 = scmp.ne.s32.totalorder %s32, %s35
      %p44 = scmp.eq.s32.totalorder %s27, 1
      %p45 = por %p43, %p44
      %p46 = scmp.ne.s32.totalorder %s35, %s36
      %p47 = scmp.eq.s32.totalorder %s27, 0
      %p48 = por %p46, %p47
      %p49 = scmp.ne.s32.totalorder %s35, %s36
      %p50 = scmp.eq.s32.totalorder %s28, 1
      %p51 = por %p49, %p50
      %p53 = scmp.ne.s32.totalorder %s36, %s52
      %p54 = scmp.eq.s32.totalorder %s28, 0
      %p55 = por %p53, %p54
      %s57 = sadd.s32 %s56, 1
      %p60 = scmp.eq.s32.totalorder %s22, 1
      %p61 = scmp.ne.s32.totalorder %s56, %s58
      %p62 = scmp.eq.s32.totalorder %s22, 0
      %p63 = por %p61, %p62
      %p64 = scmp.ne.s32.totalorder %s56, %s58
      %p65 = scmp.eq.s32.totalorder %s27, 1
      %p66 = por %p64, %p65
      %p67 = scmp.ne.s32.totalorder %s58, %s59
      %p68 = scmp.eq.s32.totalorder %s27, 0
      %p69 = por %p67, %p68
      %p70 = scmp.ne.s32.totalorder %s58, %s59
      %p71 = scmp.eq.s32.totalorder %s28, 1
      %p72 = por %p70, %p71
      %p74 = scmp.ne.s32.totalorder %s59, %s73
      %p75 = scmp.eq.s32.totalorder %s28, 0
      %p76 = por %p74, %p75
      %s78 = sadd.s32 %s77, 1
      %p81 = scmp.eq.s32.totalorder %s22, 1
      %p82 = scmp.ne.s32.totalorder %s77, %s79
      %p83 = scmp.eq.s32.totalorder %s22, 0
      %p84 = por %p82, %p83
      %p85 = scmp.ne.s32.totalorder %s77, %s79
      %p86 = scmp.eq.s32.totalorder %s27, 1
      %p87 = por %p85, %p86
      %p88 = scmp.ne.s32.totalorder %s79, %s80
      %p89 = scmp.eq.s32.totalorder %s27, 0
      %p90 = por %p88, %p89
      %p91 = scmp.ne.s32.totalorder %s79, %s80
      %p92 = scmp.eq.s32.totalorder %s28, 1
      %p93 = por %p91, %p92
      %p95 = scmp.ne.s32.totalorder %s80, %s94
      %p96 = scmp.eq.s32.totalorder %s28, 0
      %p97 = por %p95, %p96
      %s99 = sadd.s32 %s98, 1
      %p102 = scmp.eq.s32.totalorder %s22, 1
      %p103 = scmp.ne.s32.totalorder %s98, %s100
      %p104 = scmp.eq.s32.totalorder %s22, 0
      %p105 = por %p103, %p104
      %p106 = scmp.ne.s32.totalorder %s98, %s100
      %p107 = scmp.eq.s32.totalorder %s27, 1
      %p108 = por %p106, %p107
      %p109 = scmp.ne.s32.totalorder %s100, %s101
      %p110 = scmp.eq.s32.totalorder %s27, 0
      %p111 = por %p109, %p110
      %p112 = scmp.ne.s32.totalorder %s100, %s101
      %p113 = scmp.eq.s32.totalorder %s28, 1
      %p114 = por %p112, %p113
      %p116 = scmp.ne.s32.totalorder %s101, %s115
      %p117 = scmp.eq.s32.totalorder %s28, 0
      %p118 = por %p116, %p117
      %s120 = sadd.s32 %s119, 1
      %p123 = scmp.eq.s32.totalorder %s22, 1
      %p124 = scmp.ne.s32.totalorder %s119, %s121
      %p125 = scmp.eq.s32.totalorder %s22, 0
      %p126 = por %p124, %p125
      %p127 = scmp.ne.s32.totalorder %s119, %s121
      %p128 = scmp.eq.s32.totalorder %s27, 1
      %p129 = por %p127, %p128
      %p130 = scmp.ne.s32.totalorder %s121, %s122
      %p131 = scmp.eq.s32.totalorder %s27, 0
      %p132 = por %p130, %p131
      %p133 = scmp.ne.s32.totalorder %s121, %s122
      %p134 = scmp.eq.s32.totalorder %s28, 1
      %p135 = por %p133, %p134
      %p137 = scmp.ne.s32.totalorder %s122, %s136
      %p138 = scmp.eq.s32.totalorder %s28, 0
      %p139 = por %p137, %p138
      %s141 = sadd.s32 %s140, 1
      %p144 = scmp.eq.s32.totalorder %s22, 1
      %p145 = scmp.ne.s32.totalorder %s140, %s142
      %p146 = scmp.eq.s32.totalorder %s22, 0
      %p147 = por %p145, %p146
      %p148 = scmp.ne.s32.totalorder %s140, %s142
      %p149 = scmp.eq.s32.totalorder %s27, 1
      %p150 = por %p148, %p149
      %p151 = scmp.ne.s32.totalorder %s142, %s143
      %p152 = scmp.eq.s32.totalorder %s27, 0
      %p153 = por %p151, %p152
      %p154 = scmp.ne.s32.totalorder %s142, %s143
      %p155 = scmp.eq.s32.totalorder %s28, 1
      %p156 = por %p154, %p155
      %p158 = scmp.ne.s32.totalorder %s143, %s157
      %p159 = scmp.eq.s32.totalorder %s28, 0
      %p160 = por %p158, %p159
      %s162 = sadd.s32 %s161, 1
      %p165 = scmp.eq.s32.totalorder %s22, 1
      %p166 = scmp.ne.s32.totalorder %s161, %s163
      %p167 = scmp.eq.s32.totalorder %s22, 0
      %p168 = por %p166, %p167
      %p169 = scmp.ne.s32.totalorder %s161, %s163
      %p170 = scmp.eq.s32.totalorder %s27, 1
      %p171 = por %p169, %p170
      %p172 = scmp.ne.s32.totalorder %s163, %s164
      %p173 = scmp.eq.s32.totalorder %s27, 0
      %p174 = por %p172, %p173
      %p175 = scmp.ne.s32.totalorder %s163, %s164
      %p176 = scmp.eq.s32.totalorder %s28, 1
      %p177 = por %p175, %p176
      %p179 = scmp.ne.s32.totalorder %s164, %s178
      %p180 = scmp.eq.s32.totalorder %s28, 0
      %p181 = por %p179, %p180
      %s183 = sadd.s32 %s182, 1
      %p186 = scmp.eq.s32.totalorder %s22, 1
      %p187 = scmp.ne.s32.totalorder %s182, %s184
      %p188 = scmp.eq.s32.totalorder %s22, 0
      %p189 = por %p187, %p188
      %p190 = scmp.ne.s32.totalorder %s182, %s184
      %p191 = scmp.eq.s32.totalorder %s27, 1
      %p192 = por %p190, %p191
      %p193 = scmp.ne.s32.totalorder %s184, %s185
      %p194 = scmp.eq.s32.totalorder %s27, 0
      %p195 = por %p193, %p194
      %p196 = scmp.ne.s32.totalorder %s184, %s185
      %p197 = scmp.eq.s32.totalorder %s28, 1
      %p198 = por %p196, %p197
      %p200 = scmp.ne.s32.totalorder %s185, %s199
      %p201 = scmp.eq.s32.totalorder %s28, 0
      %p202 = por %p200, %p201
      %s204 = sadd.s32 %s203, 1
      %p207 = scmp.eq.s32.totalorder %s22, 1
      %p208 = scmp.ne.s32.totalorder %s203, %s205
      %p209 = scmp.eq.s32.totalorder %s22, 0
      %p210 = por %p208, %p209
      %p211 = scmp.ne.s32.totalorder %s203, %s205
      %p212 = scmp.eq.s32.totalorder %s27, 1
      %p213 = por %p211, %p212
      %p214 = scmp.ne.s32.totalorder %s205, %s206
      %p215 = scmp.eq.s32.totalorder %s27, 0
      %p216 = por %p214, %p215
      %p217 = scmp.ne.s32.totalorder %s205, %s206
      %p218 = scmp.eq.s32.totalorder %s28, 1
      %p219 = por %p217, %p218
      %p221 = scmp.ne.s32.totalorder %s206, %s220
      %p222 = scmp.eq.s32.totalorder %s28, 0
      %p223 = por %p221, %p222
      %s225 = sadd.s32 %s224, 1
      %p228 = scmp.eq.s32.totalorder %s22, 1
      %p229 = scmp.ne.s32.totalorder %s224, %s226
      %p230 = scmp.eq.s32.totalorder %s22, 0
      %p231 = por %p229, %p230
      %p232 = scmp.ne.s32.totalorder %s224, %s226
      %p233 = scmp.eq.s32.totalorder %s27, 1
      %p234 = por %p232, %p233
      %p235 = scmp.ne.s32.totalorder %s226, %s227
      %p236 = scmp.eq.s32.totalorder %s27, 0
      %p237 = por %p235, %p236
      %p238 = scmp.ne.s32.totalorder %s226, %s227
      %p239 = scmp.eq.s32.totalorder %s28, 1
      %p240 = por %p238, %p239
      %p242 = scmp.ne.s32.totalorder %s227, %s241
      %p243 = scmp.eq.s32.totalorder %s28, 0
      %p244 = por %p242, %p243
      %s246 = sadd.s32 %s245, 1
      %p249 = scmp.eq.s32.totalorder %s22, 1
      %p250 = scmp.ne.s32.totalorder %s245, %s247
      %p251 = scmp.eq.s32.totalorder %s22, 0
      %p252 = por %p250, %p251
      %p253 = scmp.ne.s32.totalorder %s245, %s247
      %p254 = scmp.eq.s32.totalorder %s27, 1
      %p255 = por %p253, %p254
      %p256 = scmp.ne.s32.totalorder %s247, %s248
      %p257 = scmp.eq.s32.totalorder %s27, 0
      %p258 = por %p256, %p257
      %p259 = scmp.ne.s32.totalorder %s247, %s248
      %p260 = scmp.eq.s32.totalorder %s28, 1
      %p261 = por %p259, %p260
      %p263 = scmp.ne.s32.totalorder %s248, %s262
      %p264 = scmp.eq.s32.totalorder %s28, 0
      %p265 = por %p263, %p264
      %s266 = ssub.s32 %s22, %s29
      %p267 = scmp.eq.s32.totalorder %s266, 0
      %s269 = sadd.s32 %s268, 1
      %s270 = scalar_select %p267, %s268, %s269
      %p273 = pneg %p267
      %p274 = scmp.eq.s32.totalorder %s22, 1
      %p275 = por %p273, %p274
      %p276 = scmp.ne.s32.totalorder %s268, %s271
      %p277 = scmp.eq.s32.totalorder %s22, 0
      %p278 = por %p276, %p277
      %p279 = scmp.ne.s32.totalorder %s268, %s271
      %p280 = scmp.eq.s32.totalorder %s27, 1
      %p281 = por %p279, %p280
      %p282 = scmp.ne.s32.totalorder %s271, %s272
      %p283 = scmp.eq.s32.totalorder %s27, 0
      %p284 = por %p282, %p283
      %p285 = scmp.ne.s32.totalorder %s271, %s272
      %p286 = scmp.eq.s32.totalorder %s28, 1
      %p287 = por %p285, %p286
      %p289 = scmp.ne.s32.totalorder %s272, %s288
      %p290 = scmp.eq.s32.totalorder %s28, 0
      %p291 = por %p289, %p290
      %p292 = scmp.le.s32.totalorder 1, %s22
      %p293 = scmp.lt.s32.totalorder %s22, 3
      %p294 = pnand %p292, %p293
      %p295 = pneg %p294
      // Predicated region
      $region9: #{lenet5_forward.1} parent=5 // pred_check
        _
      $region10: #{lenet5_forward.1} parent=5 // pred_check_branch
        %297 = sbr.rel (%p294) target = $region12
      $region11: #{lenet5_forward.1} parent=5 // pred_region
        %s298 = ssub.s32 %s22, 1
        // Predicated region
        $region13: #{lenet5_forward.1} parent=11 // pred_check
          %p299 = pneg %p69
        $region14: #{lenet5_forward.1} parent=11 // pred_check_branch
          %301 = sbr.rel (%p299) target = $region16
        $region15: #{lenet5_forward.1} parent=11 // pred_region
          _
        $region16: #{lenet5_forward.1} parent=11 // pred_fallthru
          _
        // Predicated region
        $region17: #{lenet5_forward.1} parent=11 // pred_check
          %p302 = pneg %p90
        $region18: #{lenet5_forward.1} parent=11 // pred_check_branch
          %304 = sbr.rel (%p302) target = $region20
        $region19: #{lenet5_forward.1} parent=11 // pred_region
          _
        $region20: #{lenet5_forward.1} parent=11 // pred_fallthru
          _
        // Predicated region
        $region21: #{lenet5_forward.1} parent=11 // pred_check
          %p305 = pneg %p111
        $region22: #{lenet5_forward.1} parent=11 // pred_check_branch
          %307 = sbr.rel (%p305) target = $region24
        $region23: #{lenet5_forward.1} parent=11 // pred_region
          _
        $region24: #{lenet5_forward.1} parent=11 // pred_fallthru
          _
        // Predicated region
        $region25: #{lenet5_forward.1} parent=11 // pred_check
          %p308 = pneg %p132
        $region26: #{lenet5_forward.1} parent=11 // pred_check_branch
          %310 = sbr.rel (%p308) target = $region28
        $region27: #{lenet5_forward.1} parent=11 // pred_region
          _
        $region28: #{lenet5_forward.1} parent=11 // pred_fallthru
          _
        // Predicated region
        $region29: #{lenet5_forward.1} parent=11 // pred_check
          %p311 = pneg %p153
        $region30: #{lenet5_forward.1} parent=11 // pred_check_branch
          %313 = sbr.rel (%p311) target = $region32
        $region31: #{lenet5_forward.1} parent=11 // pred_region
          _
        $region32: #{lenet5_forward.1} parent=11 // pred_fallthru
          _
        // Predicated region
        $region33: #{lenet5_forward.1} parent=11 // pred_check
          %p314 = pneg %p174
        $region34: #{lenet5_forward.1} parent=11 // pred_check_branch
          %316 = sbr.rel (%p314) target = $region36
        $region35: #{lenet5_forward.1} parent=11 // pred_region
          %s318 = ssub.s32 8192, 8192
          %319 = vsyncadd [#allocation4], %s318
          %s320 = sshll.u32 [#allocation3], 4
          %s321 = int_to_ptr.vmem [resolvable:$true] %s320
          %326 = dma.hbm_to_vmem [thread:$0]  %s6, 8192, %s321, [#allocation4], 256, 256, 16
        $region36: #{lenet5_forward.1} parent=11 // pred_fallthru
          _
        // Predicated region
        $region37: #{lenet5_forward.1} parent=11 // pred_check
          %p327 = pneg %p195
        $region38: #{lenet5_forward.1} parent=11 // pred_check_branch
          %329 = sbr.rel (%p327) target = $region40
        $region39: #{lenet5_forward.1} parent=11 // pred_region
          _
        $region40: #{lenet5_forward.1} parent=11 // pred_fallthru
          _
        // Predicated region
        $region41: #{lenet5_forward.1} parent=11 // pred_check
          %p330 = pneg %p216
        $region42: #{lenet5_forward.1} parent=11 // pred_check_branch
          %332 = sbr.rel (%p330) target = $region44
        $region43: #{lenet5_forward.1} parent=11 // pred_region
          _
        $region44: #{lenet5_forward.1} parent=11 // pred_fallthru
          _
        // Predicated region
        $region45: #{lenet5_forward.1} parent=11 // pred_check
          %p333 = pneg %p237
        $region46: #{lenet5_forward.1} parent=11 // pred_check_branch
          %335 = sbr.rel (%p333) target = $region48
        $region47: #{lenet5_forward.1} parent=11 // pred_region
          %s337 = ssub.s32 1024, 1024
          %338 = vsyncadd [#allocation7], %s337
          %s339 = sshll.u32 [#allocation6], 4
          %s340 = int_to_ptr.vmem [resolvable:$true] %s339
          %345 = dma.hbm_to_vmem [thread:$0]  %s9, 1024, %s340, [#allocation7], 64, 64, 4
        $region48: #{lenet5_forward.1} parent=11 // pred_fallthru
          _
        // Predicated region
        $region49: #{lenet5_forward.1} parent=11 // pred_check
          %p346 = pneg %p258
        $region50: #{lenet5_forward.1} parent=11 // pred_check_branch
          %348 = sbr.rel (%p346) target = $region52
        $region51: #{lenet5_forward.1} parent=11 // pred_region
          _
        $region52: #{lenet5_forward.1} parent=11 // pred_fallthru
          _
      $region12: #{lenet5_forward.1} parent=5 // pred_fallthru
        _
      %p349 = scmp.lt.s32.totalorder %s22, 2
      // Predicated region
      $region53: #{lenet5_forward.1} parent=5 // pred_check
        %p350 = pneg %p349
      $region54: #{lenet5_forward.1} parent=5 // pred_check_branch
        %352 = sbr.rel (%p350) target = $region56
      $region55: #{lenet5_forward.1} parent=5 // pred_region
        // Predicated region
        $region57: #{lenet5_forward.1} parent=55 // pred_check
          %p353 = pneg %p42
        $region58: #{lenet5_forward.1} parent=55 // pred_check_branch
          %355 = sbr.rel (%p353) target = $region60
        $region59: #{lenet5_forward.1} parent=55 // pred_region
          %p356 = scmp.lt.s32.totalorder %s22, 1
          %s357 = scalar_select %p356, %s22, 1
          %s358 = smul.addr %s357, 4
          %s359 = smul.addr %s358, 4
          %s360 = scalar_lea.vmem %s0, %s359
        $region60: #{lenet5_forward.1} parent=55 // pred_fallthru
          _
      $region56: #{lenet5_forward.1} parent=5 // pred_fallthru
        _
      %p361 = scmp.le.s32.totalorder 1, %s22
      %p362 = scmp.lt.s32.totalorder %s22, 3
      %p363 = pnand %p361, %p362
      %p364 = pneg %p363
      // Predicated region
      $region61: #{lenet5_forward.1} parent=5 // pred_check
        _
      $region62: #{lenet5_forward.1} parent=5 // pred_check_branch
        %366 = sbr.rel (%p363) target = $region64
      $region63: #{lenet5_forward.1} parent=5 // pred_region
        %s367 = ssub.s32 %s22, 1
        // Predicated region
        $region65: #{lenet5_forward.1} parent=63 // pred_check
          %p368 = pneg %p174
        $region66: #{lenet5_forward.1} parent=63 // pred_check_branch
          %370 = sbr.rel (%p368) target = $region68
        $region67: #{lenet5_forward.1} parent=63 // pred_region
          %371 = dma.done [#allocation4], 8192
        $region68: #{lenet5_forward.1} parent=63 // pred_fallthru
          _
        // Predicated region
        $region69: #{lenet5_forward.1} parent=63 // pred_check
          %p372 = pneg %p237
        $region70: #{lenet5_forward.1} parent=63 // pred_check_branch
          %374 = sbr.rel (%p372) target = $region72
        $region71: #{lenet5_forward.1} parent=63 // pred_region
          %375 = dma.done [#allocation7], 1024
        $region72: #{lenet5_forward.1} parent=63 // pred_fallthru
          _
        %p376 = scmp.lt.s32.totalorder %s27, 1
        %s377 = scalar_select %p376, %s27, 1
        %s378 = smul.addr %s377, 4
        %s379 = smul.addr %s378, 4
        %s380 = scalar_lea.vmem %s0, %s379
        %p381 = pneg %p48
        %p382 = pneg %p45
        %p383 = pneg %p69
        %p384 = pneg %p66
        %p385 = pneg %p90
        %p386 = pneg %p87
        %p387 = pneg %p111
        %p388 = pneg %p108
        %p389 = pneg %p132
        %p390 = pneg %p129
        %p391 = pneg %p153
        %p392 = pneg %p150
        %p393 = pneg %p174
        %p394 = pneg %p171
        %p395 = pneg %p195
        %p396 = pneg %p192
        %p397 = pneg %p216
        %p398 = pneg %p213
        %p399 = pneg %p237
        %p400 = pneg %p234
        %p401 = pneg %p258
        %p402 = pneg %p255
        %p403 = pneg %p284
        %p404 = pneg %p281
        %s405 = sand.u32 %s271, 1
        %s406 = scalar_lea.sflag [#allocation5], %s405
        %s407 = sand.u32 %s271, 1
        %s408 = scalar_lea.vmem [#allocation8], %s407
        %p409 = scmp.lt.s32.totalorder %s27, 1
        %s410 = scalar_select %p409, %s27, 1
        %s411 = smul.addr %s410, 4
        %s412 = smul.addr %s411, 4
        %s413 = scalar_lea.vmem %s0, %s412
        %v415 = vld [vmem:[%s2] ss:$8 sm:$0x3]
        %s416 = scalar_lea.vmem %s2, 1
        %v417 = vld [vmem:[%s416] ss:$8 sm:$0x3]
        %s418 = scalar_lea.vmem %s2, 2
        %v419 = vld [vmem:[%s418] ss:$8 sm:$0x3]
        %v420 = vld [vmem:[%s5] ss:$8 sm:$0x3]
        %s421 = scalar_lea.vmem %s5, 1
        %v422 = vld [vmem:[%s421] ss:$8 sm:$0x3]
        %s423 = scalar_lea.vmem %s5, 2
        %v424 = vld [vmem:[%s423] ss:$8 sm:$0x3]
        %v425 = vld [vmem:[%s413] sm:$0xf]
        %s426 = scalar_lea.vmem %s413, 4
        %v427 = vld [vmem:[%s426] sm:$0xf]
        %s428 = scalar_lea.vmem %s413, 8
        %v429 = vld [vmem:[%s428] sm:$0xf]
        %s430 = scalar_lea.vmem %s413, 12
        %v431 = vld [vmem:[%s430] sm:$0xf]
        %v432 = vld [vmem:[%s1] sm:$0xff]
        %v433 = vld [vmem:[%s1 + $0x8] sm:$0xff]
        %v434 = vld [vmem:[%s1 + $0x10] sm:$0xff]
        %v435 = vld [vmem:[%s1 + $0x18] sm:$0xff]
        %v436 = vld [vmem:[%s1 + $0x20] sm:$0xff]
        %v437 = vld [vmem:[%s1 + $0x28] sm:$0xff]
        %v438 = vld [vmem:[%s1 + $0x30] sm:$0xff]
        %v439 = vld [vmem:[%s1 + $0x38] sm:$0xff]
        %v440 = vld [vmem:[%s1 + $0x40] sm:$0xff]
        %v441 = vld [vmem:[%s1 + $0x48] sm:$0xff]
        %v442 = vld [vmem:[%s1 + $0x50] sm:$0xff]
        %v443 = vld [vmem:[%s1 + $0x58] sm:$0xff]
        %v444 = vld [vmem:[%s1 + $0x60] sm:$0xff]
        %v445 = vld [vmem:[%s1 + $0x68] sm:$0xff]
        %v446 = vld [vmem:[%s1 + $0x70] sm:$0xff]
        %v447 = vld [vmem:[%s1 + $0x78] sm:$0xff]
        %s448 = scalar_lea.vmem %s1, 128
        %v449 = vld [vmem:[%s448] sm:$0xff]
        %v450 = vld [vmem:[%s448 + $0x8] sm:$0xff]
        %v451 = vld [vmem:[%s448 + $0x10] sm:$0xff]
        %v452 = vld [vmem:[%s448 + $0x18] sm:$0xff]
        %v453 = vld [vmem:[%s448 + $0x20] sm:$0xff]
        %v454 = vld [vmem:[%s448 + $0x28] sm:$0xff]
        %v455 = vld [vmem:[%s448 + $0x30] sm:$0xff]
        %v456 = vld [vmem:[%s448 + $0x38] sm:$0xff]
        %v457 = vld [vmem:[%s448 + $0x40] sm:$0xff]
        %v458 = vld [vmem:[%s448 + $0x48] sm:$0xff]
        %v459 = vld [vmem:[%s448 + $0x50] sm:$0xff]
        %v460 = vld [vmem:[%s448 + $0x58] sm:$0xff]
        %v461 = vld [vmem:[%s448 + $0x60] sm:$0xff]
        %v462 = vld [vmem:[%s448 + $0x68] sm:$0xff]
        %v463 = vld [vmem:[%s448 + $0x70] sm:$0xff]
        %v464 = vld [vmem:[%s448 + $0x78] sm:$0xff]
        %v481 = vunpack.c.l.b16 %v449
        %v482 = vunpack.c.h.b16 %v449
        %v483 = vunpack.c.l.b16 %v450
        %v484 = vunpack.c.h.b16 %v450
        %v485 = vunpack.c.l.b16 %v451
        %v486 = vunpack.c.h.b16 %v451
        %v487 = vunpack.c.l.b16 %v452
        %v488 = vunpack.c.h.b16 %v452
        %v489 = vunpack.c.l.b16 %v453
        %v490 = vunpack.c.h.b16 %v453
        %v491 = vunpack.c.l.b16 %v454
        %v492 = vunpack.c.h.b16 %v454
        %v493 = vunpack.c.l.b16 %v455
        %v494 = vunpack.c.h.b16 %v455
        %v495 = vunpack.c.l.b16 %v456
        %v496 = vunpack.c.h.b16 %v456
        %v497 = vunpack.c.l.b16 %v457
        %v498 = vunpack.c.h.b16 %v457
        %v499 = vunpack.c.l.b16 %v458
        %v500 = vunpack.c.h.b16 %v458
        %v501 = vunpack.c.l.b16 %v459
        %v502 = vunpack.c.h.b16 %v459
        %v503 = vunpack.c.l.b16 %v460
        %v504 = vunpack.c.h.b16 %v460
        %v505 = vunpack.c.l.b16 %v461
        %v506 = vunpack.c.h.b16 %v461
        %v507 = vunpack.c.l.b16 %v462
        %v508 = vunpack.c.h.b16 %v462
        %v509 = vunpack.c.l.b16 %v463
        %v510 = vunpack.c.h.b16 %v463
        %v511 = vunpack.c.l.b16 %v464
        %v512 = vunpack.c.h.b16 %v464
        %v513 = vpack.c.b16 %v483, %v481
        %v514 = vpack.c.b16 %v484, %v482
        %v515 = vpack.c.b16 %v487, %v485
        %v516 = vpack.c.b16 %v488, %v486
        %v517 = vpack.c.b16 %v491, %v489
        %v518 = vpack.c.b16 %v492, %v490
        %v519 = vpack.c.b16 %v495, %v493
        %v520 = vpack.c.b16 %v496, %v494
        %v521 = vpack.c.b16 %v499, %v497
        %v522 = vpack.c.b16 %v500, %v498
        %v523 = vpack.c.b16 %v503, %v501
        %v524 = vpack.c.b16 %v504, %v502
        %v525 = vpack.c.b16 %v507, %v505
        %v526 = vpack.c.b16 %v508, %v506
        %v527 = vpack.c.b16 %v511, %v509
        %v528 = vpack.c.b16 %v512, %v510
        %545 = vmatprep.subr.bf16.mxu0 %v514
        %546 = vmatpush1.bf16.msra.mxu0 %v513
        %547 = vmatprep.subr.bf16.mxu0 %v516
        %548 = vmatpush1.bf16.msra.mxu0 %v515
        %549 = vmatprep.subr.bf16.mxu0 %v518
        %550 = vmatpush1.bf16.msra.mxu0 %v517
        %551 = vmatprep.subr.bf16.mxu0 %v520
        %552 = vmatpush1.bf16.msra.mxu0 %v519
        %553 = vmatprep.subr.bf16.mxu0 %v522
        %554 = vmatpush1.bf16.msra.mxu0 %v521
        %555 = vmatprep.subr.bf16.mxu0 %v524
        %556 = vmatpush1.bf16.msra.mxu0 %v523
        %557 = vmatprep.subr.bf16.mxu0 %v526
        %558 = vmatpush1.bf16.msra.mxu0 %v525
        %559 = vmatprep.subr.bf16.mxu0 %v528
        %560 = vmatpush1.bf16.msra.mxu0 %v527
        %561 = vmatprep.subr.bf16.mxu0 0
        %562 = vmatpush1.bf16.msra.mxu0 0
        %563 = vmatprep.subr.bf16.mxu0 0
        %564 = vmatpush1.bf16.msra.mxu0 0
        %565 = vmatprep.subr.bf16.mxu0 0
        %566 = vmatpush1.bf16.msra.mxu0 0
        %567 = vmatprep.subr.bf16.mxu0 0
        %568 = vmatpush1.bf16.msra.mxu0 0
        %569 = vmatprep.subr.bf16.mxu0 0
        %570 = vmatpush1.bf16.msra.mxu0 0
        %571 = vmatprep.subr.bf16.mxu0 0
        %572 = vmatpush1.bf16.msra.mxu0 0
        %573 = vmatprep.subr.bf16.mxu0 0
        %574 = vmatpush1.bf16.msra.mxu0 0
        %575 = vmatprep.subr.bf16.mxu0 0
        %576 = vmatpush1.bf16.msra.mxu0 0
        %577 = vmatprep.mubr.bf16.mxu0 0
        %578 = vmatmul.mubr.bf16.gmra.mrb[0].mxu0 %v427
        %v579 = vpop.f32.mrb[0].mxu0
        %v580 = vadd.f32 0.0, %v579
        %v581 = vpop.f32.mrb[0].mxu0
        %v582 = vadd.f32 0.0, %v581
        %v583 = vpop.f32.mrb[0].mxu0
        %v584 = vpop.f32.mrb[0].mxu0
        %585 = vdwg.mxu0
        %v602 = vunpack.c.l.b16 %v432
        %v603 = vunpack.c.h.b16 %v432
        %v604 = vunpack.c.l.b16 %v433
        %v605 = vunpack.c.h.b16 %v433
        %v606 = vunpack.c.l.b16 %v434
        %v607 = vunpack.c.h.b16 %v434
        %v608 = vunpack.c.l.b16 %v435
        %v609 = vunpack.c.h.b16 %v435
        %v610 = vunpack.c.l.b16 %v436
        %v611 = vunpack.c.h.b16 %v436
        %v612 = vunpack.c.l.b16 %v437
        %v613 = vunpack.c.h.b16 %v437
        %v614 = vunpack.c.l.b16 %v438
        %v615 = vunpack.c.h.b16 %v438
        %v616 = vunpack.c.l.b16 %v439
        %v617 = vunpack.c.h.b16 %v439
        %v618 = vunpack.c.l.b16 %v440
        %v619 = vunpack.c.h.b16 %v440
        %v620 = vunpack.c.l.b16 %v441
        %v621 = vunpack.c.h.b16 %v441
        %v622 = vunpack.c.l.b16 %v442
        %v623 = vunpack.c.h.b16 %v442
        %v624 = vunpack.c.l.b16 %v443
        %v625 = vunpack.c.h.b16 %v443
        %v626 = vunpack.c.l.b16 %v444
        %v627 = vunpack.c.h.b16 %v444
        %v628 = vunpack.c.l.b16 %v445
        %v629 = vunpack.c.h.b16 %v445
        %v630 = vunpack.c.l.b16 %v446
        %v631 = vunpack.c.h.b16 %v446
        %v632 = vunpack.c.l.b16 %v447
        %v633 = vunpack.c.h.b16 %v447
        %v634 = vpack.c.b16 %v604, %v602
        %v635 = vpack.c.b16 %v605, %v603
        %v636 = vpack.c.b16 %v608, %v606
        %v637 = vpack.c.b16 %v609, %v607
        %v638 = vpack.c.b16 %v612, %v610
        %v639 = vpack.c.b16 %v613, %v611
        %v640 = vpack.c.b16 %v616, %v614
        %v641 = vpack.c.b16 %v617, %v615
        %v642 = vpack.c.b16 %v620, %v618
        %v643 = vpack.c.b16 %v621, %v619
        %v644 = vpack.c.b16 %v624, %v622
        %v645 = vpack.c.b16 %v625, %v623
        %v646 = vpack.c.b16 %v628, %v626
        %v647 = vpack.c.b16 %v629, %v627
        %v648 = vpack.c.b16 %v632, %v630
        %v649 = vpack.c.b16 %v633, %v631
        %666 = vmatprep.subr.bf16.mxu0 %v635
        %667 = vmatpush1.bf16.msra.mxu0 %v634
        %668 = vmatprep.subr.bf16.mxu0 %v637
        %669 = vmatpush1.bf16.msra.mxu0 %v636
        %670 = vmatprep.subr.bf16.mxu0 %v639
        %671 = vmatpush1.bf16.msra.mxu0 %v638
        %672 = vmatprep.subr.bf16.mxu0 %v641
        %673 = vmatpush1.bf16.msra.mxu0 %v640
        %674 = vmatprep.subr.bf16.mxu0 %v643
        %675 = vmatpush1.bf16.msra.mxu0 %v642
        %676 = vmatprep.subr.bf16.mxu0 %v645
        %677 = vmatpush1.bf16.msra.mxu0 %v644
        %678 = vmatprep.subr.bf16.mxu0 %v647
        %679 = vmatpush1.bf16.msra.mxu0 %v646
        %680 = vmatprep.subr.bf16.mxu0 %v649
        %681 = vmatpush1.bf16.msra.mxu0 %v648
        %682 = vmatprep.subr.bf16.mxu0 0
        %683 = vmatpush1.bf16.msra.mxu0 0
        %684 = vmatprep.subr.bf16.mxu0 0
        %685 = vmatpush1.bf16.msra.mxu0 0
        %686 = vmatprep.subr.bf16.mxu0 0
        %687 = vmatpush1.bf16.msra.mxu0 0
        %688 = vmatprep.subr.bf16.mxu0 0
        %689 = vmatpush1.bf16.msra.mxu0 0
        %690 = vmatprep.subr.bf16.mxu0 0
        %691 = vmatpush1.bf16.msra.mxu0 0
        %692 = vmatprep.subr.bf16.mxu0 0
        %693 = vmatpush1.bf16.msra.mxu0 0
        %694 = vmatprep.subr.bf16.mxu0 0
        %695 = vmatpush1.bf16.msra.mxu0 0
        %696 = vmatprep.subr.bf16.mxu0 0
        %697 = vmatpush1.bf16.msra.mxu0 0
        %698 = vmatprep.mubr.bf16.mxu0 0
        %699 = vmatmul.mubr.bf16.gmra.mrb[0].mxu0 %v425
        %v700 = vpop.f32.mrb[0].mxu0
        %v701 = vadd.f32 %v580, %v700
        %v702 = vpop.f32.mrb[0].mxu0
        %v703 = vadd.f32 %v582, %v702
        %v704 = vpop.f32.mrb[0].mxu0
        %v705 = vpop.f32.mrb[0].mxu0
        %706 = vdwg.mxu0
        %707 = vmatprep.subr.bf16.mxu0 %v514
        %708 = vmatpush1.bf16.msra.mxu0 %v513
        %709 = vmatprep.subr.bf16.mxu0 %v516
        %710 = vmatpush1.bf16.msra.mxu0 %v515
        %711 = vmatprep.subr.bf16.mxu0 %v518
        %712 = vmatpush1.bf16.msra.mxu0 %v517
        %713 = vmatprep.subr.bf16.mxu0 %v520
        %714 = vmatpush1.bf16.msra.mxu0 %v519
        %715 = vmatprep.subr.bf16.mxu0 %v522
        %716 = vmatpush1.bf16.msra.mxu0 %v521
        %717 = vmatprep.subr.bf16.mxu0 %v524
        %718 = vmatpush1.bf16.msra.mxu0 %v523
        %719 = vmatprep.subr.bf16.mxu0 %v526
        %720 = vmatpush1.bf16.msra.mxu0 %v525
        %721 = vmatprep.subr.bf16.mxu0 %v528
        %722 = vmatpush1.bf16.msra.mxu0 %v527
        %723 = vmatprep.subr.bf16.mxu0 0
        %724 = vmatpush1.bf16.msra.mxu0 0
        %725 = vmatprep.subr.bf16.mxu0 0
        %726 = vmatpush1.bf16.msra.mxu0 0
        %727 = vmatprep.subr.bf16.mxu0 0
        %728 = vmatpush1.bf16.msra.mxu0 0
        %729 = vmatprep.subr.bf16.mxu0 0
        %730 = vmatpush1.bf16.msra.mxu0 0
        %731 = vmatprep.subr.bf16.mxu0 0
        %732 = vmatpush1.bf16.msra.mxu0 0
        %733 = vmatprep.subr.bf16.mxu0 0
        %734 = vmatpush1.bf16.msra.mxu0 0
        %735 = vmatprep.subr.bf16.mxu0 0
        %736 = vmatpush1.bf16.msra.mxu0 0
        %737 = vmatprep.subr.bf16.mxu0 0
        %738 = vmatpush1.bf16.msra.mxu0 0
        %739 = vmatprep.mubr.bf16.mxu0 0
        %740 = vmatmul.mubr.bf16.gmra.mrb[0].mxu0 %v429
        %v741 = vpop.f32.mrb[0].mxu0
        %v742 = vadd.f32 0.0, %v741
        %v743 = vpop.f32.mrb[0].mxu0
        %v744 = vadd.f32 0.0, %v743
        %v745 = vpop.f32.mrb[0].mxu0
        %v746 = vpop.f32.mrb[0].mxu0
        %747 = vdwg.mxu0
        %748 = vmatprep.subr.bf16.mxu0 %v635
        %749 = vmatpush1.bf16.msra.mxu0 %v634
        %750 = vmatprep.subr.bf16.mxu0 %v637
        %751 = vmatpush1.bf16.msra.mxu0 %v636
        %752 = vmatprep.subr.bf16.mxu0 %v639
        %753 = vmatpush1.bf16.msra.mxu0 %v638
        %754 = vmatprep.subr.bf16.mxu0 %v641
        %755 = vmatpush1.bf16.msra.mxu0 %v640
        %756 = vmatprep.subr.bf16.mxu0 %v643
        %757 = vmatpush1.bf16.msra.mxu0 %v642
        %758 = vmatprep.subr.bf16.mxu0 %v645
        %759 = vmatpush1.bf16.msra.mxu0 %v644
        %760 = vmatprep.subr.bf16.mxu0 %v647
        %761 = vmatpush1.bf16.msra.mxu0 %v646
        %762 = vmatprep.subr.bf16.mxu0 %v649
        %763 = vmatpush1.bf16.msra.mxu0 %v648
        %764 = vmatprep.subr.bf16.mxu0 0
        %765 = vmatpush1.bf16.msra.mxu0 0
        %766 = vmatprep.subr.bf16.mxu0 0
        %767 = vmatpush1.bf16.msra.mxu0 0
        %768 = vmatprep.subr.bf16.mxu0 0
        %769 = vmatpush1.bf16.msra.mxu0 0
        %770 = vmatprep.subr.bf16.mxu0 0
        %771 = vmatpush1.bf16.msra.mxu0 0
        %772 = vmatprep.subr.bf16.mxu0 0
        %773 = vmatpush1.bf16.msra.mxu0 0
        %774 = vmatprep.subr.bf16.mxu0 0
        %775 = vmatpush1.bf16.msra.mxu0 0
        %776 = vmatprep.subr.bf16.mxu0 0
        %777 = vmatpush1.bf16.msra.mxu0 0
        %778 = vmatprep.subr.bf16.mxu0 0
        %779 = vmatpush1.bf16.msra.mxu0 0
        %780 = vmatprep.mubr.bf16.mxu0 0
        %781 = vmatmul.mubr.bf16.gmra.mrb[0].mxu0 %v427
        %v782 = vpop.f32.mrb[0].mxu0
        %v783 = vadd.f32 %v742, %v782
        %v784 = vpop.f32.mrb[0].mxu0
        %v785 = vadd.f32 %v744, %v784
        %v786 = vpop.f32.mrb[0].mxu0
        %v787 = vpop.f32.mrb[0].mxu0
        %788 = vdwg.mxu0
        %789 = vmatprep.subr.bf16.mxu0 %v514
        %790 = vmatpush1.bf16.msra.mxu0 %v513
        %791 = vmatprep.subr.bf16.mxu0 %v516
        %792 = vmatpush1.bf16.msra.mxu0 %v515
        %793 = vmatprep.subr.bf16.mxu0 %v518
        %794 = vmatpush1.bf16.msra.mxu0 %v517
        %795 = vmatprep.subr.bf16.mxu0 %v520
        %796 = vmatpush1.bf16.msra.mxu0 %v519
        %797 = vmatprep.subr.bf16.mxu0 %v522
        %798 = vmatpush1.bf16.msra.mxu0 %v521
        %799 = vmatprep.subr.bf16.mxu0 %v524
        %800 = vmatpush1.bf16.msra.mxu0 %v523
        %801 = vmatprep.subr.bf16.mxu0 %v526
        %802 = vmatpush1.bf16.msra.mxu0 %v525
        %803 = vmatprep.subr.bf16.mxu0 %v528
        %804 = vmatpush1.bf16.msra.mxu0 %v527
        %805 = vmatprep.subr.bf16.mxu0 0
        %806 = vmatpush1.bf16.msra.mxu0 0
        %807 = vmatprep.subr.bf16.mxu0 0
        %808 = vmatpush1.bf16.msra.mxu0 0
        %809 = vmatprep.subr.bf16.mxu0 0
        %810 = vmatpush1.bf16.msra.mxu0 0
        %811 = vmatprep.subr.bf16.mxu0 0
        %812 = vmatpush1.bf16.msra.mxu0 0
        %813 = vmatprep.subr.bf16.mxu0 0
        %814 = vmatpush1.bf16.msra.mxu0 0
        %815 = vmatprep.subr.bf16.mxu0 0
        %816 = vmatpush1.bf16.msra.mxu0 0
        %817 = vmatprep.subr.bf16.mxu0 0
        %818 = vmatpush1.bf16.msra.mxu0 0
        %819 = vmatprep.subr.bf16.mxu0 0
        %820 = vmatpush1.bf16.msra.mxu0 0
        %821 = vmatprep.mubr.bf16.mxu0 0
        %822 = vmatmul.mubr.bf16.gmra.mrb[0].mxu0 %v431
        %v823 = vpop.f32.mrb[0].mxu0
        %v824 = vadd.f32 0.0, %v823
        %v825 = vpop.f32.mrb[0].mxu0
        %v826 = vadd.f32 0.0, %v825
        %v827 = vpop.f32.mrb[0].mxu0
        %v828 = vpop.f32.mrb[0].mxu0
        %829 = vdwg.mxu0
        %830 = vmatprep.subr.bf16.mxu0 %v635
        %831 = vmatpush1.bf16.msra.mxu0 %v634
        %832 = vmatprep.subr.bf16.mxu0 %v637
        %833 = vmatpush1.bf16.msra.mxu0 %v636
        %834 = vmatprep.subr.bf16.mxu0 %v639
        %835 = vmatpush1.bf16.msra.mxu0 %v638
        %836 = vmatprep.subr.bf16.mxu0 %v641
        %837 = vmatpush1.bf16.msra.mxu0 %v640
        %838 = vmatprep.subr.bf16.mxu0 %v643
        %839 = vmatpush1.bf16.msra.mxu0 %v642
        %840 = vmatprep.subr.bf16.mxu0 %v645
        %841 = vmatpush1.bf16.msra.mxu0 %v644
        %842 = vmatprep.subr.bf16.mxu0 %v647
        %843 = vmatpush1.bf16.msra.mxu0 %v646
        %844 = vmatprep.subr.bf16.mxu0 %v649
        %845 = vmatpush1.bf16.msra.mxu0 %v648
        %846 = vmatprep.subr.bf16.mxu0 0
        %847 = vmatpush1.bf16.msra.mxu0 0
        %848 = vmatprep.subr.bf16.mxu0 0
        %849 = vmatpush1.bf16.msra.mxu0 0
        %850 = vmatprep.subr.bf16.mxu0 0
        %851 = vmatpush1.bf16.msra.mxu0 0
        %852 = vmatprep.subr.bf16.mxu0 0
        %853 = vmatpush1.bf16.msra.mxu0 0
        %854 = vmatprep.subr.bf16.mxu0 0
        %855 = vmatpush1.bf16.msra.mxu0 0
        %856 = vmatprep.subr.bf16.mxu0 0
        %857 = vmatpush1.bf16.msra.mxu0 0
        %858 = vmatprep.subr.bf16.mxu0 0
        %859 = vmatpush1.bf16.msra.mxu0 0
        %860 = vmatprep.subr.bf16.mxu0 0
        %861 = vmatpush1.bf16.msra.mxu0 0
        %862 = vmatprep.mubr.bf16.mxu0 0
        %863 = vmatmul.mubr.bf16.gmra.mrb[0].mxu0 %v429
        %v864 = vpop.f32.mrb[0].mxu0
        %v865 = vadd.f32 %v824, %v864
        %v866 = vpop.f32.mrb[0].mxu0
        %v867 = vadd.f32 %v826, %v866
        %v868 = vpop.f32.mrb[0].mxu0
        %v869 = vpop.f32.mrb[0].mxu0
        %870 = vdwg.mxu0
        %v872 = vunpack.c.l.b16 %v425
        %v873 = vpack.c.b16 %v872, %v872
        %v875 = vshrl.u32 %v873, 16
        %v877 = vshll.u32 %v873, 16
        %v879 = vrot.slane %v877, 1
        %v880 = vor.u32 %v875, %v879
        %882 = vmatprep.subr.bf16.mxu0 %v514
        %883 = vmatpush1.bf16.msra.mxu0 %v513
        %884 = vmatprep.subr.bf16.mxu0 %v516
        %885 = vmatpush1.bf16.msra.mxu0 %v515
        %886 = vmatprep.subr.bf16.mxu0 %v518
        %887 = vmatpush1.bf16.msra.mxu0 %v517
        %888 = vmatprep.subr.bf16.mxu0 %v520
        %889 = vmatpush1.bf16.msra.mxu0 %v519
        %890 = vmatprep.subr.bf16.mxu0 %v522
        %891 = vmatpush1.bf16.msra.mxu0 %v521
        %892 = vmatprep.subr.bf16.mxu0 %v524
        %893 = vmatpush1.bf16.msra.mxu0 %v523
        %894 = vmatprep.subr.bf16.mxu0 %v526
        %895 = vmatpush1.bf16.msra.mxu0 %v525
        %896 = vmatprep.subr.bf16.mxu0 %v528
        %897 = vmatpush1.bf16.msra.mxu0 %v527
        %898 = vmatprep.subr.bf16.mxu0 0
        %899 = vmatpush1.bf16.msra.mxu0 0
        %900 = vmatprep.subr.bf16.mxu0 0
        %901 = vmatpush1.bf16.msra.mxu0 0
        %902 = vmatprep.subr.bf16.mxu0 0
        %903 = vmatpush1.bf16.msra.mxu0 0
        %904 = vmatprep.subr.bf16.mxu0 0
        %905 = vmatpush1.bf16.msra.mxu0 0
        %906 = vmatprep.subr.bf16.mxu0 0
        %907 = vmatpush1.bf16.msra.mxu0 0
        %908 = vmatprep.subr.bf16.mxu0 0
        %909 = vmatpush1.bf16.msra.mxu0 0
        %910 = vmatprep.subr.bf16.mxu0 0
        %911 = vmatpush1.bf16.msra.mxu0 0
        %912 = vmatprep.subr.bf16.mxu0 0
        %913 = vmatpush1.bf16.msra.mxu0 0
        %914 = vmatprep.mubr.bf16.mxu0 0
        %915 = vmatmul.mubr.bf16.gmra.mrb[0].mxu0 %v880
        %v916 = vpop.f32.mrb[0].mxu0
        %v917 = vadd.f32 0.0, %v916
        %v918 = vpop.f32.mrb[0].mxu0
        %v919 = vadd.f32 0.0, %v918
        %v920 = vpop.f32.mrb[0].mxu0
        %v921 = vpop.f32.mrb[0].mxu0
        %922 = vdwg.mxu0
        %923 = vmatprep.subr.bf16.mxu0 %v635
        %924 = vmatpush1.bf16.msra.mxu0 %v634
        %925 = vmatprep.subr.bf16.mxu0 %v637
        %926 = vmatpush1.bf16.msra.mxu0 %v636
        %927 = vmatprep.subr.bf16.mxu0 %v639
        %928 = vmatpush1.bf16.msra.mxu0 %v638
        %929 = vmatprep.subr.bf16.mxu0 %v641
        %930 = vmatpush1.bf16.msra.mxu0 %v640
        %931 = vmatprep.subr.bf16.mxu0 %v643
        %932 = vmatpush1.bf16.msra.mxu0 %v642
        %933 = vmatprep.subr.bf16.mxu0 %v645
        %934 = vmatpush1.bf16.msra.mxu0 %v644
        %935 = vmatprep.subr.bf16.mxu0 %v647
        %936 = vmatpush1.bf16.msra.mxu0 %v646
        %937 = vmatprep.subr.bf16.mxu0 %v649
        %938 = vmatpush1.bf16.msra.mxu0 %v648
        %939 = vmatprep.subr.bf16.mxu0 0
        %940 = vmatpush1.bf16.msra.mxu0 0
        %941 = vmatprep.subr.bf16.mxu0 0
        %942 = vmatpush1.bf16.msra.mxu0 0
        %943 = vmatprep.subr.bf16.mxu0 0
        %944 = vmatpush1.bf16.msra.mxu0 0
        %945 = vmatprep.subr.bf16.mxu0 0
        %946 = vmatpush1.bf16.msra.mxu0 0
        %947 = vmatprep.subr.bf16.mxu0 0
        %948 = vmatpush1.bf16.msra.mxu0 0
        %949 = vmatprep.subr.bf16.mxu0 0
        %950 = vmatpush1.bf16.msra.mxu0 0
        %951 = vmatprep.subr.bf16.mxu0 0
        %952 = vmatpush1.bf16.msra.mxu0 0
        %953 = vmatprep.subr.bf16.mxu0 0
        %954 = vmatpush1.bf16.msra.mxu0 0
        %955 = vmatprep.mubr.bf16.mxu0 0
        %956 = vmatmul.mubr.bf16.gmra.mrb[0].mxu0 %v431
        %v957 = vpop.f32.mrb[0].mxu0
        %v958 = vadd.f32 %v917, %v957
        %v959 = vpop.f32.mrb[0].mxu0
        %v960 = vadd.f32 %v919, %v959
        %v961 = vpop.f32.mrb[0].mxu0
        %v962 = vpop.f32.mrb[0].mxu0
        %963 = vdwg.mxu0
        %s964 = scalar_lea.vmem %s1, 256
        %v965 = vld [vmem:[%s964] sm:$0xff]
        %v966 = vld [vmem:[%s964 + $0x8] sm:$0xff]
        %v967 = vld [vmem:[%s964 + $0x10] sm:$0xff]
        %v968 = vld [vmem:[%s964 + $0x18] sm:$0xff]
        %v969 = vld [vmem:[%s964 + $0x20] sm:$0xff]
        %v970 = vld [vmem:[%s964 + $0x28] sm:$0xff]
        %v971 = vld [vmem:[%s964 + $0x30] sm:$0xff]
        %v972 = vld [vmem:[%s964 + $0x38] sm:$0xff]
        %v973 = vld [vmem:[%s964 + $0x40] sm:$0xff]
        %v974 = vld [vmem:[%s964 + $0x48] sm:$0xff]
        %v975 = vld [vmem:[%s964 + $0x50] sm:$0xff]
        %v976 = vld [vmem:[%s964 + $0x58] sm:$0xff]
        %v977 = vld [vmem:[%s964 + $0x60] sm:$0xff]
        %v978 = vld [vmem:[%s964 + $0x68] sm:$0xff]
        %v979 = vld [vmem:[%s964 + $0x70] sm:$0xff]
        %v980 = vld [vmem:[%s964 + $0x78] sm:$0xff]
        %v997 = vunpack.c.l.b16 %v965
        %v998 = vunpack.c.h.b16 %v965
        %v999 = vunpack.c.l.b16 %v966
        %v1000 = vunpack.c.h.b16 %v966
        %v1001 = vunpack.c.l.b16 %v967
        %v1002 = vunpack.c.h.b16 %v967
        %v1003 = vunpack.c.l.b16 %v968
        %v1004 = vunpack.c.h.b16 %v968
        %v1005 = vunpack.c.l.b16 %v969
        %v1006 = vunpack.c.h.b16 %v969
        %v1007 = vunpack.c.l.b16 %v970
        %v1008 = vunpack.c.h.b16 %v970
        %v1009 = vunpack.c.l.b16 %v971
        %v1010 = vunpack.c.h.b16 %v971
        %v1011 = vunpack.c.l.b16 %v972
        %v1012 = vunpack.c.h.b16 %v972
        %v1013 = vunpack.c.l.b16 %v973
        %v1014 = vunpack.c.h.b16 %v973
        %v1015 = vunpack.c.l.b16 %v974
        %v1016 = vunpack.c.h.b16 %v974
        %v1017 = vunpack.c.l.b16 %v975
        %v1018 = vunpack.c.h.b16 %v975
        %v1019 = vunpack.c.l.b16 %v976
        %v1020 = vunpack.c.h.b16 %v976
        %v1021 = vunpack.c.l.b16 %v977
        %v1022 = vunpack.c.h.b16 %v977
        %v1023 = vunpack.c.l.b16 %v978
        %v1024 = vunpack.c.h.b16 %v978
        %v1025 = vunpack.c.l.b16 %v979
        %v1026 = vunpack.c.h.b16 %v979
        %v1027 = vunpack.c.l.b16 %v980
        %v1028 = vunpack.c.h.b16 %v980
        %v1029 = vpack.c.b16 %v999, %v997
        %v1030 = vpack.c.b16 %v1000, %v998
        %v1031 = vpack.c.b16 %v1003, %v1001
        %v1032 = vpack.c.b16 %v1004, %v1002
        %v1033 = vpack.c.b16 %v1007, %v1005
        %v1034 = vpack.c.b16 %v1008, %v1006
        %v1035 = vpack.c.b16 %v1011, %v1009
        %v1036 = vpack.c.b16 %v1012, %v1010
        %v1037 = vpack.c.b16 %v1015, %v1013
        %v1038 = vpack.c.b16 %v1016, %v1014
        %v1039 = vpack.c.b16 %v1019, %v1017
        %v1040 = vpack.c.b16 %v1020, %v1018
        %v1041 = vpack.c.b16 %v1023, %v1021
        %v1042 = vpack.c.b16 %v1024, %v1022
        %v1043 = vpack.c.b16 %v1027, %v1025
        %v1044 = vpack.c.b16 %v1028, %v1026
        %1061 = vmatprep.subr.bf16.mxu0 %v1030
        %1062 = vmatpush1.bf16.msra.mxu0 %v1029
        %1063 = vmatprep.subr.bf16.mxu0 %v1032
        %1064 = vmatpush1.bf16.msra.mxu0 %v1031
        %1065 = vmatprep.subr.bf16.mxu0 %v1034
        %1066 = vmatpush1.bf16.msra.mxu0 %v1033
        %1067 = vmatprep.subr.bf16.mxu0 %v1036
        %1068 = vmatpush1.bf16.msra.mxu0 %v1035
        %1069 = vmatprep.subr.bf16.mxu0 %v1038
        %1070 = vmatpush1.bf16.msra.mxu0 %v1037
        %1071 = vmatprep.subr.bf16.mxu0 %v1040
        %1072 = vmatpush1.bf16.msra.mxu0 %v1039
        %1073 = vmatprep.subr.bf16.mxu0 %v1042
        %1074 = vmatpush1.bf16.msra.mxu0 %v1041
        %1075 = vmatprep.subr.bf16.mxu0 %v1044
        %1076 = vmatpush1.bf16.msra.mxu0 %v1043
        %1077 = vmatprep.subr.bf16.mxu0 0
        %1078 = vmatpush1.bf16.msra.mxu0 0
        %1079 = vmatprep.subr.bf16.mxu0 0
        %1080 = vmatpush1.bf16.msra.mxu0 0
        %1081 = vmatprep.subr.bf16.mxu0 0
        %1082 = vmatpush1.bf16.msra.mxu0 0
        %1083 = vmatprep.subr.bf16.mxu0 0
        %1084 = vmatpush1.bf16.msra.mxu0 0
        %1085 = vmatprep.subr.bf16.mxu0 0
        %1086 = vmatpush1.bf16.msra.mxu0 0
        %1087 = vmatprep.subr.bf16.mxu0 0
        %1088 = vmatpush1.bf16.msra.mxu0 0
        %1089 = vmatprep.subr.bf16.mxu0 0
        %1090 = vmatpush1.bf16.msra.mxu0 0
        %1091 = vmatprep.subr.bf16.mxu0 0
        %1092 = vmatpush1.bf16.msra.mxu0 0
        %1093 = vmatprep.mubr.bf16.mxu0 0
        %1094 = vmatmul.mubr.bf16.gmra.mrb[0].mxu0 %v429
        %v1095 = vpop.f32.mrb[0].mxu0
        %v1096 = vadd.f32 0.0, %v1095
        %v1097 = vpop.f32.mrb[0].mxu0
        %v1098 = vadd.f32 0.0, %v1097
        %v1099 = vpop.f32.mrb[0].mxu0
        %v1100 = vpop.f32.mrb[0].mxu0
        %1101 = vdwg.mxu0
        %v1102 = vadd.f32 %v701, %v1096
        %v1103 = vadd.f32 %v703, %v1098
        %1104 = vmatprep.subr.bf16.mxu0 %v1030
        %1105 = vmatpush1.bf16.msra.mxu0 %v1029
        %1106 = vmatprep.subr.bf16.mxu0 %v1032
        %1107 = vmatpush1.bf16.msra.mxu0 %v1031
        %1108 = vmatprep.subr.bf16.mxu0 %v1034
        %1109 = vmatpush1.bf16.msra.mxu0 %v1033
        %1110 = vmatprep.subr.bf16.mxu0 %v1036
        %1111 = vmatpush1.bf16.msra.mxu0 %v1035
        %1112 = vmatprep.subr.bf16.mxu0 %v1038
        %1113 = vmatpush1.bf16.msra.mxu0 %v1037
        %1114 = vmatprep.subr.bf16.mxu0 %v1040
        %1115 = vmatpush1.bf16.msra.mxu0 %v1039
        %1116 = vmatprep.subr.bf16.mxu0 %v1042
        %1117 = vmatpush1.bf16.msra.mxu0 %v1041
        %1118 = vmatprep.subr.bf16.mxu0 %v1044
        %1119 = vmatpush1.bf16.msra.mxu0 %v1043
        %1120 = vmatprep.subr.bf16.mxu0 0
        %1121 = vmatpush1.bf16.msra.mxu0 0
        %1122 = vmatprep.subr.bf16.mxu0 0
        %1123 = vmatpush1.bf16.msra.mxu0 0
        %1124 = vmatprep.subr.bf16.mxu0 0
        %1125 = vmatpush1.bf16.msra.mxu0 0
        %1126 = vmatprep.subr.bf16.mxu0 0
        %1127 = vmatpush1.bf16.msra.mxu0 0
        %1128 = vmatprep.subr.bf16.mxu0 0
        %1129 = vmatpush1.bf16.msra.mxu0 0
        %1130 = vmatprep.subr.bf16.mxu0 0
        %1131 = vmatpush1.bf16.msra.mxu0 0
        %1132 = vmatprep.subr.bf16.mxu0 0
        %1133 = vmatpush1.bf16.msra.mxu0 0
        %1134 = vmatprep.subr.bf16.mxu0 0
        %1135 = vmatpush1.bf16.msra.mxu0 0
        %1136 = vmatprep.mubr.bf16.mxu0 0
        %1137 = vmatmul.mubr.bf16.gmra.mrb[0].mxu0 %v431
        %v1138 = vpop.f32.mrb[0].mxu0
        %v1139 = vadd.f32 0.0, %v1138
        %v1140 = vpop.f32.mrb[0].mxu0
        %v1141 = vadd.f32 0.0, %v1140
        %v1142 = vpop.f32.mrb[0].mxu0
        %v1143 = vpop.f32.mrb[0].mxu0
        %1144 = vdwg.mxu0
        %v1145 = vadd.f32 %v783, %v1139
        %v1146 = vadd.f32 %v785, %v1141
        %1147 = vmatprep.subr.bf16.mxu0 %v1030
        %1148 = vmatpush1.bf16.msra.mxu0 %v1029
        %1149 = vmatprep.subr.bf16.mxu0 %v1032
        %1150 = vmatpush1.bf16.msra.mxu0 %v1031
        %1151 = vmatprep.subr.bf16.mxu0 %v1034
        %1152 = vmatpush1.bf16.msra.mxu0 %v1033
        %1153 = vmatprep.subr.bf16.mxu0 %v1036
        %1154 = vmatpush1.bf16.msra.mxu0 %v1035
        %1155 = vmatprep.subr.bf16.mxu0 %v1038
        %1156 = vmatpush1.bf16.msra.mxu0 %v1037
        %1157 = vmatprep.subr.bf16.mxu0 %v1040
        %1158 = vmatpush1.bf16.msra.mxu0 %v1039
        %1159 = vmatprep.subr.bf16.mxu0 %v1042
        %1160 = vmatpush1.bf16.msra.mxu0 %v1041
        %1161 = vmatprep.subr.bf16.mxu0 %v1044
        %1162 = vmatpush1.bf16.msra.mxu0 %v1043
        %1163 = vmatprep.subr.bf16.mxu0 0
        %1164 = vmatpush1.bf16.msra.mxu0 0
        %1165 = vmatprep.subr.bf16.mxu0 0
        %1166 = vmatpush1.bf16.msra.mxu0 0
        %1167 = vmatprep.subr.bf16.mxu0 0
        %1168 = vmatpush1.bf16.msra.mxu0 0
        %1169 = vmatprep.subr.bf16.mxu0 0
        %1170 = vmatpush1.bf16.msra.mxu0 0
        %1171 = vmatprep.subr.bf16.mxu0 0
        %1172 = vmatpush1.bf16.msra.mxu0 0
        %1173 = vmatprep.subr.bf16.mxu0 0
        %1174 = vmatpush1.bf16.msra.mxu0 0
        %1175 = vmatprep.subr.bf16.mxu0 0
        %1176 = vmatpush1.bf16.msra.mxu0 0
        %1177 = vmatprep.subr.bf16.mxu0 0
        %1178 = vmatpush1.bf16.msra.mxu0 0
        %1179 = vmatprep.mubr.bf16.mxu0 0
        %1180 = vmatmul.mubr.bf16.gmra.mrb[0].mxu0 %v880
        %v1181 = vpop.f32.mrb[0].mxu0
        %v1182 = vadd.f32 0.0, %v1181
        %v1183 = vpop.f32.mrb[0].mxu0
        %v1184 = vadd.f32 0.0, %v1183
        %v1185 = vpop.f32.mrb[0].mxu0
        %v1186 = vpop.f32.mrb[0].mxu0
        %1187 = vdwg.mxu0
        %v1188 = vadd.f32 %v865, %v1182
        %v1189 = vadd.f32 %v867, %v1184
        %v1191 = vunpack.c.l.b16 %v427
        %v1192 = vpack.c.b16 %v1191, %v1191
        %v1194 = vshrl.u32 %v1192, 16
        %v1196 = vshll.u32 %v1192, 16
        %v1198 = vrot.slane %v1196, 1
        %v1199 = vor.u32 %v1194, %v1198
        %1201 = vmatprep.subr.bf16.mxu0 %v1030
        %1202 = vmatpush1.bf16.msra.mxu0 %v1029
        %1203 = vmatprep.subr.bf16.mxu0 %v1032
        %1204 = vmatpush1.bf16.msra.mxu0 %v1031
        %1205 = vmatprep.subr.bf16.mxu0 %v1034
        %1206 = vmatpush1.bf16.msra.mxu0 %v1033
        %1207 = vmatprep.subr.bf16.mxu0 %v1036
        %1208 = vmatpush1.bf16.msra.mxu0 %v1035
        %1209 = vmatprep.subr.bf16.mxu0 %v1038
        %1210 = vmatpush1.bf16.msra.mxu0 %v1037
        %1211 = vmatprep.subr.bf16.mxu0 %v1040
        %1212 = vmatpush1.bf16.msra.mxu0 %v1039
        %1213 = vmatprep.subr.bf16.mxu0 %v1042
        %1214 = vmatpush1.bf16.msra.mxu0 %v1041
        %1215 = vmatprep.subr.bf16.mxu0 %v1044
        %1216 = vmatpush1.bf16.msra.mxu0 %v1043
        %1217 = vmatprep.subr.bf16.mxu0 0
        %1218 = vmatpush1.bf16.msra.mxu0 0
        %1219 = vmatprep.subr.bf16.mxu0 0
        %1220 = vmatpush1.bf16.msra.mxu0 0
        %1221 = vmatprep.subr.bf16.mxu0 0
        %1222 = vmatpush1.bf16.msra.mxu0 0
        %1223 = vmatprep.subr.bf16.mxu0 0
        %1224 = vmatpush1.bf16.msra.mxu0 0
        %1225 = vmatprep.subr.bf16.mxu0 0
        %1226 = vmatpush1.bf16.msra.mxu0 0
        %1227 = vmatprep.subr.bf16.mxu0 0
        %1228 = vmatpush1.bf16.msra.mxu0 0
        %1229 = vmatprep.subr.bf16.mxu0 0
        %1230 = vmatpush1.bf16.msra.mxu0 0
        %1231 = vmatprep.subr.bf16.mxu0 0
        %1232 = vmatpush1.bf16.msra.mxu0 0
        %1233 = vmatprep.mubr.bf16.mxu0 0
        %1234 = vmatmul.mubr.bf16.gmra.mrb[0].mxu0 %v1199
        %v1235 = vpop.f32.mrb[0].mxu0
        %v1236 = vadd.f32 0.0, %v1235
        %v1237 = vpop.f32.mrb[0].mxu0
        %v1238 = vadd.f32 0.0, %v1237
        %v1239 = vpop.f32.mrb[0].mxu0
        %v1240 = vpop.f32.mrb[0].mxu0
        %1241 = vdwg.mxu0
        %v1242 = vadd.f32 %v958, %v1236
        %v1243 = vadd.f32 %v960, %v1238
        %s1244 = scalar_lea.vmem %s1, 384
        %v1245 = vld [vmem:[%s1244] sm:$0xff]
        %v1246 = vld [vmem:[%s1244 + $0x8] sm:$0xff]
        %v1247 = vld [vmem:[%s1244 + $0x10] sm:$0xff]
        %v1248 = vld [vmem:[%s1244 + $0x18] sm:$0xff]
        %v1249 = vld [vmem:[%s1244 + $0x20] sm:$0xff]
        %v1250 = vld [vmem:[%s1244 + $0x28] sm:$0xff]
        %v1251 = vld [vmem:[%s1244 + $0x30] sm:$0xff]
        %v1252 = vld [vmem:[%s1244 + $0x38] sm:$0xff]
        %v1253 = vld [vmem:[%s1244 + $0x40] sm:$0xff]
        %v1254 = vld [vmem:[%s1244 + $0x48] sm:$0xff]
        %v1255 = vld [vmem:[%s1244 + $0x50] sm:$0xff]
        %v1256 = vld [vmem:[%s1244 + $0x58] sm:$0xff]
        %v1257 = vld [vmem:[%s1244 + $0x60] sm:$0xff]
        %v1258 = vld [vmem:[%s1244 + $0x68] sm:$0xff]
        %v1259 = vld [vmem:[%s1244 + $0x70] sm:$0xff]
        %v1260 = vld [vmem:[%s1244 + $0x78] sm:$0xff]
        %v1277 = vunpack.c.l.b16 %v1245
        %v1278 = vunpack.c.h.b16 %v1245
        %v1279 = vunpack.c.l.b16 %v1246
        %v1280 = vunpack.c.h.b16 %v1246
        %v1281 = vunpack.c.l.b16 %v1247
        %v1282 = vunpack.c.h.b16 %v1247
        %v1283 = vunpack.c.l.b16 %v1248
        %v1284 = vunpack.c.h.b16 %v1248
        %v1285 = vunpack.c.l.b16 %v1249
        %v1286 = vunpack.c.h.b16 %v1249
        %v1287 = vunpack.c.l.b16 %v1250
        %v1288 = vunpack.c.h.b16 %v1250
        %v1289 = vunpack.c.l.b16 %v1251
        %v1290 = vunpack.c.h.b16 %v1251
        %v1291 = vunpack.c.l.b16 %v1252
        %v1292 = vunpack.c.h.b16 %v1252
        %v1293 = vunpack.c.l.b16 %v1253
        %v1294 = vunpack.c.h.b16 %v1253
        %v1295 = vunpack.c.l.b16 %v1254
        %v1296 = vunpack.c.h.b16 %v1254
        %v1297 = vunpack.c.l.b16 %v1255
        %v1298 = vunpack.c.h.b16 %v1255
        %v1299 = vunpack.c.l.b16 %v1256
        %v1300 = vunpack.c.h.b16 %v1256
        %v1301 = vunpack.c.l.b16 %v1257
        %v1302 = vunpack.c.h.b16 %v1257
        %v1303 = vunpack.c.l.b16 %v1258
        %v1304 = vunpack.c.h.b16 %v1258
        %v1305 = vunpack.c.l.b16 %v1259
        %v1306 = vunpack.c.h.b16 %v1259
        %v1307 = vunpack.c.l.b16 %v1260
        %v1308 = vunpack.c.h.b16 %v1260
        %v1309 = vpack.c.b16 %v1279, %v1277
        %v1310 = vpack.c.b16 %v1280, %v1278
        %v1311 = vpack.c.b16 %v1283, %v1281
        %v1312 = vpack.c.b16 %v1284, %v1282
        %v1313 = vpack.c.b16 %v1287, %v1285
        %v1314 = vpack.c.b16 %v1288, %v1286
        %v1315 = vpack.c.b16 %v1291, %v1289
        %v1316 = vpack.c.b16 %v1292, %v1290
        %v1317 = vpack.c.b16 %v1295, %v1293
        %v1318 = vpack.c.b16 %v1296, %v1294
        %v1319 = vpack.c.b16 %v1299, %v1297
        %v1320 = vpack.c.b16 %v1300, %v1298
        %v1321 = vpack.c.b16 %v1303, %v1301
        %v1322 = vpack.c.b16 %v1304, %v1302
        %v1323 = vpack.c.b16 %v1307, %v1305
        %v1324 = vpack.c.b16 %v1308, %v1306
        %1341 = vmatprep.subr.bf16.mxu0 %v1310
        %1342 = vmatpush1.bf16.msra.mxu0 %v1309
        %1343 = vmatprep.subr.bf16.mxu0 %v1312
        %1344 = vmatpush1.bf16.msra.mxu0 %v1311
        %1345 = vmatprep.subr.bf16.mxu0 %v1314
        %1346 = vmatpush1.bf16.msra.mxu0 %v1313
        %1347 = vmatprep.subr.bf16.mxu0 %v1316
        %1348 = vmatpush1.bf16.msra.mxu0 %v1315
        %1349 = vmatprep.subr.bf16.mxu0 %v1318
        %1350 = vmatpush1.bf16.msra.mxu0 %v1317
        %1351 = vmatprep.subr.bf16.mxu0 %v1320
        %1352 = vmatpush1.bf16.msra.mxu0 %v1319
        %1353 = vmatprep.subr.bf16.mxu0 %v1322
        %1354 = vmatpush1.bf16.msra.mxu0 %v1321
        %1355 = vmatprep.subr.bf16.mxu0 %v1324
        %1356 = vmatpush1.bf16.msra.mxu0 %v1323
        %1357 = vmatprep.subr.bf16.mxu0 0
        %1358 = vmatpush1.bf16.msra.mxu0 0
        %1359 = vmatprep.subr.bf16.mxu0 0
        %1360 = vmatpush1.bf16.msra.mxu0 0
        %1361 = vmatprep.subr.bf16.mxu0 0
        %1362 = vmatpush1.bf16.msra.mxu0 0
        %1363 = vmatprep.subr.bf16.mxu0 0
        %1364 = vmatpush1.bf16.msra.mxu0 0
        %1365 = vmatprep.subr.bf16.mxu0 0
        %1366 = vmatpush1.bf16.msra.mxu0 0
        %1367 = vmatprep.subr.bf16.mxu0 0
        %1368 = vmatpush1.bf16.msra.mxu0 0
        %1369 = vmatprep.subr.bf16.mxu0 0
        %1370 = vmatpush1.bf16.msra.mxu0 0
        %1371 = vmatprep.subr.bf16.mxu0 0
        %1372 = vmatpush1.bf16.msra.mxu0 0
        %1373 = vmatprep.mubr.bf16.mxu0 0
        %1374 = vmatmul.mubr.bf16.gmra.mrb[0].mxu0 %v431
        %v1375 = vpop.f32.mrb[0].mxu0
        %v1376 = vadd.f32 0.0, %v1375
        %v1377 = vpop.f32.mrb[0].mxu0
        %v1378 = vadd.f32 0.0, %v1377
        %v1379 = vpop.f32.mrb[0].mxu0
        %v1380 = vpop.f32.mrb[0].mxu0
        %1381 = vdwg.mxu0
        %v1382 = vadd.f32 %v1102, %v1376
        %v1383 = vadd.f32 %v1103, %v1378
        %1384 = vmatprep.subr.bf16.mxu0 %v1310
        %1385 = vmatpush1.bf16.msra.mxu0 %v1309
        %1386 = vmatprep.subr.bf16.mxu0 %v1312
        %1387 = vmatpush1.bf16.msra.mxu0 %v1311
        %1388 = vmatprep.subr.bf16.mxu0 %v1314
        %1389 = vmatpush1.bf16.msra.mxu0 %v1313
        %1390 = vmatprep.subr.bf16.mxu0 %v1316
        %1391 = vmatpush1.bf16.msra.mxu0 %v1315
        %1392 = vmatprep.subr.bf16.mxu0 %v1318
        %1393 = vmatpush1.bf16.msra.mxu0 %v1317
        %1394 = vmatprep.subr.bf16.mxu0 %v1320
        %1395 = vmatpush1.bf16.msra.mxu0 %v1319
        %1396 = vmatprep.subr.bf16.mxu0 %v1322
        %1397 = vmatpush1.bf16.msra.mxu0 %v1321
        %1398 = vmatprep.subr.bf16.mxu0 %v1324
        %1399 = vmatpush1.bf16.msra.mxu0 %v1323
        %1400 = vmatprep.subr.bf16.mxu0 0
        %1401 = vmatpush1.bf16.msra.mxu0 0
        %1402 = vmatprep.subr.bf16.mxu0 0
        %1403 = vmatpush1.bf16.msra.mxu0 0
        %1404 = vmatprep.subr.bf16.mxu0 0
        %1405 = vmatpush1.bf16.msra.mxu0 0
        %1406 = vmatprep.subr.bf16.mxu0 0
        %1407 = vmatpush1.bf16.msra.mxu0 0
        %1408 = vmatprep.subr.bf16.mxu0 0
        %1409 = vmatpush1.bf16.msra.mxu0 0
        %1410 = vmatprep.subr.bf16.mxu0 0
        %1411 = vmatpush1.bf16.msra.mxu0 0
        %1412 = vmatprep.subr.bf16.mxu0 0
        %1413 = vmatpush1.bf16.msra.mxu0 0
        %1414 = vmatprep.subr.bf16.mxu0 0
        %1415 = vmatpush1.bf16.msra.mxu0 0
        %1416 = vmatprep.mubr.bf16.mxu0 0
        %1417 = vmatmul.mubr.bf16.gmra.mrb[0].mxu0 %v880
        %v1418 = vpop.f32.mrb[0].mxu0
        %v1419 = vadd.f32 0.0, %v1418
        %v1420 = vpop.f32.mrb[0].mxu0
        %v1421 = vadd.f32 0.0, %v1420
        %v1422 = vpop.f32.mrb[0].mxu0
        %v1423 = vpop.f32.mrb[0].mxu0
        %1424 = vdwg.mxu0
        %v1425 = vadd.f32 %v1145, %v1419
        %v1426 = vadd.f32 %v1146, %v1421
        %1427 = vmatprep.subr.bf16.mxu0 %v1310
        %1428 = vmatpush1.bf16.msra.mxu0 %v1309
        %1429 = vmatprep.subr.bf16.mxu0 %v1312
        %1430 = vmatpush1.bf16.msra.mxu0 %v1311
        %1431 = vmatprep.subr.bf16.mxu0 %v1314
        %1432 = vmatpush1.bf16.msra.mxu0 %v1313
        %1433 = vmatprep.subr.bf16.mxu0 %v1316
        %1434 = vmatpush1.bf16.msra.mxu0 %v1315
        %1435 = vmatprep.subr.bf16.mxu0 %v1318
        %1436 = vmatpush1.bf16.msra.mxu0 %v1317
        %1437 = vmatprep.subr.bf16.mxu0 %v1320
        %1438 = vmatpush1.bf16.msra.mxu0 %v1319
        %1439 = vmatprep.subr.bf16.mxu0 %v1322
        %1440 = vmatpush1.bf16.msra.mxu0 %v1321
        %1441 = vmatprep.subr.bf16.mxu0 %v1324
        %1442 = vmatpush1.bf16.msra.mxu0 %v1323
        %1443 = vmatprep.subr.bf16.mxu0 0
        %1444 = vmatpush1.bf16.msra.mxu0 0
        %1445 = vmatprep.subr.bf16.mxu0 0
        %1446 = vmatpush1.bf16.msra.mxu0 0
        %1447 = vmatprep.subr.bf16.mxu0 0
        %1448 = vmatpush1.bf16.msra.mxu0 0
        %1449 = vmatprep.subr.bf16.mxu0 0
        %1450 = vmatpush1.bf16.msra.mxu0 0
        %1451 = vmatprep.subr.bf16.mxu0 0
        %1452 = vmatpush1.bf16.msra.mxu0 0
        %1453 = vmatprep.subr.bf16.mxu0 0
        %1454 = vmatpush1.bf16.msra.mxu0 0
        %1455 = vmatprep.subr.bf16.mxu0 0
        %1456 = vmatpush1.bf16.msra.mxu0 0
        %1457 = vmatprep.subr.bf16.mxu0 0
        %1458 = vmatpush1.bf16.msra.mxu0 0
        %1459 = vmatprep.mubr.bf16.mxu0 0
        %1460 = vmatmul.mubr.bf16.gmra.mrb[0].mxu0 %v1199
        %v1461 = vpop.f32.mrb[0].mxu0
        %v1462 = vadd.f32 0.0, %v1461
        %v1463 = vpop.f32.mrb[0].mxu0
        %v1464 = vadd.f32 0.0, %v1463
        %v1465 = vpop.f32.mrb[0].mxu0
        %v1466 = vpop.f32.mrb[0].mxu0
        %1467 = vdwg.mxu0
        %v1468 = vadd.f32 %v1188, %v1462
        %v1469 = vadd.f32 %v1189, %v1464
        %v1471 = vunpack.c.l.b16 %v429
        %v1472 = vpack.c.b16 %v1471, %v1471
        %v1474 = vshrl.u32 %v1472, 16
        %v1476 = vshll.u32 %v1472, 16
        %v1478 = vrot.slane %v1476, 1
        %v1479 = vor.u32 %v1474, %v1478
        %1481 = vmatprep.subr.bf16.mxu0 %v1310
        %1482 = vmatpush1.bf16.msra.mxu0 %v1309
        %1483 = vmatprep.subr.bf16.mxu0 %v1312
        %1484 = vmatpush1.bf16.msra.mxu0 %v1311
        %1485 = vmatprep.subr.bf16.mxu0 %v1314
        %1486 = vmatpush1.bf16.msra.mxu0 %v1313
        %1487 = vmatprep.subr.bf16.mxu0 %v1316
        %1488 = vmatpush1.bf16.msra.mxu0 %v1315
        %1489 = vmatprep.subr.bf16.mxu0 %v1318
        %1490 = vmatpush1.bf16.msra.mxu0 %v1317
        %1491 = vmatprep.subr.bf16.mxu0 %v1320
        %1492 = vmatpush1.bf16.msra.mxu0 %v1319
        %1493 = vmatprep.subr.bf16.mxu0 %v1322
        %1494 = vmatpush1.bf16.msra.mxu0 %v1321
        %1495 = vmatprep.subr.bf16.mxu0 %v1324
        %1496 = vmatpush1.bf16.msra.mxu0 %v1323
        %1497 = vmatprep.subr.bf16.mxu0 0
        %1498 = vmatpush1.bf16.msra.mxu0 0
        %1499 = vmatprep.subr.bf16.mxu0 0
        %1500 = vmatpush1.bf16.msra.mxu0 0
        %1501 = vmatprep.subr.bf16.mxu0 0
        %1502 = vmatpush1.bf16.msra.mxu0 0
        %1503 = vmatprep.subr.bf16.mxu0 0
        %1504 = vmatpush1.bf16.msra.mxu0 0
        %1505 = vmatprep.subr.bf16.mxu0 0
        %1506 = vmatpush1.bf16.msra.mxu0 0
        %1507 = vmatprep.subr.bf16.mxu0 0
        %1508 = vmatpush1.bf16.msra.mxu0 0
        %1509 = vmatprep.subr.bf16.mxu0 0
        %1510 = vmatpush1.bf16.msra.mxu0 0
        %1511 = vmatprep.subr.bf16.mxu0 0
        %1512 = vmatpush1.bf16.msra.mxu0 0
        %1513 = vmatprep.mubr.bf16.mxu0 0
        %1514 = vmatmul.mubr.bf16.gmra.mrb[0].mxu0 %v1479
        %v1515 = vpop.f32.mrb[0].mxu0
        %v1516 = vadd.f32 0.0, %v1515
        %v1517 = vpop.f32.mrb[0].mxu0
        %v1518 = vadd.f32 0.0, %v1517
        %v1519 = vpop.f32.mrb[0].mxu0
        %v1520 = vpop.f32.mrb[0].mxu0
        %1521 = vdwg.mxu0
        %v1522 = vadd.f32 %v1242, %v1516
        %v1523 = vadd.f32 %v1243, %v1518
        %s1524 = scalar_lea.vmem %s1, 512
        %v1525 = vld [vmem:[%s1524] sm:$0xff]
        %v1526 = vld [vmem:[%s1524 + $0x8] sm:$0xff]
        %v1527 = vld [vmem:[%s1524 + $0x10] sm:$0xff]
        %v1528 = vld [vmem:[%s1524 + $0x18] sm:$0xff]
        %v1529 = vld [vmem:[%s1524 + $0x20] sm:$0xff]
        %v1530 = vld [vmem:[%s1524 + $0x28] sm:$0xff]
        %v1531 = vld [vmem:[%s1524 + $0x30] sm:$0xff]
        %v1532 = vld [vmem:[%s1524 + $0x38] sm:$0xff]
        %v1533 = vld [vmem:[%s1524 + $0x40] sm:$0xff]
        %v1534 = vld [vmem:[%s1524 + $0x48] sm:$0xff]
        %v1535 = vld [vmem:[%s1524 + $0x50] sm:$0xff]
        %v1536 = vld [vmem:[%s1524 + $0x58] sm:$0xff]
        %v1537 = vld [vmem:[%s1524 + $0x60] sm:$0xff]
        %v1538 = vld [vmem:[%s1524 + $0x68] sm:$0xff]
        %v1539 = vld [vmem:[%s1524 + $0x70] sm:$0xff]
        %v1540 = vld [vmem:[%s1524 + $0x78] sm:$0xff]
        %v1557 = vunpack.c.l.b16 %v1525
        %v1558 = vunpack.c.h.b16 %v1525
        %v1559 = vunpack.c.l.b16 %v1526
        %v1560 = vunpack.c.h.b16 %v1526
        %v1561 = vunpack.c.l.b16 %v1527
        %v1562 = vunpack.c.h.b16 %v1527
        %v1563 = vunpack.c.l.b16 %v1528
        %v1564 = vunpack.c.h.b16 %v1528
        %v1565 = vunpack.c.l.b16 %v1529
        %v1566 = vunpack.c.h.b16 %v1529
        %v1567 = vunpack.c.l.b16 %v1530
        %v1568 = vunpack.c.h.b16 %v1530
        %v1569 = vunpack.c.l.b16 %v1531
        %v1570 = vunpack.c.h.b16 %v1531
        %v1571 = vunpack.c.l.b16 %v1532
        %v1572 = vunpack.c.h.b16 %v1532
        %v1573 = vunpack.c.l.b16 %v1533
        %v1574 = vunpack.c.h.b16 %v1533
        %v1575 = vunpack.c.l.b16 %v1534
        %v1576 = vunpack.c.h.b16 %v1534
        %v1577 = vunpack.c.l.b16 %v1535
        %v1578 = vunpack.c.h.b16 %v1535
        %v1579 = vunpack.c.l.b16 %v1536
        %v1580 = vunpack.c.h.b16 %v1536
        %v1581 = vunpack.c.l.b16 %v1537
        %v1582 = vunpack.c.h.b16 %v1537
        %v1583 = vunpack.c.l.b16 %v1538
        %v1584 = vunpack.c.h.b16 %v1538
        %v1585 = vunpack.c.l.b16 %v1539
        %v1586 = vunpack.c.h.b16 %v1539
        %v1587 = vunpack.c.l.b16 %v1540
        %v1588 = vunpack.c.h.b16 %v1540
        %v1589 = vpack.c.b16 %v1559, %v1557
        %v1590 = vpack.c.b16 %v1560, %v1558
        %v1591 = vpack.c.b16 %v1563, %v1561
        %v1592 = vpack.c.b16 %v1564, %v1562
        %v1593 = vpack.c.b16 %v1567, %v1565
        %v1594 = vpack.c.b16 %v1568, %v1566
        %v1595 = vpack.c.b16 %v1571, %v1569
        %v1596 = vpack.c.b16 %v1572, %v1570
        %v1597 = vpack.c.b16 %v1575, %v1573
        %v1598 = vpack.c.b16 %v1576, %v1574
        %v1599 = vpack.c.b16 %v1579, %v1577
        %v1600 = vpack.c.b16 %v1580, %v1578
        %v1601 = vpack.c.b16 %v1583, %v1581
        %v1602 = vpack.c.b16 %v1584, %v1582
        %v1603 = vpack.c.b16 %v1587, %v1585
        %v1604 = vpack.c.b16 %v1588, %v1586
        %1621 = vmatprep.subr.bf16.mxu0 %v1590
        %1622 = vmatpush1.bf16.msra.mxu0 %v1589
        %1623 = vmatprep.subr.bf16.mxu0 %v1592
        %1624 = vmatpush1.bf16.msra.mxu0 %v1591
        %1625 = vmatprep.subr.bf16.mxu0 %v1594
        %1626 = vmatpush1.bf16.msra.mxu0 %v1593
        %1627 = vmatprep.subr.bf16.mxu0 %v1596
        %1628 = vmatpush1.bf16.msra.mxu0 %v1595
        %1629 = vmatprep.subr.bf16.mxu0 %v1598
        %1630 = vmatpush1.bf16.msra.mxu0 %v1597
        %1631 = vmatprep.subr.bf16.mxu0 %v1600
        %1632 = vmatpush1.bf16.msra.mxu0 %v1599
        %1633 = vmatprep.subr.bf16.mxu0 %v1602
        %1634 = vmatpush1.bf16.msra.mxu0 %v1601
        %1635 = vmatprep.subr.bf16.mxu0 %v1604
        %1636 = vmatpush1.bf16.msra.mxu0 %v1603
        %1637 = vmatprep.subr.bf16.mxu0 0
        %1638 = vmatpush1.bf16.msra.mxu0 0
        %1639 = vmatprep.subr.bf16.mxu0 0
        %1640 = vmatpush1.bf16.msra.mxu0 0
        %1641 = vmatprep.subr.bf16.mxu0 0
        %1642 = vmatpush1.bf16.msra.mxu0 0
        %1643 = vmatprep.subr.bf16.mxu0 0
        %1644 = vmatpush1.bf16.msra.mxu0 0
        %1645 = vmatprep.subr.bf16.mxu0 0
        %1646 = vmatpush1.bf16.msra.mxu0 0
        %1647 = vmatprep.subr.bf16.mxu0 0
        %1648 = vmatpush1.bf16.msra.mxu0 0
        %1649 = vmatprep.subr.bf16.mxu0 0
        %1650 = vmatpush1.bf16.msra.mxu0 0
        %1651 = vmatprep.subr.bf16.mxu0 0
        %1652 = vmatpush1.bf16.msra.mxu0 0
        %1653 = vmatprep.mubr.bf16.mxu0 0
        %1654 = vmatmul.mubr.bf16.gmra.mrb[0].mxu0 %v880
        %v1655 = vpop.f32.mrb[0].mxu0
        %v1656 = vadd.f32 0.0, %v1655
        %v1657 = vpop.f32.mrb[0].mxu0
        %v1658 = vadd.f32 0.0, %v1657
        %v1659 = vpop.f32.mrb[0].mxu0
        %v1660 = vpop.f32.mrb[0].mxu0
        %1661 = vdwg.mxu0
        %v1662 = vadd.f32 %v1382, %v1656
        %v1663 = vadd.f32 %v1383, %v1658
        %1664 = vmatprep.subr.bf16.mxu0 %v1590
        %1665 = vmatpush1.bf16.msra.mxu0 %v1589
        %1666 = vmatprep.subr.bf16.mxu0 %v1592
        %1667 = vmatpush1.bf16.msra.mxu0 %v1591
        %1668 = vmatprep.subr.bf16.mxu0 %v1594
        %1669 = vmatpush1.bf16.msra.mxu0 %v1593
        %1670 = vmatprep.subr.bf16.mxu0 %v1596
        %1671 = vmatpush1.bf16.msra.mxu0 %v1595
        %1672 = vmatprep.subr.bf16.mxu0 %v1598
        %1673 = vmatpush1.bf16.msra.mxu0 %v1597
        %1674 = vmatprep.subr.bf16.mxu0 %v1600
        %1675 = vmatpush1.bf16.msra.mxu0 %v1599
        %1676 = vmatprep.subr.bf16.mxu0 %v1602
        %1677 = vmatpush1.bf16.msra.mxu0 %v1601
        %1678 = vmatprep.subr.bf16.mxu0 %v1604
        %1679 = vmatpush1.bf16.msra.mxu0 %v1603
        %1680 = vmatprep.subr.bf16.mxu0 0
        %1681 = vmatpush1.bf16.msra.mxu0 0
        %1682 = vmatprep.subr.bf16.mxu0 0
        %1683 = vmatpush1.bf16.msra.mxu0 0
        %1684 = vmatprep.subr.bf16.mxu0 0
        %1685 = vmatpush1.bf16.msra.mxu0 0
        %1686 = vmatprep.subr.bf16.mxu0 0
        %1687 = vmatpush1.bf16.msra.mxu0 0
        %1688 = vmatprep.subr.bf16.mxu0 0
        %1689 = vmatpush1.bf16.msra.mxu0 0
        %1690 = vmatprep.subr.bf16.mxu0 0
        %1691 = vmatpush1.bf16.msra.mxu0 0
        %1692 = vmatprep.subr.bf16.mxu0 0
        %1693 = vmatpush1.bf16.msra.mxu0 0
        %1694 = vmatprep.subr.bf16.mxu0 0
        %1695 = vmatpush1.bf16.msra.mxu0 0
        %1696 = vmatprep.mubr.bf16.mxu0 0
        %1697 = vmatmul.mubr.bf16.gmra.mrb[0].mxu0 %v1199
        %v1698 = vpop.f32.mrb[0].mxu0
        %v1699 = vadd.f32 0.0, %v1698
        %v1700 = vpop.f32.mrb[0].mxu0
        %v1701 = vadd.f32 0.0, %v1700
        %v1702 = vpop.f32.mrb[0].mxu0
        %v1703 = vpop.f32.mrb[0].mxu0
        %1704 = vdwg.mxu0
        %v1705 = vadd.f32 %v1425, %v1699
        %v1706 = vadd.f32 %v1426, %v1701
        %1707 = vmatprep.subr.bf16.mxu0 %v1590
        %1708 = vmatpush1.bf16.msra.mxu0 %v1589
        %1709 = vmatprep.subr.bf16.mxu0 %v1592
        %1710 = vmatpush1.bf16.msra.mxu0 %v1591
        %1711 = vmatprep.subr.bf16.mxu0 %v1594
        %1712 = vmatpush1.bf16.msra.mxu0 %v1593
        %1713 = vmatprep.subr.bf16.mxu0 %v1596
        %1714 = vmatpush1.bf16.msra.mxu0 %v1595
        %1715 = vmatprep.subr.bf16.mxu0 %v1598
        %1716 = vmatpush1.bf16.msra.mxu0 %v1597
        %1717 = vmatprep.subr.bf16.mxu0 %v1600
        %1718 = vmatpush1.bf16.msra.mxu0 %v1599
        %1719 = vmatprep.subr.bf16.mxu0 %v1602
        %1720 = vmatpush1.bf16.msra.mxu0 %v1601
        %1721 = vmatprep.subr.bf16.mxu0 %v1604
        %1722 = vmatpush1.bf16.msra.mxu0 %v1603
        %1723 = vmatprep.subr.bf16.mxu0 0
        %1724 = vmatpush1.bf16.msra.mxu0 0
        %1725 = vmatprep.subr.bf16.mxu0 0
        %1726 = vmatpush1.bf16.msra.mxu0 0
        %1727 = vmatprep.subr.bf16.mxu0 0
        %1728 = vmatpush1.bf16.msra.mxu0 0
        %1729 = vmatprep.subr.bf16.mxu0 0
        %1730 = vmatpush1.bf16.msra.mxu0 0
        %1731 = vmatprep.subr.bf16.mxu0 0
        %1732 = vmatpush1.bf16.msra.mxu0 0
        %1733 = vmatprep.subr.bf16.mxu0 0
        %1734 = vmatpush1.bf16.msra.mxu0 0
        %1735 = vmatprep.subr.bf16.mxu0 0
        %1736 = vmatpush1.bf16.msra.mxu0 0
        %1737 = vmatprep.subr.bf16.mxu0 0
        %1738 = vmatpush1.bf16.msra.mxu0 0
        %1739 = vmatprep.mubr.bf16.mxu0 0
        %1740 = vmatmul.mubr.bf16.gmra.mrb[0].mxu0 %v1479
        %v1741 = vpop.f32.mrb[0].mxu0
        %v1742 = vadd.f32 0.0, %v1741
        %v1743 = vpop.f32.mrb[0].mxu0
        %v1744 = vadd.f32 0.0, %v1743
        %v1745 = vpop.f32.mrb[0].mxu0
        %v1746 = vpop.f32.mrb[0].mxu0
        %1747 = vdwg.mxu0
        %v1748 = vadd.f32 %v1468, %v1742
        %v1749 = vadd.f32 %v1469, %v1744
        %v1751 = vunpack.c.l.b16 %v431
        %v1752 = vpack.c.b16 %v1751, %v1751
        %v1754 = vshrl.u32 %v1752, 16
        %v1756 = vshll.u32 %v1752, 16
        %v1758 = vrot.slane %v1756, 1
        %v1759 = vor.u32 %v1754, %v1758
        %1761 = vmatprep.subr.bf16.mxu0 %v1590
        %1762 = vmatpush1.bf16.msra.mxu0 %v1589
        %1763 = vmatprep.subr.bf16.mxu0 %v1592
        %1764 = vmatpush1.bf16.msra.mxu0 %v1591
        %1765 = vmatprep.subr.bf16.mxu0 %v1594
        %1766 = vmatpush1.bf16.msra.mxu0 %v1593
        %1767 = vmatprep.subr.bf16.mxu0 %v1596
        %1768 = vmatpush1.bf16.msra.mxu0 %v1595
        %1769 = vmatprep.subr.bf16.mxu0 %v1598
        %1770 = vmatpush1.bf16.msra.mxu0 %v1597
        %1771 = vmatprep.subr.bf16.mxu0 %v1600
        %1772 = vmatpush1.bf16.msra.mxu0 %v1599
        %1773 = vmatprep.subr.bf16.mxu0 %v1602
        %1774 = vmatpush1.bf16.msra.mxu0 %v1601
        %1775 = vmatprep.subr.bf16.mxu0 %v1604
        %1776 = vmatpush1.bf16.msra.mxu0 %v1603
        %1777 = vmatprep.subr.bf16.mxu0 0
        %1778 = vmatpush1.bf16.msra.mxu0 0
        %1779 = vmatprep.subr.bf16.mxu0 0
        %1780 = vmatpush1.bf16.msra.mxu0 0
        %1781 = vmatprep.subr.bf16.mxu0 0
        %1782 = vmatpush1.bf16.msra.mxu0 0
        %1783 = vmatprep.subr.bf16.mxu0 0
        %1784 = vmatpush1.bf16.msra.mxu0 0
        %1785 = vmatprep.subr.bf16.mxu0 0
        %1786 = vmatpush1.bf16.msra.mxu0 0
        %1787 = vmatprep.subr.bf16.mxu0 0
        %1788 = vmatpush1.bf16.msra.mxu0 0
        %1789 = vmatprep.subr.bf16.mxu0 0
        %1790 = vmatpush1.bf16.msra.mxu0 0
        %1791 = vmatprep.subr.bf16.mxu0 0
        %1792 = vmatpush1.bf16.msra.mxu0 0
        %1793 = vmatprep.mubr.bf16.mxu0 0
        %1794 = vmatmul.mubr.bf16.gmra.mrb[0].mxu0 %v1759
        %v1795 = vpop.f32.mrb[0].mxu0
        %v1796 = vadd.f32 0.0, %v1795
        %v1797 = vpop.f32.mrb[0].mxu0
        %v1798 = vadd.f32 0.0, %v1797
        %v1799 = vpop.f32.mrb[0].mxu0
        %v1800 = vpop.f32.mrb[0].mxu0
        %1801 = vdwg.mxu0
        %v1802 = vadd.f32 %v1522, %v1796
        %v1803 = vadd.f32 %v1523, %v1798
        %v1805 = vlaneseq
        %v1806 = vshrl.u32 %v1805, 7
        %v1807 = vsub.s32 0, %v1806
        %v1808 = vrot.slane %v415, %v1807
        %v1809 = vlaneseq
        %v1810 = vshrl.u32 %v1809, 7
        %v1811 = vsub.s32 1, %v1810
        %v1812 = vrot.slane %v415, %v1811
        %v1815 = vadd.f32 %v1662, %v1808
        %v1816 = vadd.f32 %v1663, %v1812
        %v1817 = vadd.f32 %v1705, %v1808
        %v1818 = vadd.f32 %v1706, %v1812
        %v1819 = vadd.f32 %v1748, %v1808
        %v1820 = vadd.f32 %v1749, %v1812
        %v1821 = vadd.f32 %v1802, %v1808
        %v1822 = vadd.f32 %v1803, %v1812
        %vm1823 = vcmask 1046528
        %v1824 = vsel %vm1823, %v1815, 0.0
        %v1825 = vrot.slane %v1824, 4
        %v1826 = vadd.f32 %v1824, %v1825
        %v1827 = vrot.slane %v1826, 2
        %v1828 = vadd.f32 %v1826, %v1827
        %v1829 = vrot.slane %v1828, 1
        %v1830 = vadd.f32 %v1828, %v1829
        %v1831 = vsel %vm1823, %v1816, 0.0
        %v1832 = vrot.slane %v1831, 4
        %v1833 = vadd.f32 %v1831, %v1832
        %v1834 = vrot.slane %v1833, 2
        %v1835 = vadd.f32 %v1833, %v1834
        %v1836 = vrot.slane %v1835, 1
        %v1837 = vadd.f32 %v1835, %v1836
        %v1838 = vadd.f32 %v1830, 0.0
        %v1839 = vadd.f32 %v1837, 0.0
        %v1840 = vsel %vm1823, %v1817, 0.0
        %v1841 = vrot.slane %v1840, 4
        %v1842 = vadd.f32 %v1840, %v1841
        %v1843 = vrot.slane %v1842, 2
        %v1844 = vadd.f32 %v1842, %v1843
        %v1845 = vrot.slane %v1844, 1
        %v1846 = vadd.f32 %v1844, %v1845
        %v1847 = vsel %vm1823, %v1818, 0.0
        %v1848 = vrot.slane %v1847, 4
        %v1849 = vadd.f32 %v1847, %v1848
        %v1850 = vrot.slane %v1849, 2
        %v1851 = vadd.f32 %v1849, %v1850
        %v1852 = vrot.slane %v1851, 1
        %v1853 = vadd.f32 %v1851, %v1852
        %v1854 = vadd.f32 %v1838, %v1846
        %v1855 = vadd.f32 %v1839, %v1853
        %v1856 = vsel %vm1823, %v1819, 0.0
        %v1857 = vrot.slane %v1856, 4
        %v1858 = vadd.f32 %v1856, %v1857
        %v1859 = vrot.slane %v1858, 2
        %v1860 = vadd.f32 %v1858, %v1859
        %v1861 = vrot.slane %v1860, 1
        %v1862 = vadd.f32 %v1860, %v1861
        %v1863 = vsel %vm1823, %v1820, 0.0
        %v1864 = vrot.slane %v1863, 4
        %v1865 = vadd.f32 %v1863, %v1864
        %v1866 = vrot.slane %v1865, 2
        %v1867 = vadd.f32 %v1865, %v1866
        %v1868 = vrot.slane %v1867, 1
        %v1869 = vadd.f32 %v1867, %v1868
        %v1870 = vadd.f32 %v1854, %v1862
        %v1871 = vadd.f32 %v1855, %v1869
        %v1872 = vsel %vm1823, %v1821, 0.0
        %v1873 = vrot.slane %v1872, 4
        %v1874 = vadd.f32 %v1872, %v1873
        %v1875 = vrot.slane %v1874, 2
        %v1876 = vadd.f32 %v1874, %v1875
        %v1877 = vrot.slane %v1876, 1
        %v1878 = vadd.f32 %v1876, %v1877
        %v1879 = vsel %vm1823, %v1822, 0.0
        %v1880 = vrot.slane %v1879, 4
        %v1881 = vadd.f32 %v1879, %v1880
        %v1882 = vrot.slane %v1881, 2
        %v1883 = vadd.f32 %v1881, %v1882
        %v1884 = vrot.slane %v1883, 1
        %v1885 = vadd.f32 %v1883, %v1884
        %v1886 = vadd.f32 %v1870, %v1878
        %v1887 = vadd.f32 %v1871, %v1885
        %v1888 = vmul.f32 %v1815, %v1815
        %v1889 = vmul.f32 %v1816, %v1816
        %v1890 = vsel %vm1823, %v1888, 0.0
        %v1891 = vrot.slane %v1890, 4
        %v1892 = vadd.f32 %v1890, %v1891
        %v1893 = vrot.slane %v1892, 2
        %v1894 = vadd.f32 %v1892, %v1893
        %v1895 = vrot.slane %v1894, 1
        %v1896 = vadd.f32 %v1894, %v1895
        %v1897 = vsel %vm1823, %v1889, 0.0
        %v1898 = vrot.slane %v1897, 4
        %v1899 = vadd.f32 %v1897, %v1898
        %v1900 = vrot.slane %v1899, 2
        %v1901 = vadd.f32 %v1899, %v1900
        %v1902 = vrot.slane %v1901, 1
        %v1903 = vadd.f32 %v1901, %v1902
        %v1904 = vadd.f32 %v1896, 0.0
        %v1905 = vadd.f32 %v1903, 0.0
        %v1906 = vmul.f32 %v1817, %v1817
        %v1907 = vmul.f32 %v1818, %v1818
        %v1908 = vsel %vm1823, %v1906, 0.0
        %v1909 = vrot.slane %v1908, 4
        %v1910 = vadd.f32 %v1908, %v1909
        %v1911 = vrot.slane %v1910, 2
        %v1912 = vadd.f32 %v1910, %v1911
        %v1913 = vrot.slane %v1912, 1
        %v1914 = vadd.f32 %v1912, %v1913
        %v1915 = vsel %vm1823, %v1907, 0.0
        %v1916 = vrot.slane %v1915, 4
        %v1917 = vadd.f32 %v1915, %v1916
        %v1918 = vrot.slane %v1917, 2
        %v1919 = vadd.f32 %v1917, %v1918
        %v1920 = vrot.slane %v1919, 1
        %v1921 = vadd.f32 %v1919, %v1920
        %v1922 = vadd.f32 %v1904, %v1914
        %v1923 = vadd.f32 %v1905, %v1921
        %v1924 = vmul.f32 %v1819, %v1819
        %v1925 = vmul.f32 %v1820, %v1820
        %v1926 = vsel %vm1823, %v1924, 0.0
        %v1927 = vrot.slane %v1926, 4
        %v1928 = vadd.f32 %v1926, %v1927
        %v1929 = vrot.slane %v1928, 2
        %v1930 = vadd.f32 %v1928, %v1929
        %v1931 = vrot.slane %v1930, 1
        %v1932 = vadd.f32 %v1930, %v1931
        %v1933 = vsel %vm1823, %v1925, 0.0
        %v1934 = vrot.slane %v1933, 4
        %v1935 = vadd.f32 %v1933, %v1934
        %v1936 = vrot.slane %v1935, 2
        %v1937 = vadd.f32 %v1935, %v1936
        %v1938 = vrot.slane %v1937, 1
        %v1939 = vadd.f32 %v1937, %v1938
        %v1940 = vadd.f32 %v1922, %v1932
        %v1941 = vadd.f32 %v1923, %v1939
        %v1942 = vmul.f32 %v1821, %v1821
        %v1943 = vmul.f32 %v1822, %v1822
        %v1944 = vsel %vm1823, %v1942, 0.0
        %v1945 = vrot.slane %v1944, 4
        %v1946 = vadd.f32 %v1944, %v1945
        %v1947 = vrot.slane %v1946, 2
        %v1948 = vadd.f32 %v1946, %v1947
        %v1949 = vrot.slane %v1948, 1
        %v1950 = vadd.f32 %v1948, %v1949
        %v1951 = vsel %vm1823, %v1943, 0.0
        %v1952 = vrot.slane %v1951, 4
        %v1953 = vadd.f32 %v1951, %v1952
        %v1954 = vrot.slane %v1953, 2
        %v1955 = vadd.f32 %v1953, %v1954
        %v1956 = vrot.slane %v1955, 1
        %v1957 = vadd.f32 %v1955, %v1956
        %v1958 = vadd.f32 %v1940, %v1950
        %v1959 = vadd.f32 %v1941, %v1957
        %vm1960 = vcmask 1040384
        %v1961 = vsel %vm1960, %v1886, %v1958
        %v1962 = vsel %vm1960, %v1887, %v1959
        %v1963 = vld [vmem:[%s3] sm:$0xff]
        %v1964 = vld [vmem:[%s3 + $0x8] sm:$0xff]
        %v1965 = vld [vmem:[%s3 + $0x10] sm:$0xff]
        %v1966 = vld [vmem:[%s3 + $0x18] sm:$0xff]
        %v1967 = vld [vmem:[%s3 + $0x20] sm:$0xff]
        %v1968 = vld [vmem:[%s3 + $0x28] sm:$0xff]
        %v1969 = vld [vmem:[%s3 + $0x30] sm:$0xff]
        %v1970 = vld [vmem:[%s3 + $0x38] sm:$0xff]
        %v1971 = vld [vmem:[%s3 + $0x40] sm:$0xff]
        %v1972 = vld [vmem:[%s3 + $0x48] sm:$0xff]
        %v1973 = vld [vmem:[%s3 + $0x50] sm:$0xff]
        %v1974 = vld [vmem:[%s3 + $0x58] sm:$0xff]
        %v1975 = vld [vmem:[%s3 + $0x60] sm:$0xff]
        %v1976 = vld [vmem:[%s3 + $0x68] sm:$0xff]
        %v1977 = vld [vmem:[%s3 + $0x70] sm:$0xff]
        %v1978 = vld [vmem:[%s3 + $0x78] sm:$0xff]
        %v1979 = vld [vmem:[%s3 + $0x80] sm:$0xff]
        %v1980 = vld [vmem:[%s3 + $0x88] sm:$0xff]
        %v1981 = vld [vmem:[%s3 + $0x90] sm:$0xff]
        %v1982 = vld [vmem:[%s3 + $0x98] sm:$0xff]
        %v1983 = vld [vmem:[%s3 + $0xa0] sm:$0xff]
        %v1984 = vld [vmem:[%s3 + $0xa8] sm:$0xff]
        %v1985 = vld [vmem:[%s3 + $0xb0] sm:$0xff]
        %v1986 = vld [vmem:[%s3 + $0xb8] sm:$0xff]
        %v1987 = vld [vmem:[%s3 + $0xc0] sm:$0xff]
        %v1988 = vld [vmem:[%s3 + $0xc8] sm:$0xff]
        %v1989 = vld [vmem:[%s3 + $0xd0] sm:$0xff]
        %v1990 = vld [vmem:[%s3 + $0xd8] sm:$0xff]
        %v1991 = vld [vmem:[%s3 + $0xe0] sm:$0xff]
        %v1992 = vld [vmem:[%s3 + $0xe8] sm:$0xff]
        %v1993 = vld [vmem:[%s3 + $0xf0] sm:$0xff]
        %v1994 = vld [vmem:[%s3 + $0xf8] sm:$0xff]
        %v1995 = vld [vmem:[%s3 + $0x100] sm:$0xff]
        %v1996 = vld [vmem:[%s3 + $0x108] sm:$0xff]
        %v1997 = vld [vmem:[%s3 + $0x110] sm:$0xff]
        %v1998 = vld [vmem:[%s3 + $0x118] sm:$0xff]
        %v1999 = vld [vmem:[%s3 + $0x120] sm:$0xff]
        %v2000 = vld [vmem:[%s3 + $0x128] sm:$0xff]
        %v2001 = vld [vmem:[%s3 + $0x130] sm:$0xff]
        %v2002 = vld [vmem:[%s3 + $0x138] sm:$0xff]
        %v2003 = vld [vmem:[%s3 + $0x140] sm:$0xff]
        %v2004 = vld [vmem:[%s3 + $0x148] sm:$0xff]
        %v2005 = vld [vmem:[%s3 + $0x150] sm:$0xff]
        %v2006 = vld [vmem:[%s3 + $0x158] sm:$0xff]
        %v2007 = vld [vmem:[%s3 + $0x160] sm:$0xff]
        %v2008 = vld [vmem:[%s3 + $0x168] sm:$0xff]
        %v2009 = vld [vmem:[%s3 + $0x170] sm:$0xff]
        %v2010 = vld [vmem:[%s3 + $0x178] sm:$0xff]
        %v2011 = vld [vmem:[%s3 + $0x180] sm:$0xff]
        %v2012 = vld [vmem:[%s3 + $0x188] sm:$0xff]
        %v2013 = vld [vmem:[%s3 + $0x190] sm:$0xff]
        %v2014 = vld [vmem:[%s3 + $0x198] sm:$0xff]
        %v2015 = vld [vmem:[%s3 + $0x1a0] sm:$0xff]
        %v2016 = vld [vmem:[%s3 + $0x1a8] sm:$0xff]
        %v2017 = vld [vmem:[%s3 + $0x1b0] sm:$0xff]
        %v2018 = vld [vmem:[%s3 + $0x1b8] sm:$0xff]
        %v2019 = vld [vmem:[%s3 + $0x1c0] sm:$0xff]
        %v2020 = vld [vmem:[%s3 + $0x1c8] sm:$0xff]
        %v2021 = vld [vmem:[%s3 + $0x1d0] sm:$0xff]
        %v2022 = vld [vmem:[%s3 + $0x1d8] sm:$0xff]
        %v2023 = vld [vmem:[%s3 + $0x1e0] sm:$0xff]
        %v2024 = vld [vmem:[%s3 + $0x1e8] sm:$0xff]
        %v2025 = vld [vmem:[%s3 + $0x1f0] sm:$0xff]
        %v2026 = vld [vmem:[%s3 + $0x1f8] sm:$0xff]
        %2027 = vmatprep.subr.mxu0 %v1964
        %2028 = vmatpush1.msra.mxu0 %v1963
        %2029 = vmatprep.subr.mxu0 %v1966
        %2030 = vmatpush1.msra.mxu0 %v1965
        %2031 = vmatprep.subr.mxu0 %v1968
        %2032 = vmatpush1.msra.mxu0 %v1967
        %2033 = vmatprep.subr.mxu0 %v1970
        %2034 = vmatpush1.msra.mxu0 %v1969
        %2035 = vmatprep.subr.mxu0 %v1972
        %2036 = vmatpush1.msra.mxu0 %v1971
        %2037 = vmatprep.subr.mxu0 %v1974
        %2038 = vmatpush1.msra.mxu0 %v1973
        %2039 = vmatprep.subr.mxu0 %v1976
        %2040 = vmatpush1.msra.mxu0 %v1975
        %2041 = vmatprep.subr.mxu0 %v1978
        %2042 = vmatpush1.msra.mxu0 %v1977
        %2043 = vmatprep.subr.mxu0 %v1980
        %2044 = vmatpush1.msra.mxu0 %v1979
        %2045 = vmatprep.subr.mxu0 %v1982
        %2046 = vmatpush1.msra.mxu0 %v1981
        %2047 = vmatprep.subr.mxu0 %v1984
        %2048 = vmatpush1.msra.mxu0 %v1983
        %2049 = vmatprep.subr.mxu0 %v1986
        %2050 = vmatpush1.msra.mxu0 %v1985
        %2051 = vmatprep.subr.mxu0 %v1988
        %2052 = vmatpush1.msra.mxu0 %v1987
        %2053 = vmatprep.subr.mxu0 %v1990
        %2054 = vmatpush1.msra.mxu0 %v1989
        %2055 = vmatprep.subr.mxu0 %v1992
        %2056 = vmatpush1.msra.mxu0 %v1991
        %2057 = vmatprep.subr.mxu0 %v1994
        %2058 = vmatpush1.msra.mxu0 %v1993
        %2059 = vmatprep.subr.mxu0 %v1996
        %2060 = vmatpush1.msra.mxu0 %v1995
        %2061 = vmatprep.subr.mxu0 %v1998
        %2062 = vmatpush1.msra.mxu0 %v1997
        %2063 = vmatprep.subr.mxu0 %v2000
        %2064 = vmatpush1.msra.mxu0 %v1999
        %2065 = vmatprep.subr.mxu0 %v2002
        %2066 = vmatpush1.msra.mxu0 %v2001
        %2067 = vmatprep.subr.mxu0 %v2004
        %2068 = vmatpush1.msra.mxu0 %v2003
        %2069 = vmatprep.subr.mxu0 %v2006
        %2070 = vmatpush1.msra.mxu0 %v2005
        %2071 = vmatprep.subr.mxu0 %v2008
        %2072 = vmatpush1.msra.mxu0 %v2007
        %2073 = vmatprep.subr.mxu0 %v2010
        %2074 = vmatpush1.msra.mxu0 %v2009
        %2075 = vmatprep.subr.mxu0 %v2012
        %2076 = vmatpush1.msra.mxu0 %v2011
        %2077 = vmatprep.subr.mxu0 %v2014
        %2078 = vmatpush1.msra.mxu0 %v2013
        %2079 = vmatprep.subr.mxu0 %v2016
        %2080 = vmatpush1.msra.mxu0 %v2015
        %2081 = vmatprep.subr.mxu0 %v2018
        %2082 = vmatpush1.msra.mxu0 %v2017
        %2083 = vmatprep.subr.mxu0 %v2020
        %2084 = vmatpush1.msra.mxu0 %v2019
        %2085 = vmatprep.subr.mxu0 %v2022
        %2086 = vmatpush1.msra.mxu0 %v2021
        %2087 = vmatprep.subr.mxu0 %v2024
        %2088 = vmatpush1.msra.mxu0 %v2023
        %2089 = vmatprep.subr.mxu0 %v2026
        %2090 = vmatpush1.msra.mxu0 %v2025
        %2091 = vmatprep.mubr.f32.mxu0 %v1962
        %2092 = vmatmul.mubr.f32.gmra.mrb[0].mxu0 %v1961
        %v2093 = vpop.f32.mrb[0].mxu0
        %v2094 = vadd.f32 0.0, %v2093
        %v2095 = vpop.f32.mrb[0].mxu0
        %v2096 = vadd.f32 0.0, %v2095
        %2097 = vdwg.mxu0
        %v2098 = vmul.f32 %v2094, 0.0006377551
        %v2099 = vmul.f32 %v2096, 0.0006377551
        %v2100 = vmul.f32 %v2098, %v2098
        %v2101 = vmul.f32 %v2099, %v2099
        %v2104 = vrot.slane %v2100, 7
        %v2105 = vrot.slane %v2101, 7
        %v2108 = vsub.f32 %v2098, %v2104
        %v2109 = vsub.f32 %v2099, %v2105
        %v2110 = vmax.f32 %v2108, 0.0
        %v2111 = vmax.f32 %v2109, 0.0
        %v2112 = vadd.f32 %v2110, 1e-05
        %v2113 = vadd.f32 %v2111, 1e-05
        %v2114 = vrsqrt.pop %v2112
        %v2115 = vrsqrt.pop %v2113
        %v2118 = vcombine.low %v2114, %v2115
        %v2120 = vunpack.c.l.s4 1966171168
        %v2121 = vunpack.c.0.s8 %v2120
        %v2122 = vlaneseq
        %v2123 = vshrl.u32 %v2122, 7
        %v2124 = vsub.s32 %v2121, %v2123
        %v2125 = vrot.slane %v2118, %v2124
        %v2126 = vcombine.high %v2125, %v2125
        %v2128 = vunpack.c.l.s4 1966171168
        %v2129 = vunpack.c.0.s8 %v2128
        %v2130 = vlaneseq
        %v2131 = vshrl.u32 %v2130, 7
        %v2132 = vsub.s32 %v2129, %v2131
        %v2133 = vrot.slane %v2126, %v2132
        %v2135 = vmul.f32 %v417, %v2133
        %v2137 = vlaneseq
        %v2138 = vshrl.u32 %v2137, 7
        %v2139 = vsub.s32 0, %v2138
        %v2140 = vrot.slane %v2135, %v2139
        %v2141 = vlaneseq
        %v2142 = vshrl.u32 %v2141, 7
        %v2143 = vsub.s32 1, %v2142
        %v2144 = vrot.slane %v2135, %v2143
        %v2147 = vmul.f32 %v2098, %v2140
        %v2148 = vmul.f32 %v2099, %v2144
        %v2151 = vcombine.low %v2147, %v2148
        %v2153 = vunpack.c.l.s4 1966171168
        %v2154 = vunpack.c.0.s8 %v2153
        %v2155 = vlaneseq
        %v2156 = vshrl.u32 %v2155, 7
        %v2157 = vsub.s32 %v2154, %v2156
        %v2158 = vrot.slane %v2151, %v2157
        %v2160 = vunpack.c.l.s4 1966171168
        %v2161 = vunpack.c.0.s8 %v2160
        %v2162 = vlaneseq
        %v2163 = vshrl.u32 %v2162, 7
        %v2164 = vsub.s32 %v2161, %v2163
        %v2165 = vrot.slane %v2158, %v2164
        %v2167 = vsub.f32 %v419, %v2165
        %v2168 = vmul.f32 %v1815, %v2140
        %v2169 = vmul.f32 %v1816, %v2144
        %v2171 = vlaneseq
        %v2172 = vshrl.u32 %v2171, 7
        %v2173 = vsub.s32 0, %v2172
        %v2174 = vrot.slane %v2167, %v2173
        %v2175 = vlaneseq
        %v2176 = vshrl.u32 %v2175, 7
        %v2177 = vsub.s32 1, %v2176
        %v2178 = vrot.slane %v2167, %v2177
        %v2181 = vadd.f32 %v2168, %v2174
        %v2182 = vadd.f32 %v2169, %v2178
        %v2183 = vmax.f32 %v2181, 0.0
        %v2184 = vmax.f32 %v2182, 0.0
        %v2185 = vmul.f32 %v1817, %v2140
        %v2186 = vmul.f32 %v1818, %v2144
        %v2187 = vadd.f32 %v2185, %v2174
        %v2188 = vadd.f32 %v2186, %v2178
        %v2189 = vmax.f32 %v2187, 0.0
        %v2190 = vmax.f32 %v2188, 0.0
        %v2191 = vmul.f32 %v1819, %v2140
        %v2192 = vmul.f32 %v1820, %v2144
        %v2193 = vadd.f32 %v2191, %v2174
        %v2194 = vadd.f32 %v2192, %v2178
        %v2195 = vmax.f32 %v2193, 0.0
        %v2196 = vmax.f32 %v2194, 0.0
        %v2197 = vmul.f32 %v1821, %v2140
        %v2198 = vmul.f32 %v1822, %v2144
        %v2199 = vadd.f32 %v2197, %v2174
        %v2200 = vadd.f32 %v2198, %v2178
        %v2201 = vmax.f32 %v2199, 0.0
        %v2202 = vmax.f32 %v2200, 0.0
        %v2203 = vmax.f32 %v2183, %v2189
        %v2204 = vmax.f32 %v2184, %v2190
        %v2205 = vmax.f32 %v2195, %v2201
        %v2206 = vmax.f32 %v2196, %v2202
        %v2207 = vmax.f32 %v2203, %v2204
        %v2208 = vmax.f32 %v2205, %v2206
        %v2209 = vld [vmem:[%s4] sm:$0xff]
        %v2210 = vld [vmem:[%s4 + $0x8] sm:$0xff]
        %v2211 = vld [vmem:[%s4 + $0x10] sm:$0xff]
        %v2212 = vld [vmem:[%s4 + $0x18] sm:$0xff]
        %v2213 = vld [vmem:[%s4 + $0x20] sm:$0xff]
        %v2214 = vld [vmem:[%s4 + $0x28] sm:$0xff]
        %v2215 = vld [vmem:[%s4 + $0x30] sm:$0xff]
        %v2216 = vld [vmem:[%s4 + $0x38] sm:$0xff]
        %v2217 = vld [vmem:[%s4 + $0x40] sm:$0xff]
        %v2218 = vld [vmem:[%s4 + $0x48] sm:$0xff]
        %v2219 = vld [vmem:[%s4 + $0x50] sm:$0xff]
        %v2220 = vld [vmem:[%s4 + $0x58] sm:$0xff]
        %v2221 = vld [vmem:[%s4 + $0x60] sm:$0xff]
        %v2222 = vld [vmem:[%s4 + $0x68] sm:$0xff]
        %v2223 = vld [vmem:[%s4 + $0x70] sm:$0xff]
        %v2224 = vld [vmem:[%s4 + $0x78] sm:$0xff]
        %v2225 = vpack.c.bf16 %v2207, %v2207
        %v2226 = vpack.c.bf16 %v2208, %v2208
        %s2227 = scalar_lea.vmem %s4, 128
        %v2228 = vld [vmem:[%s2227] sm:$0xff]
        %v2229 = vld [vmem:[%s2227 + $0x8] sm:$0xff]
        %v2230 = vld [vmem:[%s2227 + $0x10] sm:$0xff]
        %v2231 = vld [vmem:[%s2227 + $0x18] sm:$0xff]
        %v2232 = vld [vmem:[%s2227 + $0x20] sm:$0xff]
        %v2233 = vld [vmem:[%s2227 + $0x28] sm:$0xff]
        %v2234 = vld [vmem:[%s2227 + $0x30] sm:$0xff]
        %v2235 = vld [vmem:[%s2227 + $0x38] sm:$0xff]
        %v2236 = vld [vmem:[%s2227 + $0x40] sm:$0xff]
        %v2237 = vld [vmem:[%s2227 + $0x48] sm:$0xff]
        %v2238 = vld [vmem:[%s2227 + $0x50] sm:$0xff]
        %v2239 = vld [vmem:[%s2227 + $0x58] sm:$0xff]
        %v2240 = vld [vmem:[%s2227 + $0x60] sm:$0xff]
        %v2241 = vld [vmem:[%s2227 + $0x68] sm:$0xff]
        %v2242 = vld [vmem:[%s2227 + $0x70] sm:$0xff]
        %v2243 = vld [vmem:[%s2227 + $0x78] sm:$0xff]
        %v2260 = vunpack.c.l.b16 %v2228
        %v2261 = vunpack.c.h.b16 %v2228
        %v2262 = vunpack.c.l.b16 %v2229
        %v2263 = vunpack.c.h.b16 %v2229
        %v2264 = vunpack.c.l.b16 %v2230
        %v2265 = vunpack.c.h.b16 %v2230
        %v2266 = vunpack.c.l.b16 %v2231
        %v2267 = vunpack.c.h.b16 %v2231
        %v2268 = vunpack.c.l.b16 %v2232
        %v2269 = vunpack.c.h.b16 %v2232
        %v2270 = vunpack.c.l.b16 %v2233
        %v2271 = vunpack.c.h.b16 %v2233
        %v2272 = vunpack.c.l.b16 %v2234
        %v2273 = vunpack.c.h.b16 %v2234
        %v2274 = vunpack.c.l.b16 %v2235
        %v2275 = vunpack.c.h.b16 %v2235
        %v2276 = vunpack.c.l.b16 %v2236
        %v2277 = vunpack.c.h.b16 %v2236
        %v2278 = vunpack.c.l.b16 %v2237
        %v2279 = vunpack.c.h.b16 %v2237
        %v2280 = vunpack.c.l.b16 %v2238
        %v2281 = vunpack.c.h.b16 %v2238
        %v2282 = vunpack.c.l.b16 %v2239
        %v2283 = vunpack.c.h.b16 %v2239
        %v2284 = vunpack.c.l.b16 %v2240
        %v2285 = vunpack.c.h.b16 %v2240
        %v2286 = vunpack.c.l.b16 %v2241
        %v2287 = vunpack.c.h.b16 %v2241
        %v2288 = vunpack.c.l.b16 %v2242
        %v2289 = vunpack.c.h.b16 %v2242
        %v2290 = vunpack.c.l.b16 %v2243
        %v2291 = vunpack.c.h.b16 %v2243
        %v2292 = vpack.c.b16 %v2262, %v2260
        %v2293 = vpack.c.b16 %v2263, %v2261
        %v2294 = vpack.c.b16 %v2266, %v2264
        %v2295 = vpack.c.b16 %v2267, %v2265
        %v2296 = vpack.c.b16 %v2270, %v2268
        %v2297 = vpack.c.b16 %v2271, %v2269
        %v2298 = vpack.c.b16 %v2274, %v2272
        %v2299 = vpack.c.b16 %v2275, %v2273
        %v2300 = vpack.c.b16 %v2278, %v2276
        %v2301 = vpack.c.b16 %v2279, %v2277
        %v2302 = vpack.c.b16 %v2282, %v2280
        %v2303 = vpack.c.b16 %v2283, %v2281
        %v2304 = vpack.c.b16 %v2286, %v2284
        %v2305 = vpack.c.b16 %v2287, %v2285
        %v2306 = vpack.c.b16 %v2290, %v2288
        %v2307 = vpack.c.b16 %v2291, %v2289
        %2324 = vmatprep.subr.bf16.mxu0 %v2293
        %2325 = vmatpush1.bf16.msra.mxu0 %v2292
        %2326 = vmatprep.subr.bf16.mxu0 %v2295
        %2327 = vmatpush1.bf16.msra.mxu0 %v2294
        %2328 = vmatprep.subr.bf16.mxu0 %v2297
        %2329 = vmatpush1.bf16.msra.mxu0 %v2296
        %2330 = vmatprep.subr.bf16.mxu0 %v2299
        %2331 = vmatpush1.bf16.msra.mxu0 %v2298
        %2332 = vmatprep.subr.bf16.mxu0 %v2301
        %2333 = vmatpush1.bf16.msra.mxu0 %v2300
        %2334 = vmatprep.subr.bf16.mxu0 %v2303
        %2335 = vmatpush1.bf16.msra.mxu0 %v2302
        %2336 = vmatprep.subr.bf16.mxu0 %v2305
        %2337 = vmatpush1.bf16.msra.mxu0 %v2304
        %2338 = vmatprep.subr.bf16.mxu0 %v2307
        %2339 = vmatpush1.bf16.msra.mxu0 %v2306
        %2340 = vmatprep.subr.bf16.mxu0 0
        %2341 = vmatpush1.bf16.msra.mxu0 0
        %2342 = vmatprep.subr.bf16.mxu0 0
        %2343 = vmatpush1.bf16.msra.mxu0 0
        %2344 = vmatprep.subr.bf16.mxu0 0
        %2345 = vmatpush1.bf16.msra.mxu0 0
        %2346 = vmatprep.subr.bf16.mxu0 0
        %2347 = vmatpush1.bf16.msra.mxu0 0
        %2348 = vmatprep.subr.bf16.mxu0 0
        %2349 = vmatpush1.bf16.msra.mxu0 0
        %2350 = vmatprep.subr.bf16.mxu0 0
        %2351 = vmatpush1.bf16.msra.mxu0 0
        %2352 = vmatprep.subr.bf16.mxu0 0
        %2353 = vmatpush1.bf16.msra.mxu0 0
        %2354 = vmatprep.subr.bf16.mxu0 0
        %2355 = vmatpush1.bf16.msra.mxu0 0
        %2356 = vmatprep.mubr.bf16.mxu0 0
        %2357 = vmatmul.mubr.bf16.gmra.mrb[0].mxu0 %v2226
        %v2358 = vpop.f32.mrb[0].mxu0
        %v2359 = vadd.f32 0.0, %v2358
        %v2360 = vpop.f32.mrb[0].mxu0
        %v2361 = vadd.f32 0.0, %v2360
        %v2362 = vpop.f32.mrb[0].mxu0
        %v2363 = vpop.f32.mrb[0].mxu0
        %2364 = vdwg.mxu0
        %v2381 = vunpack.c.l.b16 %v2209
        %v2382 = vunpack.c.h.b16 %v2209
        %v2383 = vunpack.c.l.b16 %v2210
        %v2384 = vunpack.c.h.b16 %v2210
        %v2385 = vunpack.c.l.b16 %v2211
        %v2386 = vunpack.c.h.b16 %v2211
        %v2387 = vunpack.c.l.b16 %v2212
        %v2388 = vunpack.c.h.b16 %v2212
        %v2389 = vunpack.c.l.b16 %v2213
        %v2390 = vunpack.c.h.b16 %v2213
        %v2391 = vunpack.c.l.b16 %v2214
        %v2392 = vunpack.c.h.b16 %v2214
        %v2393 = vunpack.c.l.b16 %v2215
        %v2394 = vunpack.c.h.b16 %v2215
        %v2395 = vunpack.c.l.b16 %v2216
        %v2396 = vunpack.c.h.b16 %v2216
        %v2397 = vunpack.c.l.b16 %v2217
        %v2398 = vunpack.c.h.b16 %v2217
        %v2399 = vunpack.c.l.b16 %v2218
        %v2400 = vunpack.c.h.b16 %v2218
        %v2401 = vunpack.c.l.b16 %v2219
        %v2402 = vunpack.c.h.b16 %v2219
        %v2403 = vunpack.c.l.b16 %v2220
        %v2404 = vunpack.c.h.b16 %v2220
        %v2405 = vunpack.c.l.b16 %v2221
        %v2406 = vunpack.c.h.b16 %v2221
        %v2407 = vunpack.c.l.b16 %v2222
        %v2408 = vunpack.c.h.b16 %v2222
        %v2409 = vunpack.c.l.b16 %v2223
        %v2410 = vunpack.c.h.b16 %v2223
        %v2411 = vunpack.c.l.b16 %v2224
        %v2412 = vunpack.c.h.b16 %v2224
        %v2413 = vpack.c.b16 %v2383, %v2381
        %v2414 = vpack.c.b16 %v2384, %v2382
        %v2415 = vpack.c.b16 %v2387, %v2385
        %v2416 = vpack.c.b16 %v2388, %v2386
        %v2417 = vpack.c.b16 %v2391, %v2389
        %v2418 = vpack.c.b16 %v2392, %v2390
        %v2419 = vpack.c.b16 %v2395, %v2393
        %v2420 = vpack.c.b16 %v2396, %v2394
        %v2421 = vpack.c.b16 %v2399, %v2397
        %v2422 = vpack.c.b16 %v2400, %v2398
        %v2423 = vpack.c.b16 %v2403, %v2401
        %v2424 = vpack.c.b16 %v2404, %v2402
        %v2425 = vpack.c.b16 %v2407, %v2405
        %v2426 = vpack.c.b16 %v2408, %v2406
        %v2427 = vpack.c.b16 %v2411, %v2409
        %v2428 = vpack.c.b16 %v2412, %v2410
        %2445 = vmatprep.subr.bf16.mxu0 %v2414
        %2446 = vmatpush1.bf16.msra.mxu0 %v2413
        %2447 = vmatprep.subr.bf16.mxu0 %v2416
        %2448 = vmatpush1.bf16.msra.mxu0 %v2415
        %2449 = vmatprep.subr.bf16.mxu0 %v2418
        %2450 = vmatpush1.bf16.msra.mxu0 %v2417
        %2451 = vmatprep.subr.bf16.mxu0 %v2420
        %2452 = vmatpush1.bf16.msra.mxu0 %v2419
        %2453 = vmatprep.subr.bf16.mxu0 %v2422
        %2454 = vmatpush1.bf16.msra.mxu0 %v2421
        %2455 = vmatprep.subr.bf16.mxu0 %v2424
        %2456 = vmatpush1.bf16.msra.mxu0 %v2423
        %2457 = vmatprep.subr.bf16.mxu0 %v2426
        %2458 = vmatpush1.bf16.msra.mxu0 %v2425
        %2459 = vmatprep.subr.bf16.mxu0 %v2428
        %2460 = vmatpush1.bf16.msra.mxu0 %v2427
        %2461 = vmatprep.subr.bf16.mxu0 0
        %2462 = vmatpush1.bf16.msra.mxu0 0
        %2463 = vmatprep.subr.bf16.mxu0 0
        %2464 = vmatpush1.bf16.msra.mxu0 0
        %2465 = vmatprep.subr.bf16.mxu0 0
        %2466 = vmatpush1.bf16.msra.mxu0 0
        %2467 = vmatprep.subr.bf16.mxu0 0
        %2468 = vmatpush1.bf16.msra.mxu0 0
        %2469 = vmatprep.subr.bf16.mxu0 0
        %2470 = vmatpush1.bf16.msra.mxu0 0
        %2471 = vmatprep.subr.bf16.mxu0 0
        %2472 = vmatpush1.bf16.msra.mxu0 0
        %2473 = vmatprep.subr.bf16.mxu0 0
        %2474 = vmatpush1.bf16.msra.mxu0 0
        %2475 = vmatprep.subr.bf16.mxu0 0
        %2476 = vmatpush1.bf16.msra.mxu0 0
        %2477 = vmatprep.mubr.bf16.mxu0 0
        %2478 = vmatmul.mubr.bf16.gmra.mrb[0].mxu0 %v2225
        %v2479 = vpop.f32.mrb[0].mxu0
        %v2480 = vadd.f32 %v2359, %v2479
        %v2481 = vpop.f32.mrb[0].mxu0
        %v2482 = vadd.f32 %v2361, %v2481
        %v2483 = vpop.f32.mrb[0].mxu0
        %v2484 = vpop.f32.mrb[0].mxu0
        %2485 = vdwg.mxu0
        %v2487 = vshrl.u32 %v2225, 16
        %v2489 = vshll.u32 %v2225, 16
        %v2491 = vrot.slane %v2489, 1
        %v2492 = vor.u32 %v2487, %v2491
        %2494 = vmatprep.subr.bf16.mxu0 %v2293
        %2495 = vmatpush1.bf16.msra.mxu0 %v2292
        %2496 = vmatprep.subr.bf16.mxu0 %v2295
        %2497 = vmatpush1.bf16.msra.mxu0 %v2294
        %2498 = vmatprep.subr.bf16.mxu0 %v2297
        %2499 = vmatpush1.bf16.msra.mxu0 %v2296
        %2500 = vmatprep.subr.bf16.mxu0 %v2299
        %2501 = vmatpush1.bf16.msra.mxu0 %v2298
        %2502 = vmatprep.subr.bf16.mxu0 %v2301
        %2503 = vmatpush1.bf16.msra.mxu0 %v2300
        %2504 = vmatprep.subr.bf16.mxu0 %v2303
        %2505 = vmatpush1.bf16.msra.mxu0 %v2302
        %2506 = vmatprep.subr.bf16.mxu0 %v2305
        %2507 = vmatpush1.bf16.msra.mxu0 %v2304
        %2508 = vmatprep.subr.bf16.mxu0 %v2307
        %2509 = vmatpush1.bf16.msra.mxu0 %v2306
        %2510 = vmatprep.subr.bf16.mxu0 0
        %2511 = vmatpush1.bf16.msra.mxu0 0
        %2512 = vmatprep.subr.bf16.mxu0 0
        %2513 = vmatpush1.bf16.msra.mxu0 0
        %2514 = vmatprep.subr.bf16.mxu0 0
        %2515 = vmatpush1.bf16.msra.mxu0 0
        %2516 = vmatprep.subr.bf16.mxu0 0
        %2517 = vmatpush1.bf16.msra.mxu0 0
        %2518 = vmatprep.subr.bf16.mxu0 0
        %2519 = vmatpush1.bf16.msra.mxu0 0
        %2520 = vmatprep.subr.bf16.mxu0 0
        %2521 = vmatpush1.bf16.msra.mxu0 0
        %2522 = vmatprep.subr.bf16.mxu0 0
        %2523 = vmatpush1.bf16.msra.mxu0 0
        %2524 = vmatprep.subr.bf16.mxu0 0
        %2525 = vmatpush1.bf16.msra.mxu0 0
        %2526 = vmatprep.mubr.bf16.mxu0 0
        %2527 = vmatmul.mubr.bf16.gmra.mrb[0].mxu0 %v2492
        %v2528 = vpop.f32.mrb[0].mxu0
        %v2529 = vadd.f32 0.0, %v2528
        %v2530 = vpop.f32.mrb[0].mxu0
        %v2531 = vadd.f32 0.0, %v2530
        %v2532 = vpop.f32.mrb[0].mxu0
        %v2533 = vpop.f32.mrb[0].mxu0
        %2534 = vdwg.mxu0
        %2535 = vmatprep.subr.bf16.mxu0 %v2414
        %2536 = vmatpush1.bf16.msra.mxu0 %v2413
        %2537 = vmatprep.subr.bf16.mxu0 %v2416
        %2538 = vmatpush1.bf16.msra.mxu0 %v2415
        %2539 = vmatprep.subr.bf16.mxu0 %v2418
        %2540 = vmatpush1.bf16.msra.mxu0 %v2417
        %2541 = vmatprep.subr.bf16.mxu0 %v2420
        %2542 = vmatpush1.bf16.msra.mxu0 %v2419
        %2543 = vmatprep.subr.bf16.mxu0 %v2422
        %2544 = vmatpush1.bf16.msra.mxu0 %v2421
        %2545 = vmatprep.subr.bf16.mxu0 %v2424
        %2546 = vmatpush1.bf16.msra.mxu0 %v2423
        %2547 = vmatprep.subr.bf16.mxu0 %v2426
        %2548 = vmatpush1.bf16.msra.mxu0 %v2425
        %2549 = vmatprep.subr.bf16.mxu0 %v2428
        %2550 = vmatpush1.bf16.msra.mxu0 %v2427
        %2551 = vmatprep.subr.bf16.mxu0 0
        %2552 = vmatpush1.bf16.msra.mxu0 0
        %2553 = vmatprep.subr.bf16.mxu0 0
        %2554 = vmatpush1.bf16.msra.mxu0 0
        %2555 = vmatprep.subr.bf16.mxu0 0
        %2556 = vmatpush1.bf16.msra.mxu0 0
        %2557 = vmatprep.subr.bf16.mxu0 0
        %2558 = vmatpush1.bf16.msra.mxu0 0
        %2559 = vmatprep.subr.bf16.mxu0 0
        %2560 = vmatpush1.bf16.msra.mxu0 0
        %2561 = vmatprep.subr.bf16.mxu0 0
        %2562 = vmatpush1.bf16.msra.mxu0 0
        %2563 = vmatprep.subr.bf16.mxu0 0
        %2564 = vmatpush1.bf16.msra.mxu0 0
        %2565 = vmatprep.subr.bf16.mxu0 0
        %2566 = vmatpush1.bf16.msra.mxu0 0
        %2567 = vmatprep.mubr.bf16.mxu0 0
        %2568 = vmatmul.mubr.bf16.gmra.mrb[0].mxu0 %v2226
        %v2569 = vpop.f32.mrb[0].mxu0
        %v2570 = vadd.f32 %v2529, %v2569
        %v2571 = vpop.f32.mrb[0].mxu0
        %v2572 = vadd.f32 %v2531, %v2571
        %v2573 = vpop.f32.mrb[0].mxu0
        %v2574 = vpop.f32.mrb[0].mxu0
        %2575 = vdwg.mxu0
        %s2576 = scalar_lea.vmem %s4, 256
        %v2577 = vld [vmem:[%s2576] sm:$0xff]
        %v2578 = vld [vmem:[%s2576 + $0x8] sm:$0xff]
        %v2579 = vld [vmem:[%s2576 + $0x10] sm:$0xff]
        %v2580 = vld [vmem:[%s2576 + $0x18] sm:$0xff]
        %v2581 = vld [vmem:[%s2576 + $0x20] sm:$0xff]
        %v2582 = vld [vmem:[%s2576 + $0x28] sm:$0xff]
        %v2583 = vld [vmem:[%s2576 + $0x30] sm:$0xff]
        %v2584 = vld [vmem:[%s2576 + $0x38] sm:$0xff]
        %v2585 = vld [vmem:[%s2576 + $0x40] sm:$0xff]
        %v2586 = vld [vmem:[%s2576 + $0x48] sm:$0xff]
        %v2587 = vld [vmem:[%s2576 + $0x50] sm:$0xff]
        %v2588 = vld [vmem:[%s2576 + $0x58] sm:$0xff]
        %v2589 = vld [vmem:[%s2576 + $0x60] sm:$0xff]
        %v2590 = vld [vmem:[%s2576 + $0x68] sm:$0xff]
        %v2591 = vld [vmem:[%s2576 + $0x70] sm:$0xff]
        %v2592 = vld [vmem:[%s2576 + $0x78] sm:$0xff]
        %v2609 = vunpack.c.l.b16 %v2577
        %v2610 = vunpack.c.h.b16 %v2577
        %v2611 = vunpack.c.l.b16 %v2578
        %v2612 = vunpack.c.h.b16 %v2578
        %v2613 = vunpack.c.l.b16 %v2579
        %v2614 = vunpack.c.h.b16 %v2579
        %v2615 = vunpack.c.l.b16 %v2580
        %v2616 = vunpack.c.h.b16 %v2580
        %v2617 = vunpack.c.l.b16 %v2581
        %v2618 = vunpack.c.h.b16 %v2581
        %v2619 = vunpack.c.l.b16 %v2582
        %v2620 = vunpack.c.h.b16 %v2582
        %v2621 = vunpack.c.l.b16 %v2583
        %v2622 = vunpack.c.h.b16 %v2583
        %v2623 = vunpack.c.l.b16 %v2584
        %v2624 = vunpack.c.h.b16 %v2584
        %v2625 = vunpack.c.l.b16 %v2585
        %v2626 = vunpack.c.h.b16 %v2585
        %v2627 = vunpack.c.l.b16 %v2586
        %v2628 = vunpack.c.h.b16 %v2586
        %v2629 = vunpack.c.l.b16 %v2587
        %v2630 = vunpack.c.h.b16 %v2587
        %v2631 = vunpack.c.l.b16 %v2588
        %v2632 = vunpack.c.h.b16 %v2588
        %v2633 = vunpack.c.l.b16 %v2589
        %v2634 = vunpack.c.h.b16 %v2589
        %v2635 = vunpack.c.l.b16 %v2590
        %v2636 = vunpack.c.h.b16 %v2590
        %v2637 = vunpack.c.l.b16 %v2591
        %v2638 = vunpack.c.h.b16 %v2591
        %v2639 = vunpack.c.l.b16 %v2592
        %v2640 = vunpack.c.h.b16 %v2592
        %v2641 = vpack.c.b16 %v2611, %v2609
        %v2642 = vpack.c.b16 %v2612, %v2610
        %v2643 = vpack.c.b16 %v2615, %v2613
        %v2644 = vpack.c.b16 %v2616, %v2614
        %v2645 = vpack.c.b16 %v2619, %v2617
        %v2646 = vpack.c.b16 %v2620, %v2618
        %v2647 = vpack.c.b16 %v2623, %v2621
        %v2648 = vpack.c.b16 %v2624, %v2622
        %v2649 = vpack.c.b16 %v2627, %v2625
        %v2650 = vpack.c.b16 %v2628, %v2626
        %v2651 = vpack.c.b16 %v2631, %v2629
        %v2652 = vpack.c.b16 %v2632, %v2630
        %v2653 = vpack.c.b16 %v2635, %v2633
        %v2654 = vpack.c.b16 %v2636, %v2634
        %v2655 = vpack.c.b16 %v2639, %v2637
        %v2656 = vpack.c.b16 %v2640, %v2638
        %2673 = vmatprep.subr.bf16.mxu0 %v2642
        %2674 = vmatpush1.bf16.msra.mxu0 %v2641
        %2675 = vmatprep.subr.bf16.mxu0 %v2644
        %2676 = vmatpush1.bf16.msra.mxu0 %v2643
        %2677 = vmatprep.subr.bf16.mxu0 %v2646
        %2678 = vmatpush1.bf16.msra.mxu0 %v2645
        %2679 = vmatprep.subr.bf16.mxu0 %v2648
        %2680 = vmatpush1.bf16.msra.mxu0 %v2647
        %2681 = vmatprep.subr.bf16.mxu0 %v2650
        %2682 = vmatpush1.bf16.msra.mxu0 %v2649
        %2683 = vmatprep.subr.bf16.mxu0 %v2652
        %2684 = vmatpush1.bf16.msra.mxu0 %v2651
        %2685 = vmatprep.subr.bf16.mxu0 %v2654
        %2686 = vmatpush1.bf16.msra.mxu0 %v2653
        %2687 = vmatprep.subr.bf16.mxu0 %v2656
        %2688 = vmatpush1.bf16.msra.mxu0 %v2655
        %2689 = vmatprep.subr.bf16.mxu0 0
        %2690 = vmatpush1.bf16.msra.mxu0 0
        %2691 = vmatprep.subr.bf16.mxu0 0
        %2692 = vmatpush1.bf16.msra.mxu0 0
        %2693 = vmatprep.subr.bf16.mxu0 0
        %2694 = vmatpush1.bf16.msra.mxu0 0
        %2695 = vmatprep.subr.bf16.mxu0 0
        %2696 = vmatpush1.bf16.msra.mxu0 0
        %2697 = vmatprep.subr.bf16.mxu0 0
        %2698 = vmatpush1.bf16.msra.mxu0 0
        %2699 = vmatprep.subr.bf16.mxu0 0
        %2700 = vmatpush1.bf16.msra.mxu0 0
        %2701 = vmatprep.subr.bf16.mxu0 0
        %2702 = vmatpush1.bf16.msra.mxu0 0
        %2703 = vmatprep.subr.bf16.mxu0 0
        %2704 = vmatpush1.bf16.msra.mxu0 0
        %2705 = vmatprep.mubr.bf16.mxu0 0
        %2706 = vmatmul.mubr.bf16.gmra.mrb[0].mxu0 %v2492
        %v2707 = vpop.f32.mrb[0].mxu0
        %v2708 = vadd.f32 0.0, %v2707
        %v2709 = vpop.f32.mrb[0].mxu0
        %v2710 = vadd.f32 0.0, %v2709
        %v2711 = vpop.f32.mrb[0].mxu0
        %v2712 = vpop.f32.mrb[0].mxu0
        %2713 = vdwg.mxu0
        %v2714 = vadd.f32 %v2480, %v2708
        %v2715 = vadd.f32 %v2482, %v2710
        %v2717 = vshrl.u32 %v2226, 16
        %v2719 = vshll.u32 %v2226, 16
        %v2721 = vrot.slane %v2719, 1
        %v2722 = vor.u32 %v2717, %v2721
        %2724 = vmatprep.subr.bf16.mxu0 %v2642
        %2725 = vmatpush1.bf16.msra.mxu0 %v2641
        %2726 = vmatprep.subr.bf16.mxu0 %v2644
        %2727 = vmatpush1.bf16.msra.mxu0 %v2643
        %2728 = vmatprep.subr.bf16.mxu0 %v2646
        %2729 = vmatpush1.bf16.msra.mxu0 %v2645
        %2730 = vmatprep.subr.bf16.mxu0 %v2648
        %2731 = vmatpush1.bf16.msra.mxu0 %v2647
        %2732 = vmatprep.subr.bf16.mxu0 %v2650
        %2733 = vmatpush1.bf16.msra.mxu0 %v2649
        %2734 = vmatprep.subr.bf16.mxu0 %v2652
        %2735 = vmatpush1.bf16.msra.mxu0 %v2651
        %2736 = vmatprep.subr.bf16.mxu0 %v2654
        %2737 = vmatpush1.bf16.msra.mxu0 %v2653
        %2738 = vmatprep.subr.bf16.mxu0 %v2656
        %2739 = vmatpush1.bf16.msra.mxu0 %v2655
        %2740 = vmatprep.subr.bf16.mxu0 0
        %2741 = vmatpush1.bf16.msra.mxu0 0
        %2742 = vmatprep.subr.bf16.mxu0 0
        %2743 = vmatpush1.bf16.msra.mxu0 0
        %2744 = vmatprep.subr.bf16.mxu0 0
        %2745 = vmatpush1.bf16.msra.mxu0 0
        %2746 = vmatprep.subr.bf16.mxu0 0
        %2747 = vmatpush1.bf16.msra.mxu0 0
        %2748 = vmatprep.subr.bf16.mxu0 0
        %2749 = vmatpush1.bf16.msra.mxu0 0
        %2750 = vmatprep.subr.bf16.mxu0 0
        %2751 = vmatpush1.bf16.msra.mxu0 0
        %2752 = vmatprep.subr.bf16.mxu0 0
        %2753 = vmatpush1.bf16.msra.mxu0 0
        %2754 = vmatprep.subr.bf16.mxu0 0
        %2755 = vmatpush1.bf16.msra.mxu0 0
        %2756 = vmatprep.mubr.bf16.mxu0 0
        %2757 = vmatmul.mubr.bf16.gmra.mrb[0].mxu0 %v2722
        %v2758 = vpop.f32.mrb[0].mxu0
        %v2759 = vadd.f32 0.0, %v2758
        %v2760 = vpop.f32.mrb[0].mxu0
        %v2761 = vadd.f32 0.0, %v2760
        %v2762 = vpop.f32.mrb[0].mxu0
        %v2763 = vpop.f32.mrb[0].mxu0
        %2764 = vdwg.mxu0
        %v2765 = vadd.f32 %v2570, %v2759
        %v2766 = vadd.f32 %v2572, %v2761
        %s2767 = scalar_lea.vmem %s4, 384
        %v2768 = vld [vmem:[%s2767] sm:$0xff]
        %v2769 = vld [vmem:[%s2767 + $0x8] sm:$0xff]
        %v2770 = vld [vmem:[%s2767 + $0x10] sm:$0xff]
        %v2771 = vld [vmem:[%s2767 + $0x18] sm:$0xff]
        %v2772 = vld [vmem:[%s2767 + $0x20] sm:$0xff]
        %v2773 = vld [vmem:[%s2767 + $0x28] sm:$0xff]
        %v2774 = vld [vmem:[%s2767 + $0x30] sm:$0xff]
        %v2775 = vld [vmem:[%s2767 + $0x38] sm:$0xff]
        %v2776 = vld [vmem:[%s2767 + $0x40] sm:$0xff]
        %v2777 = vld [vmem:[%s2767 + $0x48] sm:$0xff]
        %v2778 = vld [vmem:[%s2767 + $0x50] sm:$0xff]
        %v2779 = vld [vmem:[%s2767 + $0x58] sm:$0xff]
        %v2780 = vld [vmem:[%s2767 + $0x60] sm:$0xff]
        %v2781 = vld [vmem:[%s2767 + $0x68] sm:$0xff]
        %v2782 = vld [vmem:[%s2767 + $0x70] sm:$0xff]
        %v2783 = vld [vmem:[%s2767 + $0x78] sm:$0xff]
        %v2800 = vunpack.c.l.b16 %v2768
        %v2801 = vunpack.c.h.b16 %v2768
        %v2802 = vunpack.c.l.b16 %v2769
        %v2803 = vunpack.c.h.b16 %v2769
        %v2804 = vunpack.c.l.b16 %v2770
        %v2805 = vunpack.c.h.b16 %v2770
        %v2806 = vunpack.c.l.b16 %v2771
        %v2807 = vunpack.c.h.b16 %v2771
        %v2808 = vunpack.c.l.b16 %v2772
        %v2809 = vunpack.c.h.b16 %v2772
        %v2810 = vunpack.c.l.b16 %v2773
        %v2811 = vunpack.c.h.b16 %v2773
        %v2812 = vunpack.c.l.b16 %v2774
        %v2813 = vunpack.c.h.b16 %v2774
        %v2814 = vunpack.c.l.b16 %v2775
        %v2815 = vunpack.c.h.b16 %v2775
        %v2816 = vunpack.c.l.b16 %v2776
        %v2817 = vunpack.c.h.b16 %v2776
        %v2818 = vunpack.c.l.b16 %v2777
        %v2819 = vunpack.c.h.b16 %v2777
        %v2820 = vunpack.c.l.b16 %v2778
        %v2821 = vunpack.c.h.b16 %v2778
        %v2822 = vunpack.c.l.b16 %v2779
        %v2823 = vunpack.c.h.b16 %v2779
        %v2824 = vunpack.c.l.b16 %v2780
        %v2825 = vunpack.c.h.b16 %v2780
        %v2826 = vunpack.c.l.b16 %v2781
        %v2827 = vunpack.c.h.b16 %v2781
        %v2828 = vunpack.c.l.b16 %v2782
        %v2829 = vunpack.c.h.b16 %v2782
        %v2830 = vunpack.c.l.b16 %v2783
        %v2831 = vunpack.c.h.b16 %v2783
        %v2832 = vpack.c.b16 %v2802, %v2800
        %v2833 = vpack.c.b16 %v2803, %v2801
        %v2834 = vpack.c.b16 %v2806, %v2804
        %v2835 = vpack.c.b16 %v2807, %v2805
        %v2836 = vpack.c.b16 %v2810, %v2808
        %v2837 = vpack.c.b16 %v2811, %v2809
        %v2838 = vpack.c.b16 %v2814, %v2812
        %v2839 = vpack.c.b16 %v2815, %v2813
        %v2840 = vpack.c.b16 %v2818, %v2816
        %v2841 = vpack.c.b16 %v2819, %v2817
        %v2842 = vpack.c.b16 %v2822, %v2820
        %v2843 = vpack.c.b16 %v2823, %v2821
        %v2844 = vpack.c.b16 %v2826, %v2824
        %v2845 = vpack.c.b16 %v2827, %v2825
        %v2846 = vpack.c.b16 %v2830, %v2828
        %v2847 = vpack.c.b16 %v2831, %v2829
        %2864 = vmatprep.subr.bf16.mxu0 %v2833
        %2865 = vmatpush1.bf16.msra.mxu0 %v2832
        %2866 = vmatprep.subr.bf16.mxu0 %v2835
        %2867 = vmatpush1.bf16.msra.mxu0 %v2834
        %2868 = vmatprep.subr.bf16.mxu0 %v2837
        %2869 = vmatpush1.bf16.msra.mxu0 %v2836
        %2870 = vmatprep.subr.bf16.mxu0 %v2839
        %2871 = vmatpush1.bf16.msra.mxu0 %v2838
        %2872 = vmatprep.subr.bf16.mxu0 %v2841
        %2873 = vmatpush1.bf16.msra.mxu0 %v2840
        %2874 = vmatprep.subr.bf16.mxu0 %v2843
        %2875 = vmatpush1.bf16.msra.mxu0 %v2842
        %2876 = vmatprep.subr.bf16.mxu0 %v2845
        %2877 = vmatpush1.bf16.msra.mxu0 %v2844
        %2878 = vmatprep.subr.bf16.mxu0 %v2847
        %2879 = vmatpush1.bf16.msra.mxu0 %v2846
        %2880 = vmatprep.subr.bf16.mxu0 0
        %2881 = vmatpush1.bf16.msra.mxu0 0
        %2882 = vmatprep.subr.bf16.mxu0 0
        %2883 = vmatpush1.bf16.msra.mxu0 0
        %2884 = vmatprep.subr.bf16.mxu0 0
        %2885 = vmatpush1.bf16.msra.mxu0 0
        %2886 = vmatprep.subr.bf16.mxu0 0
        %2887 = vmatpush1.bf16.msra.mxu0 0
        %2888 = vmatprep.subr.bf16.mxu0 0
        %2889 = vmatpush1.bf16.msra.mxu0 0
        %2890 = vmatprep.subr.bf16.mxu0 0
        %2891 = vmatpush1.bf16.msra.mxu0 0
        %2892 = vmatprep.subr.bf16.mxu0 0
        %2893 = vmatpush1.bf16.msra.mxu0 0
        %2894 = vmatprep.subr.bf16.mxu0 0
        %2895 = vmatpush1.bf16.msra.mxu0 0
        %2896 = vmatprep.mubr.bf16.mxu0 0
        %2897 = vmatmul.mubr.bf16.gmra.mrb[0].mxu0 %v2722
        %v2898 = vpop.f32.mrb[0].mxu0
        %v2899 = vadd.f32 0.0, %v2898
        %v2900 = vpop.f32.mrb[0].mxu0
        %v2901 = vadd.f32 0.0, %v2900
        %v2902 = vpop.f32.mrb[0].mxu0
        %v2903 = vpop.f32.mrb[0].mxu0
        %2904 = vdwg.mxu0
        %v2905 = vadd.f32 %v2714, %v2899
        %v2906 = vadd.f32 %v2715, %v2901
        %v2908 = vrot.slane %v2225, 1
        %2910 = vmatprep.subr.bf16.mxu0 %v2833
        %2911 = vmatpush1.bf16.msra.mxu0 %v2832
        %2912 = vmatprep.subr.bf16.mxu0 %v2835
        %2913 = vmatpush1.bf16.msra.mxu0 %v2834
        %2914 = vmatprep.subr.bf16.mxu0 %v2837
        %2915 = vmatpush1.bf16.msra.mxu0 %v2836
        %2916 = vmatprep.subr.bf16.mxu0 %v2839
        %2917 = vmatpush1.bf16.msra.mxu0 %v2838
        %2918 = vmatprep.subr.bf16.mxu0 %v2841
        %2919 = vmatpush1.bf16.msra.mxu0 %v2840
        %2920 = vmatprep.subr.bf16.mxu0 %v2843
        %2921 = vmatpush1.bf16.msra.mxu0 %v2842
        %2922 = vmatprep.subr.bf16.mxu0 %v2845
        %2923 = vmatpush1.bf16.msra.mxu0 %v2844
        %2924 = vmatprep.subr.bf16.mxu0 %v2847
        %2925 = vmatpush1.bf16.msra.mxu0 %v2846
        %2926 = vmatprep.subr.bf16.mxu0 0
        %2927 = vmatpush1.bf16.msra.mxu0 0
        %2928 = vmatprep.subr.bf16.mxu0 0
        %2929 = vmatpush1.bf16.msra.mxu0 0
        %2930 = vmatprep.subr.bf16.mxu0 0
        %2931 = vmatpush1.bf16.msra.mxu0 0
        %2932 = vmatprep.subr.bf16.mxu0 0
        %2933 = vmatpush1.bf16.msra.mxu0 0
        %2934 = vmatprep.subr.bf16.mxu0 0
        %2935 = vmatpush1.bf16.msra.mxu0 0
        %2936 = vmatprep.subr.bf16.mxu0 0
        %2937 = vmatpush1.bf16.msra.mxu0 0
        %2938 = vmatprep.subr.bf16.mxu0 0
        %2939 = vmatpush1.bf16.msra.mxu0 0
        %2940 = vmatprep.subr.bf16.mxu0 0
        %2941 = vmatpush1.bf16.msra.mxu0 0
        %2942 = vmatprep.mubr.bf16.mxu0 0
        %2943 = vmatmul.mubr.bf16.gmra.mrb[0].mxu0 %v2908
        %v2944 = vpop.f32.mrb[0].mxu0
        %v2945 = vadd.f32 0.0, %v2944
        %v2946 = vpop.f32.mrb[0].mxu0
        %v2947 = vadd.f32 0.0, %v2946
        %v2948 = vpop.f32.mrb[0].mxu0
        %v2949 = vpop.f32.mrb[0].mxu0
        %2950 = vdwg.mxu0
        %v2951 = vadd.f32 %v2765, %v2945
        %v2952 = vadd.f32 %v2766, %v2947
        %s2953 = scalar_lea.vmem %s4, 512
        %v2954 = vld [vmem:[%s2953] sm:$0xff]
        %v2955 = vld [vmem:[%s2953 + $0x8] sm:$0xff]
        %v2956 = vld [vmem:[%s2953 + $0x10] sm:$0xff]
        %v2957 = vld [vmem:[%s2953 + $0x18] sm:$0xff]
        %v2958 = vld [vmem:[%s2953 + $0x20] sm:$0xff]
        %v2959 = vld [vmem:[%s2953 + $0x28] sm:$0xff]
        %v2960 = vld [vmem:[%s2953 + $0x30] sm:$0xff]
        %v2961 = vld [vmem:[%s2953 + $0x38] sm:$0xff]
        %v2962 = vld [vmem:[%s2953 + $0x40] sm:$0xff]
        %v2963 = vld [vmem:[%s2953 + $0x48] sm:$0xff]
        %v2964 = vld [vmem:[%s2953 + $0x50] sm:$0xff]
        %v2965 = vld [vmem:[%s2953 + $0x58] sm:$0xff]
        %v2966 = vld [vmem:[%s2953 + $0x60] sm:$0xff]
        %v2967 = vld [vmem:[%s2953 + $0x68] sm:$0xff]
        %v2968 = vld [vmem:[%s2953 + $0x70] sm:$0xff]
        %v2969 = vld [vmem:[%s2953 + $0x78] sm:$0xff]
        %v2986 = vunpack.c.l.b16 %v2954
        %v2987 = vunpack.c.h.b16 %v2954
        %v2988 = vunpack.c.l.b16 %v2955
        %v2989 = vunpack.c.h.b16 %v2955
        %v2990 = vunpack.c.l.b16 %v2956
        %v2991 = vunpack.c.h.b16 %v2956
        %v2992 = vunpack.c.l.b16 %v2957
        %v2993 = vunpack.c.h.b16 %v2957
        %v2994 = vunpack.c.l.b16 %v2958
        %v2995 = vunpack.c.h.b16 %v2958
        %v2996 = vunpack.c.l.b16 %v2959
        %v2997 = vunpack.c.h.b16 %v2959
        %v2998 = vunpack.c.l.b16 %v2960
        %v2999 = vunpack.c.h.b16 %v2960
        %v3000 = vunpack.c.l.b16 %v2961
        %v3001 = vunpack.c.h.b16 %v2961
        %v3002 = vunpack.c.l.b16 %v2962
        %v3003 = vunpack.c.h.b16 %v2962
        %v3004 = vunpack.c.l.b16 %v2963
        %v3005 = vunpack.c.h.b16 %v2963
        %v3006 = vunpack.c.l.b16 %v2964
        %v3007 = vunpack.c.h.b16 %v2964
        %v3008 = vunpack.c.l.b16 %v2965
        %v3009 = vunpack.c.h.b16 %v2965
        %v3010 = vunpack.c.l.b16 %v2966
        %v3011 = vunpack.c.h.b16 %v2966
        %v3012 = vunpack.c.l.b16 %v2967
        %v3013 = vunpack.c.h.b16 %v2967
        %v3014 = vunpack.c.l.b16 %v2968
        %v3015 = vunpack.c.h.b16 %v2968
        %v3016 = vunpack.c.l.b16 %v2969
        %v3017 = vunpack.c.h.b16 %v2969
        %v3018 = vpack.c.b16 %v2988, %v2986
        %v3019 = vpack.c.b16 %v2989, %v2987
        %v3020 = vpack.c.b16 %v2992, %v2990
        %v3021 = vpack.c.b16 %v2993, %v2991
        %v3022 = vpack.c.b16 %v2996, %v2994
        %v3023 = vpack.c.b16 %v2997, %v2995
        %v3024 = vpack.c.b16 %v3000, %v2998
        %v3025 = vpack.c.b16 %v3001, %v2999
        %v3026 = vpack.c.b16 %v3004, %v3002
        %v3027 = vpack.c.b16 %v3005, %v3003
        %v3028 = vpack.c.b16 %v3008, %v3006
        %v3029 = vpack.c.b16 %v3009, %v3007
        %v3030 = vpack.c.b16 %v3012, %v3010
        %v3031 = vpack.c.b16 %v3013, %v3011
        %v3032 = vpack.c.b16 %v3016, %v3014
        %v3033 = vpack.c.b16 %v3017, %v3015
        %3050 = vmatprep.subr.bf16.mxu0 %v3019
        %3051 = vmatpush1.bf16.msra.mxu0 %v3018
        %3052 = vmatprep.subr.bf16.mxu0 %v3021
        %3053 = vmatpush1.bf16.msra.mxu0 %v3020
        %3054 = vmatprep.subr.bf16.mxu0 %v3023
        %3055 = vmatpush1.bf16.msra.mxu0 %v3022
        %3056 = vmatprep.subr.bf16.mxu0 %v3025
        %3057 = vmatpush1.bf16.msra.mxu0 %v3024
        %3058 = vmatprep.subr.bf16.mxu0 %v3027
        %3059 = vmatpush1.bf16.msra.mxu0 %v3026
        %3060 = vmatprep.subr.bf16.mxu0 %v3029
        %3061 = vmatpush1.bf16.msra.mxu0 %v3028
        %3062 = vmatprep.subr.bf16.mxu0 %v3031
        %3063 = vmatpush1.bf16.msra.mxu0 %v3030
        %3064 = vmatprep.subr.bf16.mxu0 %v3033
        %3065 = vmatpush1.bf16.msra.mxu0 %v3032
        %3066 = vmatprep.subr.bf16.mxu0 0
        %3067 = vmatpush1.bf16.msra.mxu0 0
        %3068 = vmatprep.subr.bf16.mxu0 0
        %3069 = vmatpush1.bf16.msra.mxu0 0
        %3070 = vmatprep.subr.bf16.mxu0 0
        %3071 = vmatpush1.bf16.msra.mxu0 0
        %3072 = vmatprep.subr.bf16.mxu0 0
        %3073 = vmatpush1.bf16.msra.mxu0 0
        %3074 = vmatprep.subr.bf16.mxu0 0
        %3075 = vmatpush1.bf16.msra.mxu0 0
        %3076 = vmatprep.subr.bf16.mxu0 0
        %3077 = vmatpush1.bf16.msra.mxu0 0
        %3078 = vmatprep.subr.bf16.mxu0 0
        %3079 = vmatpush1.bf16.msra.mxu0 0
        %3080 = vmatprep.subr.bf16.mxu0 0
        %3081 = vmatpush1.bf16.msra.mxu0 0
        %3082 = vmatprep.mubr.bf16.mxu0 0
        %3083 = vmatmul.mubr.bf16.gmra.mrb[0].mxu0 %v2908
        %v3084 = vpop.f32.mrb[0].mxu0
        %v3085 = vadd.f32 0.0, %v3084
        %v3086 = vpop.f32.mrb[0].mxu0
        %v3087 = vadd.f32 0.0, %v3086
        %v3088 = vpop.f32.mrb[0].mxu0
        %v3089 = vpop.f32.mrb[0].mxu0
        %3090 = vdwg.mxu0
        %v3091 = vadd.f32 %v2905, %v3085
        %v3092 = vadd.f32 %v2906, %v3087
        %v3094 = vrot.slane %v2226, 1
        %3096 = vmatprep.subr.bf16.mxu0 %v3019
        %3097 = vmatpush1.bf16.msra.mxu0 %v3018
        %3098 = vmatprep.subr.bf16.mxu0 %v3021
        %3099 = vmatpush1.bf16.msra.mxu0 %v3020
        %3100 = vmatprep.subr.bf16.mxu0 %v3023
        %3101 = vmatpush1.bf16.msra.mxu0 %v3022
        %3102 = vmatprep.subr.bf16.mxu0 %v3025
        %3103 = vmatpush1.bf16.msra.mxu0 %v3024
        %3104 = vmatprep.subr.bf16.mxu0 %v3027
        %3105 = vmatpush1.bf16.msra.mxu0 %v3026
        %3106 = vmatprep.subr.bf16.mxu0 %v3029
        %3107 = vmatpush1.bf16.msra.mxu0 %v3028
        %3108 = vmatprep.subr.bf16.mxu0 %v3031
        %3109 = vmatpush1.bf16.msra.mxu0 %v3030
        %3110 = vmatprep.subr.bf16.mxu0 %v3033
        %3111 = vmatpush1.bf16.msra.mxu0 %v3032
        %3112 = vmatprep.subr.bf16.mxu0 0
        %3113 = vmatpush1.bf16.msra.mxu0 0
        %3114 = vmatprep.subr.bf16.mxu0 0
        %3115 = vmatpush1.bf16.msra.mxu0 0
        %3116 = vmatprep.subr.bf16.mxu0 0
        %3117 = vmatpush1.bf16.msra.mxu0 0
        %3118 = vmatprep.subr.bf16.mxu0 0
        %3119 = vmatpush1.bf16.msra.mxu0 0
        %3120 = vmatprep.subr.bf16.mxu0 0
        %3121 = vmatpush1.bf16.msra.mxu0 0
        %3122 = vmatprep.subr.bf16.mxu0 0
        %3123 = vmatpush1.bf16.msra.mxu0 0
        %3124 = vmatprep.subr.bf16.mxu0 0
        %3125 = vmatpush1.bf16.msra.mxu0 0
        %3126 = vmatprep.subr.bf16.mxu0 0
        %3127 = vmatpush1.bf16.msra.mxu0 0
        %3128 = vmatprep.mubr.bf16.mxu0 0
        %3129 = vmatmul.mubr.bf16.gmra.mrb[0].mxu0 %v3094
        %v3130 = vpop.f32.mrb[0].mxu0
        %v3131 = vadd.f32 0.0, %v3130
        %v3132 = vpop.f32.mrb[0].mxu0
        %v3133 = vadd.f32 0.0, %v3132
        %v3134 = vpop.f32.mrb[0].mxu0
        %v3135 = vpop.f32.mrb[0].mxu0
        %3136 = vdwg.mxu0
        %v3137 = vadd.f32 %v2951, %v3131
        %v3138 = vadd.f32 %v2952, %v3133
        %v3140 = vlaneseq
        %v3141 = vshrl.u32 %v3140, 7
        %v3142 = vsub.s32 0, %v3141
        %v3143 = vrot.slane %v420, %v3142
        %v3144 = vlaneseq
        %v3145 = vshrl.u32 %v3144, 7
        %v3146 = vsub.s32 1, %v3145
        %v3147 = vrot.slane %v420, %v3146
        %v3150 = vadd.f32 %v3091, %v3143
        %v3151 = vadd.f32 %v3092, %v3147
        %v3152 = vadd.f32 %v3137, %v3143
        %v3153 = vadd.f32 %v3138, %v3147
        %vm3154 = vcmask 1044480
        %v3155 = vsel %vm3154, %v3150, 0.0
        %v3156 = vrot.slane %v3155, 4
        %v3157 = vadd.f32 %v3155, %v3156
        %v3158 = vrot.slane %v3157, 2
        %v3159 = vadd.f32 %v3157, %v3158
        %v3160 = vrot.slane %v3159, 1
        %v3161 = vadd.f32 %v3159, %v3160
        %v3162 = vsel %vm3154, %v3151, 0.0
        %v3163 = vrot.slane %v3162, 4
        %v3164 = vadd.f32 %v3162, %v3163
        %v3165 = vrot.slane %v3164, 2
        %v3166 = vadd.f32 %v3164, %v3165
        %v3167 = vrot.slane %v3166, 1
        %v3168 = vadd.f32 %v3166, %v3167
        %v3169 = vadd.f32 %v3161, 0.0
        %v3170 = vadd.f32 %v3168, 0.0
        %v3171 = vsel %vm3154, %v3152, 0.0
        %v3172 = vrot.slane %v3171, 4
        %v3173 = vadd.f32 %v3171, %v3172
        %v3174 = vrot.slane %v3173, 2
        %v3175 = vadd.f32 %v3173, %v3174
        %v3176 = vrot.slane %v3175, 1
        %v3177 = vadd.f32 %v3175, %v3176
        %v3178 = vsel %vm3154, %v3153, 0.0
        %v3179 = vrot.slane %v3178, 4
        %v3180 = vadd.f32 %v3178, %v3179
        %v3181 = vrot.slane %v3180, 2
        %v3182 = vadd.f32 %v3180, %v3181
        %v3183 = vrot.slane %v3182, 1
        %v3184 = vadd.f32 %v3182, %v3183
        %v3185 = vadd.f32 %v3169, %v3177
        %v3186 = vadd.f32 %v3170, %v3184
        %v3187 = vmul.f32 %v3150, %v3150
        %v3188 = vmul.f32 %v3151, %v3151
        %v3189 = vsel %vm3154, %v3187, 0.0
        %v3190 = vrot.slane %v3189, 4
        %v3191 = vadd.f32 %v3189, %v3190
        %v3192 = vrot.slane %v3191, 2
        %v3193 = vadd.f32 %v3191, %v3192
        %v3194 = vrot.slane %v3193, 1
        %v3195 = vadd.f32 %v3193, %v3194
        %v3196 = vsel %vm3154, %v3188, 0.0
        %v3197 = vrot.slane %v3196, 4
        %v3198 = vadd.f32 %v3196, %v3197
        %v3199 = vrot.slane %v3198, 2
        %v3200 = vadd.f32 %v3198, %v3199
        %v3201 = vrot.slane %v3200, 1
        %v3202 = vadd.f32 %v3200, %v3201
        %v3203 = vadd.f32 %v3195, 0.0
        %v3204 = vadd.f32 %v3202, 0.0
        %v3205 = vmul.f32 %v3152, %v3152
        %v3206 = vmul.f32 %v3153, %v3153
        %v3207 = vsel %vm3154, %v3205, 0.0
        %v3208 = vrot.slane %v3207, 4
        %v3209 = vadd.f32 %v3207, %v3208
        %v3210 = vrot.slane %v3209, 2
        %v3211 = vadd.f32 %v3209, %v3210
        %v3212 = vrot.slane %v3211, 1
        %v3213 = vadd.f32 %v3211, %v3212
        %v3214 = vsel %vm3154, %v3206, 0.0
        %v3215 = vrot.slane %v3214, 4
        %v3216 = vadd.f32 %v3214, %v3215
        %v3217 = vrot.slane %v3216, 2
        %v3218 = vadd.f32 %v3216, %v3217
        %v3219 = vrot.slane %v3218, 1
        %v3220 = vadd.f32 %v3218, %v3219
        %v3221 = vadd.f32 %v3203, %v3213
        %v3222 = vadd.f32 %v3204, %v3220
        %v3223 = vsel %vm1960, %v3185, %v3221
        %v3224 = vsel %vm1960, %v3186, %v3222
        %v3225 = vld [vmem:[#allocation3] sm:$0xff]
        %v3226 = vld [vmem:[#allocation3 + $0x8] sm:$0xff]
        %v3227 = vld [vmem:[#allocation3 + $0x10] sm:$0xff]
        %v3228 = vld [vmem:[#allocation3 + $0x18] sm:$0xff]
        %v3229 = vld [vmem:[#allocation3 + $0x20] sm:$0xff]
        %v3230 = vld [vmem:[#allocation3 + $0x28] sm:$0xff]
        %v3231 = vld [vmem:[#allocation3 + $0x30] sm:$0xff]
        %v3232 = vld [vmem:[#allocation3 + $0x38] sm:$0xff]
        %v3233 = vld [vmem:[#allocation3 + $0x40] sm:$0xff]
        %v3234 = vld [vmem:[#allocation3 + $0x48] sm:$0xff]
        %v3235 = vld [vmem:[#allocation3 + $0x50] sm:$0xff]
        %v3236 = vld [vmem:[#allocation3 + $0x58] sm:$0xff]
        %v3237 = vld [vmem:[#allocation3 + $0x60] sm:$0xff]
        %v3238 = vld [vmem:[#allocation3 + $0x68] sm:$0xff]
        %v3239 = vld [vmem:[#allocation3 + $0x70] sm:$0xff]
        %v3240 = vld [vmem:[#allocation3 + $0x78] sm:$0xff]
        %v3241 = vld [vmem:[#allocation3 + $0x80] sm:$0xff]
        %v3242 = vld [vmem:[#allocation3 + $0x88] sm:$0xff]
        %v3243 = vld [vmem:[#allocation3 + $0x90] sm:$0xff]
        %v3244 = vld [vmem:[#allocation3 + $0x98] sm:$0xff]
        %v3245 = vld [vmem:[#allocation3 + $0xa0] sm:$0xff]
        %v3246 = vld [vmem:[#allocation3 + $0xa8] sm:$0xff]
        %v3247 = vld [vmem:[#allocation3 + $0xb0] sm:$0xff]
        %v3248 = vld [vmem:[#allocation3 + $0xb8] sm:$0xff]
        %v3249 = vld [vmem:[#allocation3 + $0xc0] sm:$0xff]
        %v3250 = vld [vmem:[#allocation3 + $0xc8] sm:$0xff]
        %v3251 = vld [vmem:[#allocation3 + $0xd0] sm:$0xff]
        %v3252 = vld [vmem:[#allocation3 + $0xd8] sm:$0xff]
        %v3253 = vld [vmem:[#allocation3 + $0xe0] sm:$0xff]
        %v3254 = vld [vmem:[#allocation3 + $0xe8] sm:$0xff]
        %v3255 = vld [vmem:[#allocation3 + $0xf0] sm:$0xff]
        %v3256 = vld [vmem:[#allocation3 + $0xf8] sm:$0xff]
        %v3257 = vld [vmem:[#allocation3 + $0x100] sm:$0xff]
        %v3258 = vld [vmem:[#allocation3 + $0x108] sm:$0xff]
        %v3259 = vld [vmem:[#allocation3 + $0x110] sm:$0xff]
        %v3260 = vld [vmem:[#allocation3 + $0x118] sm:$0xff]
        %v3261 = vld [vmem:[#allocation3 + $0x120] sm:$0xff]
        %v3262 = vld [vmem:[#allocation3 + $0x128] sm:$0xff]
        %v3263 = vld [vmem:[#allocation3 + $0x130] sm:$0xff]
        %v3264 = vld [vmem:[#allocation3 + $0x138] sm:$0xff]
        %v3265 = vld [vmem:[#allocation3 + $0x140] sm:$0xff]
        %v3266 = vld [vmem:[#allocation3 + $0x148] sm:$0xff]
        %v3267 = vld [vmem:[#allocation3 + $0x150] sm:$0xff]
        %v3268 = vld [vmem:[#allocation3 + $0x158] sm:$0xff]
        %v3269 = vld [vmem:[#allocation3 + $0x160] sm:$0xff]
        %v3270 = vld [vmem:[#allocation3 + $0x168] sm:$0xff]
        %v3271 = vld [vmem:[#allocation3 + $0x170] sm:$0xff]
        %v3272 = vld [vmem:[#allocation3 + $0x178] sm:$0xff]
        %v3273 = vld [vmem:[#allocation3 + $0x180] sm:$0xff]
        %v3274 = vld [vmem:[#allocation3 + $0x188] sm:$0xff]
        %v3275 = vld [vmem:[#allocation3 + $0x190] sm:$0xff]
        %v3276 = vld [vmem:[#allocation3 + $0x198] sm:$0xff]
        %v3277 = vld [vmem:[#allocation3 + $0x1a0] sm:$0xff]
        %v3278 = vld [vmem:[#allocation3 + $0x1a8] sm:$0xff]
        %v3279 = vld [vmem:[#allocation3 + $0x1b0] sm:$0xff]
        %v3280 = vld [vmem:[#allocation3 + $0x1b8] sm:$0xff]
        %v3281 = vld [vmem:[#allocation3 + $0x1c0] sm:$0xff]
        %v3282 = vld [vmem:[#allocation3 + $0x1c8] sm:$0xff]
        %v3283 = vld [vmem:[#allocation3 + $0x1d0] sm:$0xff]
        %v3284 = vld [vmem:[#allocation3 + $0x1d8] sm:$0xff]
        %v3285 = vld [vmem:[#allocation3 + $0x1e0] sm:$0xff]
        %v3286 = vld [vmem:[#allocation3 + $0x1e8] sm:$0xff]
        %v3287 = vld [vmem:[#allocation3 + $0x1f0] sm:$0xff]
        %v3288 = vld [vmem:[#allocation3 + $0x1f8] sm:$0xff]
        %3289 = vmatprep.subr.mxu0 %v3226
        %3290 = vmatpush1.msra.mxu0 %v3225
        %3291 = vmatprep.subr.mxu0 %v3228
        %3292 = vmatpush1.msra.mxu0 %v3227
        %3293 = vmatprep.subr.mxu0 %v3230
        %3294 = vmatpush1.msra.mxu0 %v3229
        %3295 = vmatprep.subr.mxu0 %v3232
        %3296 = vmatpush1.msra.mxu0 %v3231
        %3297 = vmatprep.subr.mxu0 %v3234
        %3298 = vmatpush1.msra.mxu0 %v3233
        %3299 = vmatprep.subr.mxu0 %v3236
        %3300 = vmatpush1.msra.mxu0 %v3235
        %3301 = vmatprep.subr.mxu0 %v3238
        %3302 = vmatpush1.msra.mxu0 %v3237
        %3303 = vmatprep.subr.mxu0 %v3240
        %3304 = vmatpush1.msra.mxu0 %v3239
        %3305 = vmatprep.subr.mxu0 %v3242
        %3306 = vmatpush1.msra.mxu0 %v3241
        %3307 = vmatprep.subr.mxu0 %v3244
        %3308 = vmatpush1.msra.mxu0 %v3243
        %3309 = vmatprep.subr.mxu0 %v3246
        %3310 = vmatpush1.msra.mxu0 %v3245
        %3311 = vmatprep.subr.mxu0 %v3248
        %3312 = vmatpush1.msra.mxu0 %v3247
        %3313 = vmatprep.subr.mxu0 %v3250
        %3314 = vmatpush1.msra.mxu0 %v3249
        %3315 = vmatprep.subr.mxu0 %v3252
        %3316 = vmatpush1.msra.mxu0 %v3251
        %3317 = vmatprep.subr.mxu0 %v3254
        %3318 = vmatpush1.msra.mxu0 %v3253
        %3319 = vmatprep.subr.mxu0 %v3256
        %3320 = vmatpush1.msra.mxu0 %v3255
        %3321 = vmatprep.subr.mxu0 %v3258
        %3322 = vmatpush1.msra.mxu0 %v3257
        %3323 = vmatprep.subr.mxu0 %v3260
        %3324 = vmatpush1.msra.mxu0 %v3259
        %3325 = vmatprep.subr.mxu0 %v3262
        %3326 = vmatpush1.msra.mxu0 %v3261
        %3327 = vmatprep.subr.mxu0 %v3264
        %3328 = vmatpush1.msra.mxu0 %v3263
        %3329 = vmatprep.subr.mxu0 %v3266
        %3330 = vmatpush1.msra.mxu0 %v3265
        %3331 = vmatprep.subr.mxu0 %v3268
        %3332 = vmatpush1.msra.mxu0 %v3267
        %3333 = vmatprep.subr.mxu0 %v3270
        %3334 = vmatpush1.msra.mxu0 %v3269
        %3335 = vmatprep.subr.mxu0 %v3272
        %3336 = vmatpush1.msra.mxu0 %v3271
        %3337 = vmatprep.subr.mxu0 %v3274
        %3338 = vmatpush1.msra.mxu0 %v3273
        %3339 = vmatprep.subr.mxu0 %v3276
        %3340 = vmatpush1.msra.mxu0 %v3275
        %3341 = vmatprep.subr.mxu0 %v3278
        %3342 = vmatpush1.msra.mxu0 %v3277
        %3343 = vmatprep.subr.mxu0 %v3280
        %3344 = vmatpush1.msra.mxu0 %v3279
        %3345 = vmatprep.subr.mxu0 %v3282
        %3346 = vmatpush1.msra.mxu0 %v3281
        %3347 = vmatprep.subr.mxu0 %v3284
        %3348 = vmatpush1.msra.mxu0 %v3283
        %3349 = vmatprep.subr.mxu0 %v3286
        %3350 = vmatpush1.msra.mxu0 %v3285
        %3351 = vmatprep.subr.mxu0 %v3288
        %3352 = vmatpush1.msra.mxu0 %v3287
        %3353 = vmatprep.mubr.f32.mxu0 %v3224
        %3354 = vmatmul.mubr.f32.gmra.mrb[0].mxu0 %v3223
        %v3355 = vpop.f32.mrb[0].mxu0
        %v3356 = vadd.f32 0.0, %v3355
        %v3357 = vpop.f32.mrb[0].mxu0
        %v3358 = vadd.f32 0.0, %v3357
        %3359 = vdwg.mxu0
        %v3360 = vmul.f32 %v3356, 0.0025
        %v3361 = vmul.f32 %v3358, 0.0025
        %v3362 = vmul.f32 %v3360, %v3360
        %v3363 = vmul.f32 %v3361, %v3361
        %v3366 = vrot.slane %v3362, 7
        %v3367 = vrot.slane %v3363, 7
        %v3370 = vsub.f32 %v3360, %v3366
        %v3371 = vsub.f32 %v3361, %v3367
        %v3372 = vmax.f32 %v3370, 0.0
        %v3373 = vmax.f32 %v3371, 0.0
        %v3374 = vadd.f32 %v3372, 1e-05
        %v3375 = vadd.f32 %v3373, 1e-05
        %v3376 = vrsqrt.pop %v3374
        %v3377 = vrsqrt.pop %v3375
        %v3380 = vcombine.low %v3376, %v3377
        %v3382 = vunpack.c.l.s4 1966171168
        %v3383 = vunpack.c.0.s8 %v3382
        %v3384 = vlaneseq
        %v3385 = vshrl.u32 %v3384, 7
        %v3386 = vsub.s32 %v3383, %v3385
        %v3387 = vrot.slane %v3380, %v3386
        %v3388 = vcombine.high %v3387, %v3387
        %v3390 = vunpack.c.l.s4 1966171168
        %v3391 = vunpack.c.0.s8 %v3390
        %v3392 = vlaneseq
        %v3393 = vshrl.u32 %v3392, 7
        %v3394 = vsub.s32 %v3391, %v3393
        %v3395 = vrot.slane %v3388, %v3394
        %v3397 = vmul.f32 %v422, %v3395
        %v3399 = vlaneseq
        %v3400 = vshrl.u32 %v3399, 7
        %v3401 = vsub.s32 0, %v3400
        %v3402 = vrot.slane %v3397, %v3401
        %v3403 = vlaneseq
        %v3404 = vshrl.u32 %v3403, 7
        %v3405 = vsub.s32 1, %v3404
        %v3406 = vrot.slane %v3397, %v3405
        %v3409 = vmul.f32 %v3360, %v3402
        %v3410 = vmul.f32 %v3361, %v3406
        %v3413 = vcombine.low %v3409, %v3410
        %v3415 = vunpack.c.l.s4 1966171168
        %v3416 = vunpack.c.0.s8 %v3415
        %v3417 = vlaneseq
        %v3418 = vshrl.u32 %v3417, 7
        %v3419 = vsub.s32 %v3416, %v3418
        %v3420 = vrot.slane %v3413, %v3419
        %v3422 = vunpack.c.l.s4 1966171168
        %v3423 = vunpack.c.0.s8 %v3422
        %v3424 = vlaneseq
        %v3425 = vshrl.u32 %v3424, 7
        %v3426 = vsub.s32 %v3423, %v3425
        %v3427 = vrot.slane %v3420, %v3426
        %v3429 = vsub.f32 %v424, %v3427
        %v3430 = vmul.f32 %v3150, %v3402
        %v3431 = vmul.f32 %v3151, %v3406
        %v3433 = vlaneseq
        %v3434 = vshrl.u32 %v3433, 7
        %v3435 = vsub.s32 0, %v3434
        %v3436 = vrot.slane %v3429, %v3435
        %v3437 = vlaneseq
        %v3438 = vshrl.u32 %v3437, 7
        %v3439 = vsub.s32 1, %v3438
        %v3440 = vrot.slane %v3429, %v3439
        %v3443 = vadd.f32 %v3430, %v3436
        %v3444 = vadd.f32 %v3431, %v3440
        %v3445 = vmax.f32 %v3443, 0.0
        %v3446 = vmax.f32 %v3444, 0.0
        %v3447 = vmul.f32 %v3152, %v3402
        %v3448 = vmul.f32 %v3153, %v3406
        %v3449 = vadd.f32 %v3447, %v3436
        %v3450 = vadd.f32 %v3448, %v3440
        %v3451 = vmax.f32 %v3449, 0.0
        %v3452 = vmax.f32 %v3450, 0.0
        %v3453 = vmax.f32 %v3445, %v3451
        %v3454 = vmax.f32 %v3446, %v3452
        %v3455 = vmax.f32 %v3453, %v3454
        %v3456 = vpack.c.bf16 %v3455, %v3455
        %vm3457 = vcmask 1040384
        %vm3458 = vsmask.f32 256
        %vm3459 = vmand %vm3457, %vm3458
        %v3460 = vld [vmem:[#allocation2] sm:$0x1]
        %v3461 = vsel %vm3459, %v3456, %v3460
        %3462 = vst [vmem:[#allocation2] sm:$0x1] %v3461
        %v3465 = vunpack.c.l.s4 1966171168
        %v3466 = vunpack.c.0.s8 %v3465
        %v3467 = vlaneseq
        %v3468 = vshrl.u32 %v3467, 7
        %v3469 = vsub.s32 %v3466, %v3468
        %v3470 = vrot.slane %v3456, %v3469
        %v3472 = vunpack.c.l.s4 1966171168
        %v3473 = vunpack.c.0.s8 %v3472
        %v3474 = vlaneseq
        %v3475 = vshrl.u32 %v3474, 7
        %v3476 = vsub.s32 %v3473, %v3475
        %v3477 = vrot.slane %v3470, %v3476
        %v3479 = vshrl.u32 %v3477, 16
        %v3481 = vrot.slane %v3479, 7
        %v3482 = vrot.slane %v3481, 1
        %s3484 = scalar_lea.vmem [#allocation2], 1
        %v3485 = vld [vmem:[%s3484] sm:$0x1]
        %v3486 = vsel %vm3459, %v3482, %v3485
        %3487 = vst [vmem:[%s3484] sm:$0x1] %v3486
        %v3488 = vcombine.high %v3470, %v3470
        %v3490 = vunpack.c.l.s4 1966171168
        %v3491 = vunpack.c.0.s8 %v3490
        %v3492 = vlaneseq
        %v3493 = vshrl.u32 %v3492, 7
        %v3494 = vsub.s32 %v3491, %v3493
        %v3495 = vrot.slane %v3488, %v3494
        %s3497 = scalar_lea.vmem [#allocation2], 2
        %v3498 = vld [vmem:[%s3497] sm:$0x1]
        %v3499 = vsel %vm3459, %v3495, %v3498
        %3500 = vst [vmem:[%s3497] sm:$0x1] %v3499
        %v3502 = vshrl.u32 %v3495, 16
        %v3504 = vrot.slane %v3502, 7
        %v3505 = vrot.slane %v3504, 1
        %s3507 = scalar_lea.vmem [#allocation2], 3
        %v3508 = vld [vmem:[%s3507] sm:$0x1]
        %v3509 = vsel %vm3459, %v3505, %v3508
        %3510 = vst [vmem:[%s3507] sm:$0x1] %v3509
        %v3511 = vcombine.high %v3477, %v3477
        %s3513 = scalar_lea.vmem [#allocation2], 4
        %v3514 = vld [vmem:[%s3513] sm:$0x1]
        %v3515 = vsel %vm3459, %v3511, %v3514
        %3516 = vst [vmem:[%s3513] sm:$0x1] %v3515
        %v3517 = vld [vmem:[#allocation2] sm:$0x1]
        %v3518 = vld [vmem:[%s7] sm:$0xf]
        %v3519 = vld [vmem:[%s7 + $0x4] sm:$0xf]
        %v3520 = vld [vmem:[%s7 + $0x8] sm:$0xf]
        %v3521 = vld [vmem:[%s7 + $0xc] sm:$0xf]
        %v3522 = vld [vmem:[%s7 + $0x10] sm:$0xf]
        %v3523 = vld [vmem:[%s7 + $0x14] sm:$0xf]
        %v3524 = vld [vmem:[%s7 + $0x18] sm:$0xf]
        %v3525 = vld [vmem:[%s7 + $0x1c] sm:$0xf]
        %v3526 = vld [vmem:[%s7 + $0x20] sm:$0xf]
        %v3527 = vld [vmem:[%s7 + $0x24] sm:$0xf]
        %v3528 = vld [vmem:[%s7 + $0x28] sm:$0xf]
        %v3529 = vld [vmem:[%s7 + $0x2c] sm:$0xf]
        %v3530 = vld [vmem:[%s7 + $0x30] sm:$0xf]
        %v3531 = vld [vmem:[%s7 + $0x34] sm:$0xf]
        %v3532 = vld [vmem:[%s7 + $0x38] sm:$0xf]
        %v3533 = vld [vmem:[%s7 + $0x3c] sm:$0xf]
        %v3534 = vld [vmem:[%s3484] sm:$0x1]
        %s3535 = scalar_lea.vmem %s7, 64
        %v3536 = vld [vmem:[%s3535] sm:$0xf]
        %v3537 = vld [vmem:[%s3535 + $0x4] sm:$0xf]
        %v3538 = vld [vmem:[%s3535 + $0x8] sm:$0xf]
        %v3539 = vld [vmem:[%s3535 + $0xc] sm:$0xf]
        %v3540 = vld [vmem:[%s3535 + $0x10] sm:$0xf]
        %v3541 = vld [vmem:[%s3535 + $0x14] sm:$0xf]
        %v3542 = vld [vmem:[%s3535 + $0x18] sm:$0xf]
        %v3543 = vld [vmem:[%s3535 + $0x1c] sm:$0xf]
        %v3544 = vld [vmem:[%s3535 + $0x20] sm:$0xf]
        %v3545 = vld [vmem:[%s3535 + $0x24] sm:$0xf]
        %v3546 = vld [vmem:[%s3535 + $0x28] sm:$0xf]
        %v3547 = vld [vmem:[%s3535 + $0x2c] sm:$0xf]
        %v3548 = vld [vmem:[%s3535 + $0x30] sm:$0xf]
        %v3549 = vld [vmem:[%s3535 + $0x34] sm:$0xf]
        %v3550 = vld [vmem:[%s3535 + $0x38] sm:$0xf]
        %v3551 = vld [vmem:[%s3535 + $0x3c] sm:$0xf]
        %v3568 = vunpack.c.l.b16 %v3536
        %v3569 = vunpack.c.l.b16 %v3537
        %v3570 = vunpack.c.l.b16 %v3538
        %v3571 = vunpack.c.l.b16 %v3539
        %v3572 = vunpack.c.l.b16 %v3540
        %v3573 = vunpack.c.l.b16 %v3541
        %v3574 = vunpack.c.l.b16 %v3542
        %v3575 = vunpack.c.l.b16 %v3543
        %v3576 = vunpack.c.l.b16 %v3544
        %v3577 = vunpack.c.l.b16 %v3545
        %v3578 = vunpack.c.l.b16 %v3546
        %v3579 = vunpack.c.l.b16 %v3547
        %v3580 = vunpack.c.l.b16 %v3548
        %v3581 = vunpack.c.l.b16 %v3549
        %v3582 = vunpack.c.l.b16 %v3550
        %v3583 = vunpack.c.l.b16 %v3551
        %v3584 = vpack.c.b16 %v3569, %v3568
        %v3585 = vpack.c.b16 %v3571, %v3570
        %v3586 = vpack.c.b16 %v3573, %v3572
        %v3587 = vpack.c.b16 %v3575, %v3574
        %v3588 = vpack.c.b16 %v3577, %v3576
        %v3589 = vpack.c.b16 %v3579, %v3578
        %v3590 = vpack.c.b16 %v3581, %v3580
        %v3591 = vpack.c.b16 %v3583, %v3582
        %3600 = vmatprep.subr.bf16.mxu0 0
        %3601 = vmatpush1.bf16.msra.mxu0 %v3584
        %3602 = vmatprep.subr.bf16.mxu0 0
        %3603 = vmatpush1.bf16.msra.mxu0 %v3585
        %3604 = vmatprep.subr.bf16.mxu0 0
        %3605 = vmatpush1.bf16.msra.mxu0 %v3586
        %3606 = vmatprep.subr.bf16.mxu0 0
        %3607 = vmatpush1.bf16.msra.mxu0 %v3587
        %3608 = vmatprep.subr.bf16.mxu0 0
        %3609 = vmatpush1.bf16.msra.mxu0 %v3588
        %3610 = vmatprep.subr.bf16.mxu0 0
        %3611 = vmatpush1.bf16.msra.mxu0 %v3589
        %3612 = vmatprep.subr.bf16.mxu0 0
        %3613 = vmatpush1.bf16.msra.mxu0 %v3590
        %3614 = vmatprep.subr.bf16.mxu0 0
        %3615 = vmatpush1.bf16.msra.mxu0 %v3591
        %3616 = vmatprep.subr.bf16.mxu0 0
        %3617 = vmatpush1.bf16.msra.mxu0 0
        %3618 = vmatprep.subr.bf16.mxu0 0
        %3619 = vmatpush1.bf16.msra.mxu0 0
        %3620 = vmatprep.subr.bf16.mxu0 0
        %3621 = vmatpush1.bf16.msra.mxu0 0
        %3622 = vmatprep.subr.bf16.mxu0 0
        %3623 = vmatpush1.bf16.msra.mxu0 0
        %3624 = vmatprep.subr.bf16.mxu0 0
        %3625 = vmatpush1.bf16.msra.mxu0 0
        %3626 = vmatprep.subr.bf16.mxu0 0
        %3627 = vmatpush1.bf16.msra.mxu0 0
        %3628 = vmatprep.subr.bf16.mxu0 0
        %3629 = vmatpush1.bf16.msra.mxu0 0
        %3630 = vmatprep.subr.bf16.mxu0 0
        %3631 = vmatpush1.bf16.msra.mxu0 0
        %3632 = vmatprep.mubr.bf16.mxu0 0
        %3633 = vmatmul.mubr.bf16.gmra.mrb[0].mxu0 %v3534
        %v3634 = vpop.f32.mrb[0].mxu0
        %v3635 = vadd.f32 0.0, %v3634
        %v3636 = vpop.f32.mrb[0].mxu0
        %v3637 = vpop.f32.mrb[0].mxu0
        %v3638 = vpop.f32.mrb[0].mxu0
        %3639 = vdwg.mxu0
        %v3656 = vunpack.c.l.b16 %v3518
        %v3657 = vunpack.c.l.b16 %v3519
        %v3658 = vunpack.c.l.b16 %v3520
        %v3659 = vunpack.c.l.b16 %v3521
        %v3660 = vunpack.c.l.b16 %v3522
        %v3661 = vunpack.c.l.b16 %v3523
        %v3662 = vunpack.c.l.b16 %v3524
        %v3663 = vunpack.c.l.b16 %v3525
        %v3664 = vunpack.c.l.b16 %v3526
        %v3665 = vunpack.c.l.b16 %v3527
        %v3666 = vunpack.c.l.b16 %v3528
        %v3667 = vunpack.c.l.b16 %v3529
        %v3668 = vunpack.c.l.b16 %v3530
        %v3669 = vunpack.c.l.b16 %v3531
        %v3670 = vunpack.c.l.b16 %v3532
        %v3671 = vunpack.c.l.b16 %v3533
        %v3672 = vpack.c.b16 %v3657, %v3656
        %v3673 = vpack.c.b16 %v3659, %v3658
        %v3674 = vpack.c.b16 %v3661, %v3660
        %v3675 = vpack.c.b16 %v3663, %v3662
        %v3676 = vpack.c.b16 %v3665, %v3664
        %v3677 = vpack.c.b16 %v3667, %v3666
        %v3678 = vpack.c.b16 %v3669, %v3668
        %v3679 = vpack.c.b16 %v3671, %v3670
        %3688 = vmatprep.subr.bf16.mxu0 0
        %3689 = vmatpush1.bf16.msra.mxu0 %v3672
        %3690 = vmatprep.subr.bf16.mxu0 0
        %3691 = vmatpush1.bf16.msra.mxu0 %v3673
        %3692 = vmatprep.subr.bf16.mxu0 0
        %3693 = vmatpush1.bf16.msra.mxu0 %v3674
        %3694 = vmatprep.subr.bf16.mxu0 0
        %3695 = vmatpush1.bf16.msra.mxu0 %v3675
        %3696 = vmatprep.subr.bf16.mxu0 0
        %3697 = vmatpush1.bf16.msra.mxu0 %v3676
        %3698 = vmatprep.subr.bf16.mxu0 0
        %3699 = vmatpush1.bf16.msra.mxu0 %v3677
        %3700 = vmatprep.subr.bf16.mxu0 0
        %3701 = vmatpush1.bf16.msra.mxu0 %v3678
        %3702 = vmatprep.subr.bf16.mxu0 0
        %3703 = vmatpush1.bf16.msra.mxu0 %v3679
        %3704 = vmatprep.subr.bf16.mxu0 0
        %3705 = vmatpush1.bf16.msra.mxu0 0
        %3706 = vmatprep.subr.bf16.mxu0 0
        %3707 = vmatpush1.bf16.msra.mxu0 0
        %3708 = vmatprep.subr.bf16.mxu0 0
        %3709 = vmatpush1.bf16.msra.mxu0 0
        %3710 = vmatprep.subr.bf16.mxu0 0
        %3711 = vmatpush1.bf16.msra.mxu0 0
        %3712 = vmatprep.subr.bf16.mxu0 0
        %3713 = vmatpush1.bf16.msra.mxu0 0
        %3714 = vmatprep.subr.bf16.mxu0 0
        %3715 = vmatpush1.bf16.msra.mxu0 0
        %3716 = vmatprep.subr.bf16.mxu0 0
        %3717 = vmatpush1.bf16.msra.mxu0 0
        %3718 = vmatprep.subr.bf16.mxu0 0
        %3719 = vmatpush1.bf16.msra.mxu0 0
        %3720 = vmatprep.mubr.bf16.mxu0 0
        %3721 = vmatmul.mubr.bf16.gmra.mrb[0].mxu0 %v3517
        %v3722 = vpop.f32.mrb[0].mxu0
        %v3723 = vadd.f32 %v3635, %v3722
        %v3724 = vpop.f32.mrb[0].mxu0
        %v3725 = vpop.f32.mrb[0].mxu0
        %v3726 = vpop.f32.mrb[0].mxu0
        %3727 = vdwg.mxu0
        %v3728 = vld [vmem:[%s3497] sm:$0x1]
        %s3729 = scalar_lea.vmem %s7, 128
        %v3730 = vld [vmem:[%s3729] sm:$0xf]
        %v3731 = vld [vmem:[%s3729 + $0x4] sm:$0xf]
        %v3732 = vld [vmem:[%s3729 + $0x8] sm:$0xf]
        %v3733 = vld [vmem:[%s3729 + $0xc] sm:$0xf]
        %v3734 = vld [vmem:[%s3729 + $0x10] sm:$0xf]
        %v3735 = vld [vmem:[%s3729 + $0x14] sm:$0xf]
        %v3736 = vld [vmem:[%s3729 + $0x18] sm:$0xf]
        %v3737 = vld [vmem:[%s3729 + $0x1c] sm:$0xf]
        %v3738 = vld [vmem:[%s3729 + $0x20] sm:$0xf]
        %v3739 = vld [vmem:[%s3729 + $0x24] sm:$0xf]
        %v3740 = vld [vmem:[%s3729 + $0x28] sm:$0xf]
        %v3741 = vld [vmem:[%s3729 + $0x2c] sm:$0xf]
        %v3742 = vld [vmem:[%s3729 + $0x30] sm:$0xf]
        %v3743 = vld [vmem:[%s3729 + $0x34] sm:$0xf]
        %v3744 = vld [vmem:[%s3729 + $0x38] sm:$0xf]
        %v3745 = vld [vmem:[%s3729 + $0x3c] sm:$0xf]
        %v3762 = vunpack.c.l.b16 %v3730
        %v3763 = vunpack.c.l.b16 %v3731
        %v3764 = vunpack.c.l.b16 %v3732
        %v3765 = vunpack.c.l.b16 %v3733
        %v3766 = vunpack.c.l.b16 %v3734
        %v3767 = vunpack.c.l.b16 %v3735
        %v3768 = vunpack.c.l.b16 %v3736
        %v3769 = vunpack.c.l.b16 %v3737
        %v3770 = vunpack.c.l.b16 %v3738
        %v3771 = vunpack.c.l.b16 %v3739
        %v3772 = vunpack.c.l.b16 %v3740
        %v3773 = vunpack.c.l.b16 %v3741
        %v3774 = vunpack.c.l.b16 %v3742
        %v3775 = vunpack.c.l.b16 %v3743
        %v3776 = vunpack.c.l.b16 %v3744
        %v3777 = vunpack.c.l.b16 %v3745
        %v3778 = vpack.c.b16 %v3763, %v3762
        %v3779 = vpack.c.b16 %v3765, %v3764
        %v3780 = vpack.c.b16 %v3767, %v3766
        %v3781 = vpack.c.b16 %v3769, %v3768
        %v3782 = vpack.c.b16 %v3771, %v3770
        %v3783 = vpack.c.b16 %v3773, %v3772
        %v3784 = vpack.c.b16 %v3775, %v3774
        %v3785 = vpack.c.b16 %v3777, %v3776
        %3794 = vmatprep.subr.bf16.mxu0 0
        %3795 = vmatpush1.bf16.msra.mxu0 %v3778
        %3796 = vmatprep.subr.bf16.mxu0 0
        %3797 = vmatpush1.bf16.msra.mxu0 %v3779
        %3798 = vmatprep.subr.bf16.mxu0 0
        %3799 = vmatpush1.bf16.msra.mxu0 %v3780
        %3800 = vmatprep.subr.bf16.mxu0 0
        %3801 = vmatpush1.bf16.msra.mxu0 %v3781
        %3802 = vmatprep.subr.bf16.mxu0 0
        %3803 = vmatpush1.bf16.msra.mxu0 %v3782
        %3804 = vmatprep.subr.bf16.mxu0 0
        %3805 = vmatpush1.bf16.msra.mxu0 %v3783
        %3806 = vmatprep.subr.bf16.mxu0 0
        %3807 = vmatpush1.bf16.msra.mxu0 %v3784
        %3808 = vmatprep.subr.bf16.mxu0 0
        %3809 = vmatpush1.bf16.msra.mxu0 %v3785
        %3810 = vmatprep.subr.bf16.mxu0 0
        %3811 = vmatpush1.bf16.msra.mxu0 0
        %3812 = vmatprep.subr.bf16.mxu0 0
        %3813 = vmatpush1.bf16.msra.mxu0 0
        %3814 = vmatprep.subr.bf16.mxu0 0
        %3815 = vmatpush1.bf16.msra.mxu0 0
        %3816 = vmatprep.subr.bf16.mxu0 0
        %3817 = vmatpush1.bf16.msra.mxu0 0
        %3818 = vmatprep.subr.bf16.mxu0 0
        %3819 = vmatpush1.bf16.msra.mxu0 0
        %3820 = vmatprep.subr.bf16.mxu0 0
        %3821 = vmatpush1.bf16.msra.mxu0 0
        %3822 = vmatprep.subr.bf16.mxu0 0
        %3823 = vmatpush1.bf16.msra.mxu0 0
        %3824 = vmatprep.subr.bf16.mxu0 0
        %3825 = vmatpush1.bf16.msra.mxu0 0
        %3826 = vmatprep.mubr.bf16.mxu0 0
        %3827 = vmatmul.mubr.bf16.gmra.mrb[0].mxu0 %v3728
        %v3828 = vpop.f32.mrb[0].mxu0
        %v3829 = vadd.f32 0.0, %v3828
        %v3830 = vpop.f32.mrb[0].mxu0
        %v3831 = vpop.f32.mrb[0].mxu0
        %v3832 = vpop.f32.mrb[0].mxu0
        %3833 = vdwg.mxu0
        %v3834 = vadd.f32 %v3723, %v3829
        %v3835 = vld [vmem:[%s3507] sm:$0x1]
        %s3836 = scalar_lea.vmem %s7, 192
        %v3837 = vld [vmem:[%s3836] sm:$0xf]
        %v3838 = vld [vmem:[%s3836 + $0x4] sm:$0xf]
        %v3839 = vld [vmem:[%s3836 + $0x8] sm:$0xf]
        %v3840 = vld [vmem:[%s3836 + $0xc] sm:$0xf]
        %v3841 = vld [vmem:[%s3836 + $0x10] sm:$0xf]
        %v3842 = vld [vmem:[%s3836 + $0x14] sm:$0xf]
        %v3843 = vld [vmem:[%s3836 + $0x18] sm:$0xf]
        %v3844 = vld [vmem:[%s3836 + $0x1c] sm:$0xf]
        %v3845 = vld [vmem:[%s3836 + $0x20] sm:$0xf]
        %v3846 = vld [vmem:[%s3836 + $0x24] sm:$0xf]
        %v3847 = vld [vmem:[%s3836 + $0x28] sm:$0xf]
        %v3848 = vld [vmem:[%s3836 + $0x2c] sm:$0xf]
        %v3849 = vld [vmem:[%s3836 + $0x30] sm:$0xf]
        %v3850 = vld [vmem:[%s3836 + $0x34] sm:$0xf]
        %v3851 = vld [vmem:[%s3836 + $0x38] sm:$0xf]
        %v3852 = vld [vmem:[%s3836 + $0x3c] sm:$0xf]
        %v3869 = vunpack.c.l.b16 %v3837
        %v3870 = vunpack.c.l.b16 %v3838
        %v3871 = vunpack.c.l.b16 %v3839
        %v3872 = vunpack.c.l.b16 %v3840
        %v3873 = vunpack.c.l.b16 %v3841
        %v3874 = vunpack.c.l.b16 %v3842
        %v3875 = vunpack.c.l.b16 %v3843
        %v3876 = vunpack.c.l.b16 %v3844
        %v3877 = vunpack.c.l.b16 %v3845
        %v3878 = vunpack.c.l.b16 %v3846
        %v3879 = vunpack.c.l.b16 %v3847
        %v3880 = vunpack.c.l.b16 %v3848
        %v3881 = vunpack.c.l.b16 %v3849
        %v3882 = vunpack.c.l.b16 %v3850
        %v3883 = vunpack.c.l.b16 %v3851
        %v3884 = vunpack.c.l.b16 %v3852
        %v3885 = vpack.c.b16 %v3870, %v3869
        %v3886 = vpack.c.b16 %v3872, %v3871
        %v3887 = vpack.c.b16 %v3874, %v3873
        %v3888 = vpack.c.b16 %v3876, %v3875
        %v3889 = vpack.c.b16 %v3878, %v3877
        %v3890 = vpack.c.b16 %v3880, %v3879
        %v3891 = vpack.c.b16 %v3882, %v3881
        %v3892 = vpack.c.b16 %v3884, %v3883
        %3901 = vmatprep.subr.bf16.mxu0 0
        %3902 = vmatpush1.bf16.msra.mxu0 %v3885
        %3903 = vmatprep.subr.bf16.mxu0 0
        %3904 = vmatpush1.bf16.msra.mxu0 %v3886
        %3905 = vmatprep.subr.bf16.mxu0 0
        %3906 = vmatpush1.bf16.msra.mxu0 %v3887
        %3907 = vmatprep.subr.bf16.mxu0 0
        %3908 = vmatpush1.bf16.msra.mxu0 %v3888
        %3909 = vmatprep.subr.bf16.mxu0 0
        %3910 = vmatpush1.bf16.msra.mxu0 %v3889
        %3911 = vmatprep.subr.bf16.mxu0 0
        %3912 = vmatpush1.bf16.msra.mxu0 %v3890
        %3913 = vmatprep.subr.bf16.mxu0 0
        %3914 = vmatpush1.bf16.msra.mxu0 %v3891
        %3915 = vmatprep.subr.bf16.mxu0 0
        %3916 = vmatpush1.bf16.msra.mxu0 %v3892
        %3917 = vmatprep.subr.bf16.mxu0 0
        %3918 = vmatpush1.bf16.msra.mxu0 0
        %3919 = vmatprep.subr.bf16.mxu0 0
        %3920 = vmatpush1.bf16.msra.mxu0 0
        %3921 = vmatprep.subr.bf16.mxu0 0
        %3922 = vmatpush1.bf16.msra.mxu0 0
        %3923 = vmatprep.subr.bf16.mxu0 0
        %3924 = vmatpush1.bf16.msra.mxu0 0
        %3925 = vmatprep.subr.bf16.mxu0 0
        %3926 = vmatpush1.bf16.msra.mxu0 0
        %3927 = vmatprep.subr.bf16.mxu0 0
        %3928 = vmatpush1.bf16.msra.mxu0 0
        %3929 = vmatprep.subr.bf16.mxu0 0
        %3930 = vmatpush1.bf16.msra.mxu0 0
        %3931 = vmatprep.subr.bf16.mxu0 0
        %3932 = vmatpush1.bf16.msra.mxu0 0
        %3933 = vmatprep.mubr.bf16.mxu0 0
        %3934 = vmatmul.mubr.bf16.gmra.mrb[0].mxu0 %v3835
        %v3935 = vpop.f32.mrb[0].mxu0
        %v3936 = vadd.f32 0.0, %v3935
        %v3937 = vpop.f32.mrb[0].mxu0
        %v3938 = vpop.f32.mrb[0].mxu0
        %v3939 = vpop.f32.mrb[0].mxu0
        %3940 = vdwg.mxu0
        %v3941 = vadd.f32 %v3834, %v3936
        %v3942 = vld [vmem:[%s3513] sm:$0x1]
        %s3943 = scalar_lea.vmem %s7, 256
        %v3944 = vld [vmem:[%s3943] sm:$0xf]
        %v3945 = vld [vmem:[%s3943 + $0x4] sm:$0xf]
        %v3946 = vld [vmem:[%s3943 + $0x8] sm:$0xf]
        %v3947 = vld [vmem:[%s3943 + $0xc] sm:$0xf]
        %v3948 = vld [vmem:[%s3943 + $0x10] sm:$0xf]
        %v3949 = vld [vmem:[%s3943 + $0x14] sm:$0xf]
        %v3950 = vld [vmem:[%s3943 + $0x18] sm:$0xf]
        %v3951 = vld [vmem:[%s3943 + $0x1c] sm:$0xf]
        %v3952 = vld [vmem:[%s3943 + $0x20] sm:$0xf]
        %v3953 = vld [vmem:[%s3943 + $0x24] sm:$0xf]
        %v3954 = vld [vmem:[%s3943 + $0x28] sm:$0xf]
        %v3955 = vld [vmem:[%s3943 + $0x2c] sm:$0xf]
        %v3956 = vld [vmem:[%s3943 + $0x30] sm:$0xf]
        %v3957 = vld [vmem:[%s3943 + $0x34] sm:$0xf]
        %v3958 = vld [vmem:[%s3943 + $0x38] sm:$0xf]
        %v3959 = vld [vmem:[%s3943 + $0x3c] sm:$0xf]
        %v3976 = vunpack.c.l.b16 %v3944
        %v3977 = vunpack.c.l.b16 %v3945
        %v3978 = vunpack.c.l.b16 %v3946
        %v3979 = vunpack.c.l.b16 %v3947
        %v3980 = vunpack.c.l.b16 %v3948
        %v3981 = vunpack.c.l.b16 %v3949
        %v3982 = vunpack.c.l.b16 %v3950
        %v3983 = vunpack.c.l.b16 %v3951
        %v3984 = vunpack.c.l.b16 %v3952
        %v3985 = vunpack.c.l.b16 %v3953
        %v3986 = vunpack.c.l.b16 %v3954
        %v3987 = vunpack.c.l.b16 %v3955
        %v3988 = vunpack.c.l.b16 %v3956
        %v3989 = vunpack.c.l.b16 %v3957
        %v3990 = vunpack.c.l.b16 %v3958
        %v3991 = vunpack.c.l.b16 %v3959
        %v3992 = vpack.c.b16 %v3977, %v3976
        %v3993 = vpack.c.b16 %v3979, %v3978
        %v3994 = vpack.c.b16 %v3981, %v3980
        %v3995 = vpack.c.b16 %v3983, %v3982
        %v3996 = vpack.c.b16 %v3985, %v3984
        %v3997 = vpack.c.b16 %v3987, %v3986
        %v3998 = vpack.c.b16 %v3989, %v3988
        %v3999 = vpack.c.b16 %v3991, %v3990
        %4008 = vmatprep.subr.bf16.mxu0 0
        %4009 = vmatpush1.bf16.msra.mxu0 %v3992
        %4010 = vmatprep.subr.bf16.mxu0 0
        %4011 = vmatpush1.bf16.msra.mxu0 %v3993
        %4012 = vmatprep.subr.bf16.mxu0 0
        %4013 = vmatpush1.bf16.msra.mxu0 %v3994
        %4014 = vmatprep.subr.bf16.mxu0 0
        %4015 = vmatpush1.bf16.msra.mxu0 %v3995
        %4016 = vmatprep.subr.bf16.mxu0 0
        %4017 = vmatpush1.bf16.msra.mxu0 %v3996
        %4018 = vmatprep.subr.bf16.mxu0 0
        %4019 = vmatpush1.bf16.msra.mxu0 %v3997
        %4020 = vmatprep.subr.bf16.mxu0 0
        %4021 = vmatpush1.bf16.msra.mxu0 %v3998
        %4022 = vmatprep.subr.bf16.mxu0 0
        %4023 = vmatpush1.bf16.msra.mxu0 %v3999
        %4024 = vmatprep.subr.bf16.mxu0 0
        %4025 = vmatpush1.bf16.msra.mxu0 0
        %4026 = vmatprep.subr.bf16.mxu0 0
        %4027 = vmatpush1.bf16.msra.mxu0 0
        %4028 = vmatprep.subr.bf16.mxu0 0
        %4029 = vmatpush1.bf16.msra.mxu0 0
        %4030 = vmatprep.subr.bf16.mxu0 0
        %4031 = vmatpush1.bf16.msra.mxu0 0
        %4032 = vmatprep.subr.bf16.mxu0 0
        %4033 = vmatpush1.bf16.msra.mxu0 0
        %4034 = vmatprep.subr.bf16.mxu0 0
        %4035 = vmatpush1.bf16.msra.mxu0 0
        %4036 = vmatprep.subr.bf16.mxu0 0
        %4037 = vmatpush1.bf16.msra.mxu0 0
        %4038 = vmatprep.subr.bf16.mxu0 0
        %4039 = vmatpush1.bf16.msra.mxu0 0
        %4040 = vmatprep.mubr.bf16.mxu0 0
        %4041 = vmatmul.mubr.bf16.gmra.mrb[0].mxu0 %v3942
        %v4042 = vpop.f32.mrb[0].mxu0
        %v4043 = vadd.f32 0.0, %v4042
        %v4044 = vpop.f32.mrb[0].mxu0
        %v4045 = vpop.f32.mrb[0].mxu0
        %v4046 = vpop.f32.mrb[0].mxu0
        %4047 = vdwg.mxu0
        %v4048 = vadd.f32 %v3941, %v4043
        %v4049 = vld [vmem:[%s10] sm:$0x1]
        %v4050 = vadd.f32 %v4048, %v4049
        %v4051 = vmax.f32 %v4050, 0.0
        %v4052 = vpack.c.bf16 %v4051, %v4051
        %v4053 = vld [vmem:[%s8] sm:$0xf]
        %v4054 = vld [vmem:[%s8 + $0x4] sm:$0xf]
        %v4055 = vld [vmem:[%s8 + $0x8] sm:$0xf]
        %v4056 = vld [vmem:[%s8 + $0xc] sm:$0xf]
        %v4057 = vld [vmem:[%s8 + $0x10] sm:$0xf]
        %v4058 = vld [vmem:[%s8 + $0x14] sm:$0xf]
        %v4059 = vld [vmem:[%s8 + $0x18] sm:$0xf]
        %v4060 = vld [vmem:[%s8 + $0x1c] sm:$0xf]
        %v4061 = vld [vmem:[%s8 + $0x20] sm:$0xf]
        %v4062 = vld [vmem:[%s8 + $0x24] sm:$0xf]
        %v4063 = vld [vmem:[%s8 + $0x28] sm:$0xf]
        %v4064 = vld [vmem:[%s8 + $0x2c] sm:$0xf]
        %v4065 = vld [vmem:[%s8 + $0x30] sm:$0xf]
        %v4066 = vld [vmem:[%s8 + $0x34] sm:$0xf]
        %v4067 = vld [vmem:[%s8 + $0x38] sm:$0xf]
        %v4068 = vld [vmem:[%s8 + $0x3c] sm:$0xf]
        %v4069 = vld [vmem:[%s10 + $0x1] sm:$0x1]
        %v4086 = vunpack.c.l.b16 %v4053
        %v4087 = vunpack.c.l.b16 %v4054
        %v4088 = vunpack.c.l.b16 %v4055
        %v4089 = vunpack.c.l.b16 %v4056
        %v4090 = vunpack.c.l.b16 %v4057
        %v4091 = vunpack.c.l.b16 %v4058
        %v4092 = vunpack.c.l.b16 %v4059
        %v4093 = vunpack.c.l.b16 %v4060
        %v4094 = vunpack.c.l.b16 %v4061
        %v4095 = vunpack.c.l.b16 %v4062
        %v4096 = vunpack.c.l.b16 %v4063
        %v4097 = vunpack.c.l.b16 %v4064
        %v4098 = vunpack.c.l.b16 %v4065
        %v4099 = vunpack.c.l.b16 %v4066
        %v4100 = vunpack.c.l.b16 %v4067
        %v4101 = vunpack.c.l.b16 %v4068
        %v4102 = vpack.c.b16 %v4087, %v4086
        %v4103 = vpack.c.b16 %v4089, %v4088
        %v4104 = vpack.c.b16 %v4091, %v4090
        %v4105 = vpack.c.b16 %v4093, %v4092
        %v4106 = vpack.c.b16 %v4095, %v4094
        %v4107 = vpack.c.b16 %v4097, %v4096
        %v4108 = vpack.c.b16 %v4099, %v4098
        %v4109 = vpack.c.b16 %v4101, %v4100
        %4118 = vmatprep.subr.bf16.mxu0 0
        %4119 = vmatpush1.bf16.msra.mxu0 %v4102
        %4120 = vmatprep.subr.bf16.mxu0 0
        %4121 = vmatpush1.bf16.msra.mxu0 %v4103
        %4122 = vmatprep.subr.bf16.mxu0 0
        %4123 = vmatpush1.bf16.msra.mxu0 %v4104
        %4124 = vmatprep.subr.bf16.mxu0 0
        %4125 = vmatpush1.bf16.msra.mxu0 %v4105
        %4126 = vmatprep.subr.bf16.mxu0 0
        %4127 = vmatpush1.bf16.msra.mxu0 %v4106
        %4128 = vmatprep.subr.bf16.mxu0 0
        %4129 = vmatpush1.bf16.msra.mxu0 %v4107
        %4130 = vmatprep.subr.bf16.mxu0 0
        %4131 = vmatpush1.bf16.msra.mxu0 %v4108
        %4132 = vmatprep.subr.bf16.mxu0 0
        %4133 = vmatpush1.bf16.msra.mxu0 %v4109
        %4134 = vmatprep.subr.bf16.mxu0 0
        %4135 = vmatpush1.bf16.msra.mxu0 0
        %4136 = vmatprep.subr.bf16.mxu0 0
        %4137 = vmatpush1.bf16.msra.mxu0 0
        %4138 = vmatprep.subr.bf16.mxu0 0
        %4139 = vmatpush1.bf16.msra.mxu0 0
        %4140 = vmatprep.subr.bf16.mxu0 0
        %4141 = vmatpush1.bf16.msra.mxu0 0
        %4142 = vmatprep.subr.bf16.mxu0 0
        %4143 = vmatpush1.bf16.msra.mxu0 0
        %4144 = vmatprep.subr.bf16.mxu0 0
        %4145 = vmatpush1.bf16.msra.mxu0 0
        %4146 = vmatprep.subr.bf16.mxu0 0
        %4147 = vmatpush1.bf16.msra.mxu0 0
        %4148 = vmatprep.subr.bf16.mxu0 0
        %4149 = vmatpush1.bf16.msra.mxu0 0
        %4150 = vmatprep.mubr.bf16.mxu0 0
        %4151 = vmatmul.mubr.bf16.gmra.mrb[0].mxu0 %v4052
        %v4152 = vpop.f32.mrb[0].mxu0
        %v4153 = vadd.f32 %v4069, %v4152
        %v4154 = vpop.f32.mrb[0].mxu0
        %v4155 = vpop.f32.mrb[0].mxu0
        %v4156 = vpop.f32.mrb[0].mxu0
        %4157 = vdwg.mxu0
        %v4158 = vmax.f32 %v4153, 0.0
        %v4159 = vpack.c.bf16 %v4158, %v4158
        %v4160 = vld [vmem:[#allocation6] sm:$0xf]
        %v4161 = vld [vmem:[#allocation6 + $0x4] sm:$0xf]
        %v4162 = vld [vmem:[#allocation6 + $0x8] sm:$0xf]
        %v4163 = vld [vmem:[#allocation6 + $0xc] sm:$0xf]
        %v4164 = vld [vmem:[#allocation6 + $0x10] sm:$0xf]
        %v4165 = vld [vmem:[#allocation6 + $0x14] sm:$0xf]
        %v4166 = vld [vmem:[#allocation6 + $0x18] sm:$0xf]
        %v4167 = vld [vmem:[#allocation6 + $0x1c] sm:$0xf]
        %v4168 = vld [vmem:[#allocation6 + $0x20] sm:$0xf]
        %v4169 = vld [vmem:[#allocation6 + $0x24] sm:$0xf]
        %v4170 = vld [vmem:[#allocation6 + $0x28] sm:$0xf]
        %v4171 = vld [vmem:[#allocation6 + $0x2c] sm:$0xf]
        %v4172 = vld [vmem:[#allocation6 + $0x30] sm:$0xf]
        %v4173 = vld [vmem:[#allocation6 + $0x34] sm:$0xf]
        %v4174 = vld [vmem:[#allocation6 + $0x38] sm:$0xf]
        %v4175 = vld [vmem:[#allocation6 + $0x3c] sm:$0xf]
        %v4176 = vld [vmem:[%s10 + $0x2] sm:$0x1]
        %v4193 = vunpack.c.l.b16 %v4160
        %v4194 = vunpack.c.l.b16 %v4161
        %v4195 = vunpack.c.l.b16 %v4162
        %v4196 = vunpack.c.l.b16 %v4163
        %v4197 = vunpack.c.l.b16 %v4164
        %v4198 = vunpack.c.l.b16 %v4165
        %v4199 = vunpack.c.l.b16 %v4166
        %v4200 = vunpack.c.l.b16 %v4167
        %v4201 = vunpack.c.l.b16 %v4168
        %v4202 = vunpack.c.l.b16 %v4169
        %v4203 = vunpack.c.l.b16 %v4170
        %v4204 = vunpack.c.l.b16 %v4171
        %v4205 = vunpack.c.l.b16 %v4172
        %v4206 = vunpack.c.l.b16 %v4173
        %v4207 = vunpack.c.l.b16 %v4174
        %v4208 = vunpack.c.l.b16 %v4175
        %v4209 = vpack.c.b16 %v4194, %v4193
        %v4210 = vpack.c.b16 %v4196, %v4195
        %v4211 = vpack.c.b16 %v4198, %v4197
        %v4212 = vpack.c.b16 %v4200, %v4199
        %v4213 = vpack.c.b16 %v4202, %v4201
        %v4214 = vpack.c.b16 %v4204, %v4203
        %v4215 = vpack.c.b16 %v4206, %v4205
        %v4216 = vpack.c.b16 %v4208, %v4207
        %4225 = vmatprep.subr.bf16.mxu0 0
        %4226 = vmatpush1.bf16.msra.mxu0 %v4209
        %4227 = vmatprep.subr.bf16.mxu0 0
        %4228 = vmatpush1.bf16.msra.mxu0 %v4210
        %4229 = vmatprep.subr.bf16.mxu0 0
        %4230 = vmatpush1.bf16.msra.mxu0 %v4211
        %4231 = vmatprep.subr.bf16.mxu0 0
        %4232 = vmatpush1.bf16.msra.mxu0 %v4212
        %4233 = vmatprep.subr.bf16.mxu0 0
        %4234 = vmatpush1.bf16.msra.mxu0 %v4213
        %4235 = vmatprep.subr.bf16.mxu0 0
        %4236 = vmatpush1.bf16.msra.mxu0 %v4214
        %4237 = vmatprep.subr.bf16.mxu0 0
        %4238 = vmatpush1.bf16.msra.mxu0 %v4215
        %4239 = vmatprep.subr.bf16.mxu0 0
        %4240 = vmatpush1.bf16.msra.mxu0 %v4216
        %4241 = vmatprep.subr.bf16.mxu0 0
        %4242 = vmatpush1.bf16.msra.mxu0 0
        %4243 = vmatprep.subr.bf16.mxu0 0
        %4244 = vmatpush1.bf16.msra.mxu0 0
        %4245 = vmatprep.subr.bf16.mxu0 0
        %4246 = vmatpush1.bf16.msra.mxu0 0
        %4247 = vmatprep.subr.bf16.mxu0 0
        %4248 = vmatpush1.bf16.msra.mxu0 0
        %4249 = vmatprep.subr.bf16.mxu0 0
        %4250 = vmatpush1.bf16.msra.mxu0 0
        %4251 = vmatprep.subr.bf16.mxu0 0
        %4252 = vmatpush1.bf16.msra.mxu0 0
        %4253 = vmatprep.subr.bf16.mxu0 0
        %4254 = vmatpush1.bf16.msra.mxu0 0
        %4255 = vmatprep.subr.bf16.mxu0 0
        %4256 = vmatpush1.bf16.msra.mxu0 0
        %4257 = vmatprep.mubr.bf16.mxu0 0
        %4258 = vmatmul.mubr.bf16.gmra.mrb[0].mxu0 %v4159
        %v4259 = vpop.f32.mrb[0].mxu0
        %v4260 = vadd.f32 %v4176, %v4259
        %v4261 = vpop.f32.mrb[0].mxu0
        %v4262 = vpop.f32.mrb[0].mxu0
        %v4263 = vpop.f32.mrb[0].mxu0
        %4264 = vdwg.mxu0
        %4265 = vst [vmem:[%s408] sm:$0x1] %v4260
        %s4266 = sand.u32 %s271, 1
        %s4267 = scalar_lea.sflag [#allocation5], %s4266
        %s4268 = sand.u32 %s271, 1
        %s4269 = scalar_lea.vmem [#allocation8], %s4268
        // Predicated region
        $region73: #{lenet5_forward.1} parent=63 // pred_check
          %p4270 = pneg %p281
        $region74: #{lenet5_forward.1} parent=63 // pred_check_branch
          %4272 = sbr.rel (%p4270) target = $region76
        $region75: #{lenet5_forward.1} parent=63 // pred_region
          %s4274 = ssub.s32 16, 16
          %4275 = vsyncadd %s4267, %s4274
          %s4276 = smul.addr %s27, 16
          %s4277 = scalar_lea.hbm %s11, %s4276
          %s4279 = sshll.u32 %s4269, 4
          %s4280 = int_to_ptr.vmem [resolvable:$true] %s4279
          %4282 = dma.vmem_to_hbm [thread:$0]  %s4280, 16, %s4277, %s4267
        $region76: #{lenet5_forward.1} parent=63 // pred_fallthru
          _
      $region64: #{lenet5_forward.1} parent=5 // pred_fallthru
        _
      %p4283 = scmp.le.s32.totalorder 2, %s22
      // Predicated region
      $region77: #{lenet5_forward.1} parent=5 // pred_check
        %p4284 = pneg %p4283
      $region78: #{lenet5_forward.1} parent=5 // pred_check_branch
        %4286 = sbr.rel (%p4284) target = $region80
      $region79: #{lenet5_forward.1} parent=5 // pred_region
        %s4287 = ssub.s32 %s22, 2
        // Predicated region
        $region81: #{lenet5_forward.1} parent=79 // pred_check
          %p4288 = pneg %p287
        $region82: #{lenet5_forward.1} parent=79 // pred_check_branch
          %4290 = sbr.rel (%p4288) target = $region84
        $region83: #{lenet5_forward.1} parent=79 // pred_region
          %s4291 = sand.u32 %s272, 1
          %s4292 = scalar_lea.sflag [#allocation5], %s4291
          %s4293 = sand.u32 %s272, 1
          %s4294 = scalar_lea.vmem [#allocation8], %s4293
          %4295 = dma.done %s4292, 16
        $region84: #{lenet5_forward.1} parent=79 // pred_fallthru
          _
      $region80: #{lenet5_forward.1} parent=5 // pred_fallthru
        _
    $region6: #{lenet5_forward.1} parent=1 // loop_footer
      %s26 = sadd.s32 1, %s22
    $region7: #{lenet5_forward.1} parent=1 // loop_footer_branch
      %21 = sbr.rel target = $region3
    $region8: #{lenet5_forward.1} parent=1 // loop_exit
      _
    %4296 = vsyncpa [#allocation4], 1
    %s4297 = scalar_lea.sflag [#allocation4], 1
    %4298 = vsyncpa %s4297, 1
    %4299 = vsyncpa [#allocation7], 1
    %4300 = vsyncpa [#allocation5], 1
    %s4301 = scalar_lea.sflag [#allocation5], 1
    %4302 = vsyncpa %s4301, 1

</llo_original>
